<compile_context>
chip_gen: v7x
topology: tpu7x:2x2x1
jax: 0.10.0
libtpu: 0.0.40
codegen_flags: <defaults>
</compile_context>

<pallas_src>
import functools

import jax
import jax.numpy as jnp
from jax.experimental import pallas as pl
from jax.experimental.pallas import tpu as pltpu

_EPS = 1e-5
_PARAMS_PER_BLOCK = 6  # g1, b1, w1cat_t, g2, b2, w2_t


# --------------------------- fused NetworkBlock kernel --------------------------
def _make_network_block_kernel(block_dims, eps):
    """block_dims: tuple of (n, h, w, cin, cout, ho, wo, stride, has_shortcut)."""
    nblocks = len(block_dims)

    def kernel(*refs):
        x_ref = refs[0]
        param_refs = refs[1:1 + _PARAMS_PER_BLOCK * nblocks]
        o_ref = refs[1 + _PARAMS_PER_BLOCK * nblocks]
        scratch_refs = refs[2 + _PARAMS_PER_BLOCK * nblocks:]

        f32 = jnp.float32
        bf16 = jnp.bfloat16

        x4 = x_ref[...].astype(f32)   # current activation, NHWC (n, h, w, c)
        x_cm = None                   # same activation, channel-major (c, M) if available

        for bi in range(nblocks):
            n, h, w, cin, cout, ho, wo, stride, has_shortcut = block_dims[bi]
            g1, b1, w1t, g2, b2, w2t = param_refs[
                _PARAMS_PER_BLOCK * bi:_PARAMS_PER_BLOCK * (bi + 1)]
            pad1, col1, pad2, col2 = scratch_refs[4 * bi:4 * (bi + 1)]
            m = n * ho * wo

            # ---- BN1 (training-mode batch stats, biased var) folded to scale/shift + ReLU
            mu1 = jnp.mean(x4, axis=(0, 1, 2), keepdims=True)
            var1 = jnp.mean((x4 - mu1) ** 2, axis=(0, 1, 2), keepdims=True)
            s1 = g1[...].reshape(1, 1, 1, cin) * jax.lax.rsqrt(var1 + eps)
            t1 = b1[...].reshape(1, 1, 1, cin) - mu1 * s1
            a1 = jnp.maximum(x4 * s1 + t1, 0.0)

            # ---- in-VMEM zero padding: halo-only zeroing + interior store --------------
            pad1[:, 0:1, :, :] = jnp.zeros((n, 1, w + 2, cin), f32)
            pad1[:, h + 1:h + 2, :, :] = jnp.zeros((n, 1, w + 2, cin), f32)
            pad1[:, :, 0:1, :] = jnp.zeros((n, h + 2, 1, cin), f32)
            pad1[:, :, w + 1:w + 2, :] = jnp.zeros((n, h + 2, 1, cin), f32)
            pad1[:, 1:h + 1, 1:w + 1, :] = a1

            # ---- im2col for conv1, channel-major: col1 is (9*cin, M), tap rows are
            # full-lane dense stores; the tiny (M, cin)->(cin, M) relayout uses the XLU.
            for i in range(3):
                for j in range(3):
                    if stride == 1:
                        tap = pad1[:, i:i + ho, j:j + wo, :]
                    else:
                        tap = pad1[:, pl.ds(i, ho, stride), pl.ds(j, wo, stride), :]
                    c0 = (i * 3 + j) * cin
                    col1[c0:c0 + cin, :] = tap.reshape(m, cin).T

            # ---- conv1 (+ fused 1x1 strided shortcut): one MXU pass, lane-dense result
            # (cw, 9*cin) x (9*cin, M) -> (cw, M), f32 accumulation, bf16 operands.
            hcat = jnp.dot(w1t[...], col1[...].astype(bf16), preferred_element_type=f32)
            h1 = hcat[0:cout, :]
            if has_shortcut:
                sc = hcat[cout:2 * cout, :]          # shortcut = center-tap 1x1 conv
            else:
                # identity shortcut (requires stride==1 and cin==cout; asserted in wrapper)
                sc = x_cm if x_cm is not None else x4.reshape(m, cout).T

            # ---- BN2 + ReLU on dense (cout, M) vregs (f32 VPU math) ---------------------
            mu2 = jnp.mean(h1, axis=1, keepdims=True)
            var2 = jnp.mean((h1 - mu2) ** 2, axis=1, keepdims=True)
            s2 = g2[...] * jax.lax.rsqrt(var2 + eps)
            t2 = b2[...] - mu2 * s2
            a2 = jnp.maximum(h1 * s2 + t2, 0.0)
            # TODO(synk): dropout (dropRate) not implemented; no-op since dropRate=0.0.

            # ---- pad conv2 input (back to NHWC for spatial windowing) -------------------
            a2n = a2.T.reshape(n, ho, wo, cout)
            pad2[:, 0:1, :, :] = jnp.zeros((n, 1, wo + 2, cout), f32)
            pad2[:, ho + 1:ho + 2, :, :] = jnp.zeros((n, 1, wo + 2, cout), f32)
            pad2[:, :, 0:1, :] = jnp.zeros((n, ho + 2, 1, cout), f32)
            pad2[:, :, wo + 1:wo + 2, :] = jnp.zeros((n, ho + 2, 1, cout), f32)
            pad2[:, 1:ho + 1, 1:wo + 1, :] = a2n

            # ---- im2col for conv2 (3x3, stride 1), same channel-major layout ------------
            for i in range(3):
                for j in range(3):
                    tap = pad2[:, i:i + ho, j:j + wo, :]
                    c0 = (i * 3 + j) * cout
                    col2[c0:c0 + cout, :] = tap.reshape(m, cout).T

            # ---- conv2 + fused residual add, all lane-dense -----------------------------
            h2 = jnp.dot(w2t[...], col2[...].astype(bf16), preferred_element_type=f32)
            out = h2 + sc                              # (cout, M)

            if bi + 1 < nblocks:
                x4 = out.T.reshape(n, ho, wo, cout)    # NHWC input for the next block
                x_cm = out
            else:
                o_ref[...] = out.astype(o_ref.dtype)   # lane-dense (cout, M) final store

    return kernel


# ------------------------------- forward wrapper --------------------------------
def network_block_forward(blocks, x_nchw, drop_rate=0.0):
    """NetworkBlock forward: x (N, C, H, W) NCHW -> (N, Cout, Ho, Wo) NCHW."""
    # TODO(synk): dropout not implemented (dropRate=0.0 in this configuration).
    n, c, h, w = x_nchw.shape
    x_nhwc = jnp.transpose(x_nchw, (0, 2, 3, 1)).astype(jnp.float32)

    block_dims = []
    inputs = [x_nhwc]
    scratch = []
    hh, ww, cin = h, w, c
    for params, stride in blocks:
        cout = params["conv1_w"].shape[-1]
        has_shortcut = params["shortcut_w"] is not None
        if not has_shortcut:
            assert stride == 1 and cin == cout, (
                "identity shortcut requires stride==1 and cin==cout")
        ho = (hh + 2 - 3) // stride + 1
        wo = (ww + 2 - 3) // stride + 1

        # conv1 weight transposed to (Cout, 9*Cin); fold the 1x1 shortcut conv in as
        # extra rows that only see the centre tap -> one MXU pass yields [h1 | shortcut].
        w1t = params["conv1_w"].reshape(9 * cin, cout).T            # (cout, 9*cin)
        if has_shortcut:
            wsct = jnp.zeros((cout, 9 * cin), jnp.float32)
            wsct = wsct.at[:, 4 * cin:5 * cin].set(
                params["shortcut_w"].reshape(cin, cout).T)
            w1t = jnp.concatenate([w1t, wsct], axis=0)              # (2*cout, 9*cin)
        w2t = params["conv2_w"].reshape(9 * cout, cout).T           # (cout, 9*cout)

        inputs += [
            params["bn1_gamma"].reshape(1, cin).astype(jnp.float32),
            params["bn1_beta"].reshape(1, cin).astype(jnp.float32),
            w1t.astype(jnp.bfloat16),
            params["bn2_gamma"].reshape(cout, 1).astype(jnp.float32),
            params["bn2_beta"].reshape(cout, 1).astype(jnp.float32),
            w2t.astype(jnp.bfloat16),
        ]
        scratch += [
            pltpu.VMEM((n, hh + 2, ww + 2, cin), jnp.float32),   # padded BN1 output
            pltpu.VMEM((9 * cin, n * ho * wo), jnp.float32),     # conv1 im2col (lane-dense)
            pltpu.VMEM((n, ho + 2, wo + 2, cout), jnp.float32),  # padded BN2 output
            pltpu.VMEM((9 * cout, n * ho * wo), jnp.float32),    # conv2 im2col (lane-dense)
        ]
        block_dims.append((n, hh, ww, cin, cout, ho, wo, stride, has_shortcut))
        hh, ww, cin = ho, wo, cout

    kernel = _make_network_block_kernel(tuple(block_dims), _EPS)
    c_out, m_out = cin, n * hh * ww

    out_cm = pl.pallas_call(
        kernel,
        out_shape=jax.ShapeDtypeStruct((c_out, m_out), jnp.float32),
        in_specs=[pl.BlockSpec(memory_space=pltpu.MemorySpace.VMEM)] * len(inputs),
        out_specs=pl.BlockSpec(memory_space=pltpu.MemorySpace.VMEM),
        scratch_shapes=scratch,
        compiler_params=pltpu.CompilerParams(
            vmem_limit_bytes=32 * 1024 * 1024,  # safe on v5e/v6e/v7x; kernel uses <1 MiB
        ),
    )(*inputs)

    # Lane-dense (Cout, N*Ho*Wo) kernel output -> NCHW (free layout plumbing in XLA).
    return jnp.transpose(out_cm.reshape(c_out, n, hh, ww), (1, 0, 2, 3))


# ------------------------------ parameter init ----------------------------------
def init_basic_block(key, in_planes, out_planes, stride):
    ks = jax.random.split(key, 7)
    equal = (in_planes == out_planes) and (stride == 1)
    return {
        "bn1_gamma": 1.0 + 0.1 * jax.random.normal(ks[0], (in_planes,), jnp.float32),
        "bn1_beta": 0.1 * jax.random.normal(ks[1], (in_planes,), jnp.float32),
        "conv1_w": 0.1 * jax.random.normal(ks[2], (3, 3, in_planes, out_planes), jnp.float32),
        "bn2_gamma": 1.0 + 0.1 * jax.random.normal(ks[3], (out_planes,), jnp.float32),
        "bn2_beta": 0.1 * jax.random.normal(ks[4], (out_planes,), jnp.float32),
        "conv2_w": 0.1 * jax.random.normal(ks[5], (3, 3, out_planes, out_planes), jnp.float32),
        "shortcut_w": None if equal else
            0.1 * jax.random.normal(ks[6], (1, 1, in_planes, out_planes), jnp.float32),
    }


def init_network_block(key, nb_layers, in_planes, out_planes, stride):
    blocks = []
    keys = jax.random.split(key, int(nb_layers))
    for i in range(int(nb_layers)):
        ip = in_planes if i == 0 else out_planes
        st = stride if i == 0 else 1
        blocks.append((init_basic_block(keys[i], ip, out_planes, st), st))
    return blocks


if __name__ == "__main__":
    key = jax.random.PRNGKey(0)
    k_param, k_x = jax.random.split(key)

    # NetworkBlock(nb_layers=2, in_planes=4, out_planes=8, block=BasicBlock, stride=2, dropRate=0.0)
    nb_layers, in_planes, out_planes, stride = 2, 4, 8, 2
    blocks = init_network_block(k_param, nb_layers, in_planes, out_planes, stride)

    x = jax.random.normal(k_x, (2, 4, 16, 16), jnp.float32)  # NCHW
    fwd = jax.jit(functools.partial(network_block_forward, blocks))
    y = jax.block_until_ready(fwd(x))

    assert y.shape == (2, out_planes, 16 // stride, 16 // stride), y.shape
    assert bool(jnp.all(jnp.isfinite(y)))
    print("KERNEL_OK")
</pallas_src>

<mosaic_0001>
module attributes {stable_mosaic.version = 11 : i64} {
  func.func @kernel(%arg0: memref<2x16x16x4xf32, #tpu.memory_space<vmem>>, %arg1: memref<1x4xf32, #tpu.memory_space<vmem>>, %arg2: memref<1x4xf32, #tpu.memory_space<vmem>>, %arg3: memref<16x36xbf16, #tpu.memory_space<vmem>>, %arg4: memref<8x1xf32, #tpu.memory_space<vmem>>, %arg5: memref<8x1xf32, #tpu.memory_space<vmem>>, %arg6: memref<8x72xbf16, #tpu.memory_space<vmem>>, %arg7: memref<1x8xf32, #tpu.memory_space<vmem>>, %arg8: memref<1x8xf32, #tpu.memory_space<vmem>>, %arg9: memref<8x72xbf16, #tpu.memory_space<vmem>>, %arg10: memref<8x1xf32, #tpu.memory_space<vmem>>, %arg11: memref<8x1xf32, #tpu.memory_space<vmem>>, %arg12: memref<8x72xbf16, #tpu.memory_space<vmem>>, %arg13: memref<8x128xf32, #tpu.memory_space<vmem>>, %arg14: memref<2x18x18x4xf32, #tpu.memory_space<vmem>>, %arg15: memref<36x128xf32, #tpu.memory_space<vmem>>, %arg16: memref<2x10x10x8xf32, #tpu.memory_space<vmem>>, %arg17: memref<72x128xf32, #tpu.memory_space<vmem>>, %arg18: memref<2x10x10x8xf32, #tpu.memory_space<vmem>>, %arg19: memref<72x128xf32, #tpu.memory_space<vmem>>, %arg20: memref<2x10x10x8xf32, #tpu.memory_space<vmem>>, %arg21: memref<72x128xf32, #tpu.memory_space<vmem>>) attributes {dimension_semantics = [], scalar_prefetch = 0 : i64, scratch_operands = 8 : i64, tpu.core_type = #tpu.core_type<tc>} {
    %c0 = arith.constant 0 : index
    %c0_0 = arith.constant 0 : index
    %c0_1 = arith.constant 0 : index
    %c0_2 = arith.constant 0 : index
    %0 = vector.load %arg0[%c0, %c0_0, %c0_1, %c0_2] : memref<2x16x16x4xf32, #tpu.memory_space<vmem>>, vector<2x16x16x4xf32>
    %cst = arith.constant dense<0.000000e+00> : vector<4xf32>
    %1 = vector.multi_reduction <add>, %0, %cst [0, 1, 2] : vector<2x16x16x4xf32> to vector<4xf32>
    %2 = vector.shape_cast %1 : vector<4xf32> to vector<1x1x1x4xf32>
    %cst_3 = arith.constant 5.120000e+02 : f32
    %3 = vector.broadcast %cst_3 : f32 to vector<1x1x1x4xf32>
    %4 = arith.divf %2, %3 : vector<1x1x1x4xf32>
    %5 = vector.broadcast %4 : vector<1x1x1x4xf32> to vector<2x16x16x4xf32>
    %6 = arith.subf %0, %5 : vector<2x16x16x4xf32>
    %7 = arith.mulf %6, %6 : vector<2x16x16x4xf32>
    %cst_4 = arith.constant dense<0.000000e+00> : vector<4xf32>
    %8 = vector.multi_reduction <add>, %7, %cst_4 [0, 1, 2] : vector<2x16x16x4xf32> to vector<4xf32>
    %9 = vector.shape_cast %8 : vector<4xf32> to vector<1x1x1x4xf32>
    %cst_5 = arith.constant 5.120000e+02 : f32
    %10 = vector.broadcast %cst_5 : f32 to vector<1x1x1x4xf32>
    %11 = arith.divf %9, %10 : vector<1x1x1x4xf32>
    %c0_6 = arith.constant 0 : index
    %c0_7 = arith.constant 0 : index
    %12 = vector.load %arg1[%c0_6, %c0_7] : memref<1x4xf32, #tpu.memory_space<vmem>>, vector<1x4xf32>
    %13 = vector.shape_cast %12 : vector<1x4xf32> to vector<1x1x1x4xf32>
    %cst_8 = arith.constant 9.99999974E-6 : f32
    %14 = vector.broadcast %cst_8 : f32 to vector<1x1x1x4xf32>
    %15 = arith.addf %11, %14 : vector<1x1x1x4xf32>
    %16 = math.rsqrt %15 : vector<1x1x1x4xf32>
    %17 = arith.mulf %13, %16 : vector<1x1x1x4xf32>
    %c0_9 = arith.constant 0 : index
    %c0_10 = arith.constant 0 : index
    %18 = vector.load %arg2[%c0_9, %c0_10] : memref<1x4xf32, #tpu.memory_space<vmem>>, vector<1x4xf32>
    %19 = vector.shape_cast %18 : vector<1x4xf32> to vector<1x1x1x4xf32>
    %20 = arith.mulf %4, %17 : vector<1x1x1x4xf32>
    %21 = arith.subf %19, %20 : vector<1x1x1x4xf32>
    %22 = vector.broadcast %17 : vector<1x1x1x4xf32> to vector<2x16x16x4xf32>
    %23 = arith.mulf %0, %22 : vector<2x16x16x4xf32>
    %24 = vector.broadcast %21 : vector<1x1x1x4xf32> to vector<2x16x16x4xf32>
    %25 = arith.addf %23, %24 : vector<2x16x16x4xf32>
    %cst_11 = arith.constant 0.000000e+00 : f32
    %26 = vector.broadcast %cst_11 : f32 to vector<2x16x16x4xf32>
    %27 = arith.maximumf %25, %26 : vector<2x16x16x4xf32>
    %cst_12 = arith.constant 0.000000e+00 : f32
    %28 = vector.broadcast %cst_12 : f32 to vector<2x1x18x4xf32>
    %c0_13 = arith.constant 0 : index
    %c0_14 = arith.constant 0 : index
    %c0_15 = arith.constant 0 : index
    %c0_16 = arith.constant 0 : index
    %29 = vector.load %arg14[%c0_13, %c0_14, %c0_15, %c0_16] : memref<2x18x18x4xf32, #tpu.memory_space<vmem>>, vector<2x1x18x4xf32>
    tpu.vector_store %arg14[%c0_13, %c0_14, %c0_15, %c0_16], %28 {strides = array<i32>} : memref<2x18x18x4xf32, #tpu.memory_space<vmem>>, vector<2x1x18x4xf32>,
    %cst_17 = arith.constant 0.000000e+00 : f32
    %30 = vector.broadcast %cst_17 : f32 to vector<2x1x18x4xf32>
    %c0_18 = arith.constant 0 : index
    %c17 = arith.constant 17 : index
    %c0_19 = arith.constant 0 : index
    %c0_20 = arith.constant 0 : index
    %31 = vector.load %arg14[%c0_18, %c17, %c0_19, %c0_20] : memref<2x18x18x4xf32, #tpu.memory_space<vmem>>, vector<2x1x18x4xf32>
    tpu.vector_store %arg14[%c0_18, %c17, %c0_19, %c0_20], %30 {strides = array<i32>} : memref<2x18x18x4xf32, #tpu.memory_space<vmem>>, vector<2x1x18x4xf32>,
    %cst_21 = arith.constant 0.000000e+00 : f32
    %32 = vector.broadcast %cst_21 : f32 to vector<2x18x1x4xf32>
    %c0_22 = arith.constant 0 : index
    %c0_23 = arith.constant 0 : index
    %c0_24 = arith.constant 0 : index
    %c0_25 = arith.constant 0 : index
    %33 = vector.load %arg14[%c0_22, %c0_23, %c0_24, %c0_25] : memref<2x18x18x4xf32, #tpu.memory_space<vmem>>, vector<2x18x1x4xf32>
    tpu.vector_store %arg14[%c0_22, %c0_23, %c0_24, %c0_25], %32 {strides = array<i32>} : memref<2x18x18x4xf32, #tpu.memory_space<vmem>>, vector<2x18x1x4xf32>,
    %cst_26 = arith.constant 0.000000e+00 : f32
    %34 = vector.broadcast %cst_26 : f32 to vector<2x18x1x4xf32>
    %c0_27 = arith.constant 0 : index
    %c0_28 = arith.constant 0 : index
    %c17_29 = arith.constant 17 : index
    %c0_30 = arith.constant 0 : index
    %35 = vector.load %arg14[%c0_27, %c0_28, %c17_29, %c0_30] : memref<2x18x18x4xf32, #tpu.memory_space<vmem>>, vector<2x18x1x4xf32>
    tpu.vector_store %arg14[%c0_27, %c0_28, %c17_29, %c0_30], %34 {strides = array<i32>} : memref<2x18x18x4xf32, #tpu.memory_space<vmem>>, vector<2x18x1x4xf32>,
    %c0_31 = arith.constant 0 : index
    %c1 = arith.constant 1 : index
    %c1_32 = arith.constant 1 : index
    %c0_33 = arith.constant 0 : index
    %36 = vector.load %arg14[%c0_31, %c1, %c1_32, %c0_33] : memref<2x18x18x4xf32, #tpu.memory_space<vmem>>, vector<2x16x16x4xf32>
    tpu.vector_store %arg14[%c0_31, %c1, %c1_32, %c0_33], %27 {strides = array<i32>} : memref<2x18x18x4xf32, #tpu.memory_space<vmem>>, vector<2x16x16x4xf32>,
    %c0_34 = arith.constant 0 : index
    %c0_35 = arith.constant 0 : index
    %c0_36 = arith.constant 0 : index
    %c0_37 = arith.constant 0 : index
    %37 = tpu.strided_load %arg14[%c0_34, %c0_35, %c0_36, %c0_37] {strides = array<i32: 1, 2, 2, 1>} : memref<2x18x18x4xf32, #tpu.memory_space<vmem>>, vector<2x8x8x4xf32>
    %38 = vector.shape_cast %37 : vector<2x8x8x4xf32> to vector<128x4xf32>
    %39 = tpu.transpose %38, [1, 0] : vector<128x4xf32> -> vector<4x128xf32>
    %c0_38 = arith.constant 0 : index
    %c0_39 = arith.constant 0 : index
    %40 = vector.load %arg15[%c0_38, %c0_39] : memref<36x128xf32, #tpu.memory_space<vmem>>, vector<4x128xf32>
    tpu.vector_store %arg15[%c0_38, %c0_39], %39 {strides = array<i32>} : memref<36x128xf32, #tpu.memory_space<vmem>>, vector<4x128xf32>,
    %c0_40 = arith.constant 0 : index
    %c0_41 = arith.constant 0 : index
    %c1_42 = arith.constant 1 : index
    %c0_43 = arith.constant 0 : index
    %41 = tpu.strided_load %arg14[%c0_40, %c0_41, %c1_42, %c0_43] {strides = array<i32: 1, 2, 2, 1>} : memref<2x18x18x4xf32, #tpu.memory_space<vmem>>, vector<2x8x8x4xf32>
    %42 = vector.shape_cast %41 : vector<2x8x8x4xf32> to vector<128x4xf32>
    %43 = tpu.transpose %42, [1, 0] : vector<128x4xf32> -> vector<4x128xf32>
    %c4 = arith.constant 4 : index
    %c0_44 = arith.constant 0 : index
    %44 = vector.load %arg15[%c4, %c0_44] : memref<36x128xf32, #tpu.memory_space<vmem>>, vector<4x128xf32>
    tpu.vector_store %arg15[%c4, %c0_44], %43 {strides = array<i32>} : memref<36x128xf32, #tpu.memory_space<vmem>>, vector<4x128xf32>,
    %c0_45 = arith.constant 0 : index
    %c0_46 = arith.constant 0 : index
    %c2 = arith.constant 2 : index
    %c0_47 = arith.constant 0 : index
    %45 = tpu.strided_load %arg14[%c0_45, %c0_46, %c2, %c0_47] {strides = array<i32: 1, 2, 2, 1>} : memref<2x18x18x4xf32, #tpu.memory_space<vmem>>, vector<2x8x8x4xf32>
    %46 = vector.shape_cast %45 : vector<2x8x8x4xf32> to vector<128x4xf32>
    %47 = tpu.transpose %46, [1, 0] : vector<128x4xf32> -> vector<4x128xf32>
    %c8 = arith.constant 8 : index
    %c0_48 = arith.constant 0 : index
    %48 = vector.load %arg15[%c8, %c0_48] : memref<36x128xf32, #tpu.memory_space<vmem>>, vector<4x128xf32>
    tpu.vector_store %arg15[%c8, %c0_48], %47 {strides = array<i32>} : memref<36x128xf32, #tpu.memory_space<vmem>>, vector<4x128xf32>,
    %c0_49 = arith.constant 0 : index
    %c1_50 = arith.constant 1 : index
    %c0_51 = arith.constant 0 : index
    %c0_52 = arith.constant 0 : index
    %49 = tpu.strided_load %arg14[%c0_49, %c1_50, %c0_51, %c0_52] {strides = array<i32: 1, 2, 2, 1>} : memref<2x18x18x4xf32, #tpu.memory_space<vmem>>, vector<2x8x8x4xf32>
    %50 = vector.shape_cast %49 : vector<2x8x8x4xf32> to vector<128x4xf32>
    %51 = tpu.transpose %50, [1, 0] : vector<128x4xf32> -> vector<4x128xf32>
    %c12 = arith.constant 12 : index
    %c0_53 = arith.constant 0 : index
    %52 = vector.load %arg15[%c12, %c0_53] : memref<36x128xf32, #tpu.memory_space<vmem>>, vector<4x128xf32>
    tpu.vector_store %arg15[%c12, %c0_53], %51 {strides = array<i32>} : memref<36x128xf32, #tpu.memory_space<vmem>>, vector<4x128xf32>,
    %c0_54 = arith.constant 0 : index
    %c1_55 = arith.constant 1 : index
    %c1_56 = arith.constant 1 : index
    %c0_57 = arith.constant 0 : index
    %53 = tpu.strided_load %arg14[%c0_54, %c1_55, %c1_56, %c0_57] {strides = array<i32: 1, 2, 2, 1>} : memref<2x18x18x4xf32, #tpu.memory_space<vmem>>, vector<2x8x8x4xf32>
    %54 = vector.shape_cast %53 : vector<2x8x8x4xf32> to vector<128x4xf32>
    %55 = tpu.transpose %54, [1, 0] : vector<128x4xf32> -> vector<4x128xf32>
    %c16 = arith.constant 16 : index
    %c0_58 = arith.constant 0 : index
    %56 = vector.load %arg15[%c16, %c0_58] : memref<36x128xf32, #tpu.memory_space<vmem>>, vector<4x128xf32>
    tpu.vector_store %arg15[%c16, %c0_58], %55 {strides = array<i32>} : memref<36x128xf32, #tpu.memory_space<vmem>>, vector<4x128xf32>,
    %c0_59 = arith.constant 0 : index
    %c1_60 = arith.constant 1 : index
    %c2_61 = arith.constant 2 : index
    %c0_62 = arith.constant 0 : index
    %57 = tpu.strided_load %arg14[%c0_59, %c1_60, %c2_61, %c0_62] {strides = array<i32: 1, 2, 2, 1>} : memref<2x18x18x4xf32, #tpu.memory_space<vmem>>, vector<2x8x8x4xf32>
    %58 = vector.shape_cast %57 : vector<2x8x8x4xf32> to vector<128x4xf32>
    %59 = tpu.transpose %58, [1, 0] : vector<128x4xf32> -> vector<4x128xf32>
    %c20 = arith.constant 20 : index
    %c0_63 = arith.constant 0 : index
    %60 = vector.load %arg15[%c20, %c0_63] : memref<36x128xf32, #tpu.memory_space<vmem>>, vector<4x128xf32>
    tpu.vector_store %arg15[%c20, %c0_63], %59 {strides = array<i32>} : memref<36x128xf32, #tpu.memory_space<vmem>>, vector<4x128xf32>,
    %c0_64 = arith.constant 0 : index
    %c2_65 = arith.constant 2 : index
    %c0_66 = arith.constant 0 : index
    %c0_67 = arith.constant 0 : index
    %61 = tpu.strided_load %arg14[%c0_64, %c2_65, %c0_66, %c0_67] {strides = array<i32: 1, 2, 2, 1>} : memref<2x18x18x4xf32, #tpu.memory_space<vmem>>, vector<2x8x8x4xf32>
    %62 = vector.shape_cast %61 : vector<2x8x8x4xf32> to vector<128x4xf32>
    %63 = tpu.transpose %62, [1, 0] : vector<128x4xf32> -> vector<4x128xf32>
    %c24 = arith.constant 24 : index
    %c0_68 = arith.constant 0 : index
    %64 = vector.load %arg15[%c24, %c0_68] : memref<36x128xf32, #tpu.memory_space<vmem>>, vector<4x128xf32>
    tpu.vector_store %arg15[%c24, %c0_68], %63 {strides = array<i32>} : memref<36x128xf32, #tpu.memory_space<vmem>>, vector<4x128xf32>,
    %c0_69 = arith.constant 0 : index
    %c2_70 = arith.constant 2 : index
    %c1_71 = arith.constant 1 : index
    %c0_72 = arith.constant 0 : index
    %65 = tpu.strided_load %arg14[%c0_69, %c2_70, %c1_71, %c0_72] {strides = array<i32: 1, 2, 2, 1>} : memref<2x18x18x4xf32, #tpu.memory_space<vmem>>, vector<2x8x8x4xf32>
    %66 = vector.shape_cast %65 : vector<2x8x8x4xf32> to vector<128x4xf32>
    %67 = tpu.transpose %66, [1, 0] : vector<128x4xf32> -> vector<4x128xf32>
    %c28 = arith.constant 28 : index
    %c0_73 = arith.constant 0 : index
    %68 = vector.load %arg15[%c28, %c0_73] : memref<36x128xf32, #tpu.memory_space<vmem>>, vector<4x128xf32>
    tpu.vector_store %arg15[%c28, %c0_73], %67 {strides = array<i32>} : memref<36x128xf32, #tpu.memory_space<vmem>>, vector<4x128xf32>,
    %c0_74 = arith.constant 0 : index
    %c2_75 = arith.constant 2 : index
    %c2_76 = arith.constant 2 : index
    %c0_77 = arith.constant 0 : index
    %69 = tpu.strided_load %arg14[%c0_74, %c2_75, %c2_76, %c0_77] {strides = array<i32: 1, 2, 2, 1>} : memref<2x18x18x4xf32, #tpu.memory_space<vmem>>, vector<2x8x8x4xf32>
    %70 = vector.shape_cast %69 : vector<2x8x8x4xf32> to vector<128x4xf32>
    %71 = tpu.transpose %70, [1, 0] : vector<128x4xf32> -> vector<4x128xf32>
    %c32 = arith.constant 32 : index
    %c0_78 = arith.constant 0 : index
    %72 = vector.load %arg15[%c32, %c0_78] : memref<36x128xf32, #tpu.memory_space<vmem>>, vector<4x128xf32>
    tpu.vector_store %arg15[%c32, %c0_78], %71 {strides = array<i32>} : memref<36x128xf32, #tpu.memory_space<vmem>>, vector<4x128xf32>,
    %c0_79 = arith.constant 0 : index
    %c0_80 = arith.constant 0 : index
    %73 = vector.load %arg3[%c0_79, %c0_80] : memref<16x36xbf16, #tpu.memory_space<vmem>>, vector<16x36xbf16>
    %c0_81 = arith.constant 0 : index
    %c0_82 = arith.constant 0 : index
    %74 = vector.load %arg15[%c0_81, %c0_82] : memref<36x128xf32, #tpu.memory_space<vmem>>, vector<36x128xf32>
    %75 = arith.truncf %74 : vector<36x128xf32> to vector<36x128xbf16>
    %cst_83 = arith.constant dense<0.000000e+00> : vector<16x128xf32>
    %76 = tpu.matmul %73, %75, %cst_83 {dimension_numbers = #tpu.dot_dimension_numbers<[1], [0], [0], [1], [0, 0, 1, 1], [], []>} : vector<16x36xbf16>, vector<36x128xbf16>, vector<16x128xf32> -> vector<16x128xf32>
    %77 = vector.extract_strided_slice %76 {offsets = [0, 0], sizes = [8, 128], strides = [1, 1]} : vector<16x128xf32> to vector<8x128xf32>
    %78 = vector.extract_strided_slice %76 {offsets = [8, 0], sizes = [8, 128], strides = [1, 1]} : vector<16x128xf32> to vector<8x128xf32>
    %cst_84 = arith.constant dense<0.000000e+00> : vector<8xf32>
    %79 = vector.multi_reduction <add>, %77, %cst_84 [1] : vector<8x128xf32> to vector<8xf32>
    %80 = vector.shape_cast %79 : vector<8xf32> to vector<8x1xf32>
    %cst_85 = arith.constant 1.280000e+02 : f32
    %81 = vector.broadcast %cst_85 : f32 to vector<8x1xf32>
    %82 = arith.divf %80, %81 : vector<8x1xf32>
    %83 = vector.broadcast %82 : vector<8x1xf32> to vector<8x128xf32>
    %84 = arith.subf %77, %83 : vector<8x128xf32>
    %85 = arith.mulf %84, %84 : vector<8x128xf32>
    %cst_86 = arith.constant dense<0.000000e+00> : vector<8xf32>
    %86 = vector.multi_reduction <add>, %85, %cst_86 [1] : vector<8x128xf32> to vector<8xf32>
    %87 = vector.shape_cast %86 : vector<8xf32> to vector<8x1xf32>
    %cst_87 = arith.constant 1.280000e+02 : f32
    %88 = vector.broadcast %cst_87 : f32 to vector<8x1xf32>
    %89 = arith.divf %87, %88 : vector<8x1xf32>
    %c0_88 = arith.constant 0 : index
    %c0_89 = arith.constant 0 : index
    %90 = vector.load %arg4[%c0_88, %c0_89] : memref<8x1xf32, #tpu.memory_space<vmem>>, vector<8x1xf32>
    %cst_90 = arith.constant 9.99999974E-6 : f32
    %91 = vector.broadcast %cst_90 : f32 to vector<8x1xf32>
    %92 = arith.addf %89, %91 : vector<8x1xf32>
    %93 = math.rsqrt %92 : vector<8x1xf32>
    %94 = arith.mulf %90, %93 : vector<8x1xf32>
    %c0_91 = arith.constant 0 : index
    %c0_92 = arith.constant 0 : index
    %95 = vector.load %arg5[%c0_91, %c0_92] : memref<8x1xf32, #tpu.memory_space<vmem>>, vector<8x1xf32>
    %96 = arith.mulf %82, %94 : vector<8x1xf32>
    %97 = arith.subf %95, %96 : vector<8x1xf32>
    %98 = vector.broadcast %94 : vector<8x1xf32> to vector<8x128xf32>
    %99 = arith.mulf %77, %98 : vector<8x128xf32>
    %100 = vector.broadcast %97 : vector<8x1xf32> to vector<8x128xf32>
    %101 = arith.addf %99, %100 : vector<8x128xf32>
    %cst_93 = arith.constant 0.000000e+00 : f32
    %102 = vector.broadcast %cst_93 : f32 to vector<8x128xf32>
    %103 = arith.maximumf %101, %102 : vector<8x128xf32>
    %104 = tpu.transpose %103, [1, 0] : vector<8x128xf32> -> vector<128x8xf32>
    %105 = vector.shape_cast %104 : vector<128x8xf32> to vector<2x8x8x8xf32>
    %cst_94 = arith.constant 0.000000e+00 : f32
    %106 = vector.broadcast %cst_94 : f32 to vector<2x1x10x8xf32>
    %c0_95 = arith.constant 0 : index
    %c0_96 = arith.constant 0 : index
    %c0_97 = arith.constant 0 : index
    %c0_98 = arith.constant 0 : index
    %107 = vector.load %arg16[%c0_95, %c0_96, %c0_97, %c0_98] : memref<2x10x10x8xf32, #tpu.memory_space<vmem>>, vector<2x1x10x8xf32>
    tpu.vector_store %arg16[%c0_95, %c0_96, %c0_97, %c0_98], %106 {strides = array<i32>} : memref<2x10x10x8xf32, #tpu.memory_space<vmem>>, vector<2x1x10x8xf32>,
    %cst_99 = arith.constant 0.000000e+00 : f32
    %108 = vector.broadcast %cst_99 : f32 to vector<2x1x10x8xf32>
    %c0_100 = arith.constant 0 : index
    %c9 = arith.constant 9 : index
    %c0_101 = arith.constant 0 : index
    %c0_102 = arith.constant 0 : index
    %109 = vector.load %arg16[%c0_100, %c9, %c0_101, %c0_102] : memref<2x10x10x8xf32, #tpu.memory_space<vmem>>, vector<2x1x10x8xf32>
    tpu.vector_store %arg16[%c0_100, %c9, %c0_101, %c0_102], %108 {strides = array<i32>} : memref<2x10x10x8xf32, #tpu.memory_space<vmem>>, vector<2x1x10x8xf32>,
    %cst_103 = arith.constant 0.000000e+00 : f32
    %110 = vector.broadcast %cst_103 : f32 to vector<2x10x1x8xf32>
    %c0_104 = arith.constant 0 : index
    %c0_105 = arith.constant 0 : index
    %c0_106 = arith.constant 0 : index
    %c0_107 = arith.constant 0 : index
    %111 = vector.load %arg16[%c0_104, %c0_105, %c0_106, %c0_107] : memref<2x10x10x8xf32, #tpu.memory_space<vmem>>, vector<2x10x1x8xf32>
    tpu.vector_store %arg16[%c0_104, %c0_105, %c0_106, %c0_107], %110 {strides = array<i32>} : memref<2x10x10x8xf32, #tpu.memory_space<vmem>>, vector<2x10x1x8xf32>,
    %cst_108 = arith.constant 0.000000e+00 : f32
    %112 = vector.broadcast %cst_108 : f32 to vector<2x10x1x8xf32>
    %c0_109 = arith.constant 0 : index
    %c0_110 = arith.constant 0 : index
    %c9_111 = arith.constant 9 : index
    %c0_112 = arith.constant 0 : index
    %113 = vector.load %arg16[%c0_109, %c0_110, %c9_111, %c0_112] : memref<2x10x10x8xf32, #tpu.memory_space<vmem>>, vector<2x10x1x8xf32>
    tpu.vector_store %arg16[%c0_109, %c0_110, %c9_111, %c0_112], %112 {strides = array<i32>} : memref<2x10x10x8xf32, #tpu.memory_space<vmem>>, vector<2x10x1x8xf32>,
    %c0_113 = arith.constant 0 : index
    %c1_114 = arith.constant 1 : index
    %c1_115 = arith.constant 1 : index
    %c0_116 = arith.constant 0 : index
    %114 = vector.load %arg16[%c0_113, %c1_114, %c1_115, %c0_116] : memref<2x10x10x8xf32, #tpu.memory_space<vmem>>, vector<2x8x8x8xf32>
    tpu.vector_store %arg16[%c0_113, %c1_114, %c1_115, %c0_116], %105 {strides = array<i32>} : memref<2x10x10x8xf32, #tpu.memory_space<vmem>>, vector<2x8x8x8xf32>,
    %c0_117 = arith.constant 0 : index
    %c0_118 = arith.constant 0 : index
    %c0_119 = arith.constant 0 : index
    %c0_120 = arith.constant 0 : index
    %115 = vector.load %arg16[%c0_117, %c0_118, %c0_119, %c0_120] : memref<2x10x10x8xf32, #tpu.memory_space<vmem>>, vector<2x8x8x8xf32>
    %116 = vector.shape_cast %115 : vector<2x8x8x8xf32> to vector<128x8xf32>
    %117 = tpu.transpose %116, [1, 0] : vector<128x8xf32> -> vector<8x128xf32>
    %c0_121 = arith.constant 0 : index
    %c0_122 = arith.constant 0 : index
    %118 = vector.load %arg17[%c0_121, %c0_122] : memref<72x128xf32, #tpu.memory_space<vmem>>, vector<8x128xf32>
    tpu.vector_store %arg17[%c0_121, %c0_122], %117 {strides = array<i32>} : memref<72x128xf32, #tpu.memory_space<vmem>>, vector<8x128xf32>,
    %c0_123 = arith.constant 0 : index
    %c0_124 = arith.constant 0 : index
    %c1_125 = arith.constant 1 : index
    %c0_126 = arith.constant 0 : index
    %119 = vector.load %arg16[%c0_123, %c0_124, %c1_125, %c0_126] : memref<2x10x10x8xf32, #tpu.memory_space<vmem>>, vector<2x8x8x8xf32>
    %120 = vector.shape_cast %119 : vector<2x8x8x8xf32> to vector<128x8xf32>
    %121 = tpu.transpose %120, [1, 0] : vector<128x8xf32> -> vector<8x128xf32>
    %c8_127 = arith.constant 8 : index
    %c0_128 = arith.constant 0 : index
    %122 = vector.load %arg17[%c8_127, %c0_128] : memref<72x128xf32, #tpu.memory_space<vmem>>, vector<8x128xf32>
    tpu.vector_store %arg17[%c8_127, %c0_128], %121 {strides = array<i32>} : memref<72x128xf32, #tpu.memory_space<vmem>>, vector<8x128xf32>,
    %c0_129 = arith.constant 0 : index
    %c0_130 = arith.constant 0 : index
    %c2_131 = arith.constant 2 : index
    %c0_132 = arith.constant 0 : index
    %123 = vector.load %arg16[%c0_129, %c0_130, %c2_131, %c0_132] : memref<2x10x10x8xf32, #tpu.memory_space<vmem>>, vector<2x8x8x8xf32>
    %124 = vector.shape_cast %123 : vector<2x8x8x8xf32> to vector<128x8xf32>
    %125 = tpu.transpose %124, [1, 0] : vector<128x8xf32> -> vector<8x128xf32>
    %c16_133 = arith.constant 16 : index
    %c0_134 = arith.constant 0 : index
    %126 = vector.load %arg17[%c16_133, %c0_134] : memref<72x128xf32, #tpu.memory_space<vmem>>, vector<8x128xf32>
    tpu.vector_store %arg17[%c16_133, %c0_134], %125 {strides = array<i32>} : memref<72x128xf32, #tpu.memory_space<vmem>>, vector<8x128xf32>,
    %c0_135 = arith.constant 0 : index
    %c1_136 = arith.constant 1 : index
    %c0_137 = arith.constant 0 : index
    %c0_138 = arith.constant 0 : index
    %127 = vector.load %arg16[%c0_135, %c1_136, %c0_137, %c0_138] : memref<2x10x10x8xf32, #tpu.memory_space<vmem>>, vector<2x8x8x8xf32>
    %128 = vector.shape_cast %127 : vector<2x8x8x8xf32> to vector<128x8xf32>
    %129 = tpu.transpose %128, [1, 0] : vector<128x8xf32> -> vector<8x128xf32>
    %c24_139 = arith.constant 24 : index
    %c0_140 = arith.constant 0 : index
    %130 = vector.load %arg17[%c24_139, %c0_140] : memref<72x128xf32, #tpu.memory_space<vmem>>, vector<8x128xf32>
    tpu.vector_store %arg17[%c24_139, %c0_140], %129 {strides = array<i32>} : memref<72x128xf32, #tpu.memory_space<vmem>>, vector<8x128xf32>,
    %c0_141 = arith.constant 0 : index
    %c1_142 = arith.constant 1 : index
    %c1_143 = arith.constant 1 : index
    %c0_144 = arith.constant 0 : index
    %131 = vector.load %arg16[%c0_141, %c1_142, %c1_143, %c0_144] : memref<2x10x10x8xf32, #tpu.memory_space<vmem>>, vector<2x8x8x8xf32>
    %132 = vector.shape_cast %131 : vector<2x8x8x8xf32> to vector<128x8xf32>
    %133 = tpu.transpose %132, [1, 0] : vector<128x8xf32> -> vector<8x128xf32>
    %c32_145 = arith.constant 32 : index
    %c0_146 = arith.constant 0 : index
    %134 = vector.load %arg17[%c32_145, %c0_146] : memref<72x128xf32, #tpu.memory_space<vmem>>, vector<8x128xf32>
    tpu.vector_store %arg17[%c32_145, %c0_146], %133 {strides = array<i32>} : memref<72x128xf32, #tpu.memory_space<vmem>>, vector<8x128xf32>,
    %c0_147 = arith.constant 0 : index
    %c1_148 = arith.constant 1 : index
    %c2_149 = arith.constant 2 : index
    %c0_150 = arith.constant 0 : index
    %135 = vector.load %arg16[%c0_147, %c1_148, %c2_149, %c0_150] : memref<2x10x10x8xf32, #tpu.memory_space<vmem>>, vector<2x8x8x8xf32>
    %136 = vector.shape_cast %135 : vector<2x8x8x8xf32> to vector<128x8xf32>
    %137 = tpu.transpose %136, [1, 0] : vector<128x8xf32> -> vector<8x128xf32>
    %c40 = arith.constant 40 : index
    %c0_151 = arith.constant 0 : index
    %138 = vector.load %arg17[%c40, %c0_151] : memref<72x128xf32, #tpu.memory_space<vmem>>, vector<8x128xf32>
    tpu.vector_store %arg17[%c40, %c0_151], %137 {strides = array<i32>} : memref<72x128xf32, #tpu.memory_space<vmem>>, vector<8x128xf32>,
    %c0_152 = arith.constant 0 : index
    %c2_153 = arith.constant 2 : index
    %c0_154 = arith.constant 0 : index
    %c0_155 = arith.constant 0 : index
    %139 = vector.load %arg16[%c0_152, %c2_153, %c0_154, %c0_155] : memref<2x10x10x8xf32, #tpu.memory_space<vmem>>, vector<2x8x8x8xf32>
    %140 = vector.shape_cast %139 : vector<2x8x8x8xf32> to vector<128x8xf32>
    %141 = tpu.transpose %140, [1, 0] : vector<128x8xf32> -> vector<8x128xf32>
    %c48 = arith.constant 48 : index
    %c0_156 = arith.constant 0 : index
    %142 = vector.load %arg17[%c48, %c0_156] : memref<72x128xf32, #tpu.memory_space<vmem>>, vector<8x128xf32>
    tpu.vector_store %arg17[%c48, %c0_156], %141 {strides = array<i32>} : memref<72x128xf32, #tpu.memory_space<vmem>>, vector<8x128xf32>,
    %c0_157 = arith.constant 0 : index
    %c2_158 = arith.constant 2 : index
    %c1_159 = arith.constant 1 : index
    %c0_160 = arith.constant 0 : index
    %143 = vector.load %arg16[%c0_157, %c2_158, %c1_159, %c0_160] : memref<2x10x10x8xf32, #tpu.memory_space<vmem>>, vector<2x8x8x8xf32>
    %144 = vector.shape_cast %143 : vector<2x8x8x8xf32> to vector<128x8xf32>
    %145 = tpu.transpose %144, [1, 0] : vector<128x8xf32> -> vector<8x128xf32>
    %c56 = arith.constant 56 : index
    %c0_161 = arith.constant 0 : index
    %146 = vector.load %arg17[%c56, %c0_161] : memref<72x128xf32, #tpu.memory_space<vmem>>, vector<8x128xf32>
    tpu.vector_store %arg17[%c56, %c0_161], %145 {strides = array<i32>} : memref<72x128xf32, #tpu.memory_space<vmem>>, vector<8x128xf32>,
    %c0_162 = arith.constant 0 : index
    %c2_163 = arith.constant 2 : index
    %c2_164 = arith.constant 2 : index
    %c0_165 = arith.constant 0 : index
    %147 = vector.load %arg16[%c0_162, %c2_163, %c2_164, %c0_165] : memref<2x10x10x8xf32, #tpu.memory_space<vmem>>, vector<2x8x8x8xf32>
    %148 = vector.shape_cast %147 : vector<2x8x8x8xf32> to vector<128x8xf32>
    %149 = tpu.transpose %148, [1, 0] : vector<128x8xf32> -> vector<8x128xf32>
    %c64 = arith.constant 64 : index
    %c0_166 = arith.constant 0 : index
    %150 = vector.load %arg17[%c64, %c0_166] : memref<72x128xf32, #tpu.memory_space<vmem>>, vector<8x128xf32>
    tpu.vector_store %arg17[%c64, %c0_166], %149 {strides = array<i32>} : memref<72x128xf32, #tpu.memory_space<vmem>>, vector<8x128xf32>,
    %c0_167 = arith.constant 0 : index
    %c0_168 = arith.constant 0 : index
    %151 = vector.load %arg6[%c0_167, %c0_168] : memref<8x72xbf16, #tpu.memory_space<vmem>>, vector<8x72xbf16>
    %c0_169 = arith.constant 0 : index
    %c0_170 = arith.constant 0 : index
    %152 = vector.load %arg17[%c0_169, %c0_170] : memref<72x128xf32, #tpu.memory_space<vmem>>, vector<72x128xf32>
    %153 = arith.truncf %152 : vector<72x128xf32> to vector<72x128xbf16>
    %cst_171 = arith.constant dense<0.000000e+00> : vector<8x128xf32>
    %154 = tpu.matmul %151, %153, %cst_171 {dimension_numbers = #tpu.dot_dimension_numbers<[1], [0], [0], [1], [0, 0, 1, 1], [], []>} : vector<8x72xbf16>, vector<72x128xbf16>, vector<8x128xf32> -> vector<8x128xf32>
    %155 = arith.addf %154, %78 : vector<8x128xf32>
    %156 = tpu.transpose %155, [1, 0] : vector<8x128xf32> -> vector<128x8xf32>
    %157 = vector.shape_cast %156 : vector<128x8xf32> to vector<2x8x8x8xf32>
    %cst_172 = arith.constant dense<0.000000e+00> : vector<8xf32>
    %158 = vector.multi_reduction <add>, %157, %cst_172 [0, 1, 2] : vector<2x8x8x8xf32> to vector<8xf32>
    %159 = vector.shape_cast %158 : vector<8xf32> to vector<1x1x1x8xf32>
    %cst_173 = arith.constant 1.280000e+02 : f32
    %160 = vector.broadcast %cst_173 : f32 to vector<1x1x1x8xf32>
    %161 = arith.divf %159, %160 : vector<1x1x1x8xf32>
    %162 = vector.broadcast %161 : vector<1x1x1x8xf32> to vector<2x8x8x8xf32>
    %163 = arith.subf %157, %162 : vector<2x8x8x8xf32>
    %164 = arith.mulf %163, %163 : vector<2x8x8x8xf32>
    %cst_174 = arith.constant dense<0.000000e+00> : vector<8xf32>
    %165 = vector.multi_reduction <add>, %164, %cst_174 [0, 1, 2] : vector<2x8x8x8xf32> to vector<8xf32>
    %166 = vector.shape_cast %165 : vector<8xf32> to vector<1x1x1x8xf32>
    %cst_175 = arith.constant 1.280000e+02 : f32
    %167 = vector.broadcast %cst_175 : f32 to vector<1x1x1x8xf32>
    %168 = arith.divf %166, %167 : vector<1x1x1x8xf32>
    %c0_176 = arith.constant 0 : index
    %c0_177 = arith.constant 0 : index
    %169 = vector.load %arg7[%c0_176, %c0_177] : memref<1x8xf32, #tpu.memory_space<vmem>>, vector<1x8xf32>
    %170 = vector.shape_cast %169 : vector<1x8xf32> to vector<1x1x1x8xf32>
    %cst_178 = arith.constant 9.99999974E-6 : f32
    %171 = vector.broadcast %cst_178 : f32 to vector<1x1x1x8xf32>
    %172 = arith.addf %168, %171 : vector<1x1x1x8xf32>
    %173 = math.rsqrt %172 : vector<1x1x1x8xf32>
    %174 = arith.mulf %170, %173 : vector<1x1x1x8xf32>
    %c0_179 = arith.constant 0 : index
    %c0_180 = arith.constant 0 : index
    %175 = vector.load %arg8[%c0_179, %c0_180] : memref<1x8xf32, #tpu.memory_space<vmem>>, vector<1x8xf32>
    %176 = vector.shape_cast %175 : vector<1x8xf32> to vector<1x1x1x8xf32>
    %177 = arith.mulf %161, %174 : vector<1x1x1x8xf32>
    %178 = arith.subf %176, %177 : vector<1x1x1x8xf32>
    %179 = vector.broadcast %174 : vector<1x1x1x8xf32> to vector<2x8x8x8xf32>
    %180 = arith.mulf %157, %179 : vector<2x8x8x8xf32>
    %181 = vector.broadcast %178 : vector<1x1x1x8xf32> to vector<2x8x8x8xf32>
    %182 = arith.addf %180, %181 : vector<2x8x8x8xf32>
    %cst_181 = arith.constant 0.000000e+00 : f32
    %183 = vector.broadcast %cst_181 : f32 to vector<2x8x8x8xf32>
    %184 = arith.maximumf %182, %183 : vector<2x8x8x8xf32>
    %cst_182 = arith.constant 0.000000e+00 : f32
    %185 = vector.broadcast %cst_182 : f32 to vector<2x1x10x8xf32>
    %c0_183 = arith.constant 0 : index
    %c0_184 = arith.constant 0 : index
    %c0_185 = arith.constant 0 : index
    %c0_186 = arith.constant 0 : index
    %186 = vector.load %arg18[%c0_183, %c0_184, %c0_185, %c0_186] : memref<2x10x10x8xf32, #tpu.memory_space<vmem>>, vector<2x1x10x8xf32>
    tpu.vector_store %arg18[%c0_183, %c0_184, %c0_185, %c0_186], %185 {strides = array<i32>} : memref<2x10x10x8xf32, #tpu.memory_space<vmem>>, vector<2x1x10x8xf32>,
    %cst_187 = arith.constant 0.000000e+00 : f32
    %187 = vector.broadcast %cst_187 : f32 to vector<2x1x10x8xf32>
    %c0_188 = arith.constant 0 : index
    %c9_189 = arith.constant 9 : index
    %c0_190 = arith.constant 0 : index
    %c0_191 = arith.constant 0 : index
    %188 = vector.load %arg18[%c0_188, %c9_189, %c0_190, %c0_191] : memref<2x10x10x8xf32, #tpu.memory_space<vmem>>, vector<2x1x10x8xf32>
    tpu.vector_store %arg18[%c0_188, %c9_189, %c0_190, %c0_191], %187 {strides = array<i32>} : memref<2x10x10x8xf32, #tpu.memory_space<vmem>>, vector<2x1x10x8xf32>,
    %cst_192 = arith.constant 0.000000e+00 : f32
    %189 = vector.broadcast %cst_192 : f32 to vector<2x10x1x8xf32>
    %c0_193 = arith.constant 0 : index
    %c0_194 = arith.constant 0 : index
    %c0_195 = arith.constant 0 : index
    %c0_196 = arith.constant 0 : index
    %190 = vector.load %arg18[%c0_193, %c0_194, %c0_195, %c0_196] : memref<2x10x10x8xf32, #tpu.memory_space<vmem>>, vector<2x10x1x8xf32>
    tpu.vector_store %arg18[%c0_193, %c0_194, %c0_195, %c0_196], %189 {strides = array<i32>} : memref<2x10x10x8xf32, #tpu.memory_space<vmem>>, vector<2x10x1x8xf32>,
    %cst_197 = arith.constant 0.000000e+00 : f32
    %191 = vector.broadcast %cst_197 : f32 to vector<2x10x1x8xf32>
    %c0_198 = arith.constant 0 : index
    %c0_199 = arith.constant 0 : index
    %c9_200 = arith.constant 9 : index
    %c0_201 = arith.constant 0 : index
    %192 = vector.load %arg18[%c0_198, %c0_199, %c9_200, %c0_201] : memref<2x10x10x8xf32, #tpu.memory_space<vmem>>, vector<2x10x1x8xf32>
    tpu.vector_store %arg18[%c0_198, %c0_199, %c9_200, %c0_201], %191 {strides = array<i32>} : memref<2x10x10x8xf32, #tpu.memory_space<vmem>>, vector<2x10x1x8xf32>,
    %c0_202 = arith.constant 0 : index
    %c1_203 = arith.constant 1 : index
    %c1_204 = arith.constant 1 : index
    %c0_205 = arith.constant 0 : index
    %193 = vector.load %arg18[%c0_202, %c1_203, %c1_204, %c0_205] : memref<2x10x10x8xf32, #tpu.memory_space<vmem>>, vector<2x8x8x8xf32>
    tpu.vector_store %arg18[%c0_202, %c1_203, %c1_204, %c0_205], %184 {strides = array<i32>} : memref<2x10x10x8xf32, #tpu.memory_space<vmem>>, vector<2x8x8x8xf32>,
    %c0_206 = arith.constant 0 : index
    %c0_207 = arith.constant 0 : index
    %c0_208 = arith.constant 0 : index
    %c0_209 = arith.constant 0 : index
    %194 = vector.load %arg18[%c0_206, %c0_207, %c0_208, %c0_209] : memref<2x10x10x8xf32, #tpu.memory_space<vmem>>, vector<2x8x8x8xf32>
    %195 = vector.shape_cast %194 : vector<2x8x8x8xf32> to vector<128x8xf32>
    %196 = tpu.transpose %195, [1, 0] : vector<128x8xf32> -> vector<8x128xf32>
    %c0_210 = arith.constant 0 : index
    %c0_211 = arith.constant 0 : index
    %197 = vector.load %arg19[%c0_210, %c0_211] : memref<72x128xf32, #tpu.memory_space<vmem>>, vector<8x128xf32>
    tpu.vector_store %arg19[%c0_210, %c0_211], %196 {strides = array<i32>} : memref<72x128xf32, #tpu.memory_space<vmem>>, vector<8x128xf32>,
    %c0_212 = arith.constant 0 : index
    %c0_213 = arith.constant 0 : index
    %c1_214 = arith.constant 1 : index
    %c0_215 = arith.constant 0 : index
    %198 = vector.load %arg18[%c0_212, %c0_213, %c1_214, %c0_215] : memref<2x10x10x8xf32, #tpu.memory_space<vmem>>, vector<2x8x8x8xf32>
    %199 = vector.shape_cast %198 : vector<2x8x8x8xf32> to vector<128x8xf32>
    %200 = tpu.transpose %199, [1, 0] : vector<128x8xf32> -> vector<8x128xf32>
    %c8_216 = arith.constant 8 : index
    %c0_217 = arith.constant 0 : index
    %201 = vector.load %arg19[%c8_216, %c0_217] : memref<72x128xf32, #tpu.memory_space<vmem>>, vector<8x128xf32>
    tpu.vector_store %arg19[%c8_216, %c0_217], %200 {strides = array<i32>} : memref<72x128xf32, #tpu.memory_space<vmem>>, vector<8x128xf32>,
    %c0_218 = arith.constant 0 : index
    %c0_219 = arith.constant 0 : index
    %c2_220 = arith.constant 2 : index
    %c0_221 = arith.constant 0 : index
    %202 = vector.load %arg18[%c0_218, %c0_219, %c2_220, %c0_221] : memref<2x10x10x8xf32, #tpu.memory_space<vmem>>, vector<2x8x8x8xf32>
    %203 = vector.shape_cast %202 : vector<2x8x8x8xf32> to vector<128x8xf32>
    %204 = tpu.transpose %203, [1, 0] : vector<128x8xf32> -> vector<8x128xf32>
    %c16_222 = arith.constant 16 : index
    %c0_223 = arith.constant 0 : index
    %205 = vector.load %arg19[%c16_222, %c0_223] : memref<72x128xf32, #tpu.memory_space<vmem>>, vector<8x128xf32>
    tpu.vector_store %arg19[%c16_222, %c0_223], %204 {strides = array<i32>} : memref<72x128xf32, #tpu.memory_space<vmem>>, vector<8x128xf32>,
    %c0_224 = arith.constant 0 : index
    %c1_225 = arith.constant 1 : index
    %c0_226 = arith.constant 0 : index
    %c0_227 = arith.constant 0 : index
    %206 = vector.load %arg18[%c0_224, %c1_225, %c0_226, %c0_227] : memref<2x10x10x8xf32, #tpu.memory_space<vmem>>, vector<2x8x8x8xf32>
    %207 = vector.shape_cast %206 : vector<2x8x8x8xf32> to vector<128x8xf32>
    %208 = tpu.transpose %207, [1, 0] : vector<128x8xf32> -> vector<8x128xf32>
    %c24_228 = arith.constant 24 : index
    %c0_229 = arith.constant 0 : index
    %209 = vector.load %arg19[%c24_228, %c0_229] : memref<72x128xf32, #tpu.memory_space<vmem>>, vector<8x128xf32>
    tpu.vector_store %arg19[%c24_228, %c0_229], %208 {strides = array<i32>} : memref<72x128xf32, #tpu.memory_space<vmem>>, vector<8x128xf32>,
    %c0_230 = arith.constant 0 : index
    %c1_231 = arith.constant 1 : index
    %c1_232 = arith.constant 1 : index
    %c0_233 = arith.constant 0 : index
    %210 = vector.load %arg18[%c0_230, %c1_231, %c1_232, %c0_233] : memref<2x10x10x8xf32, #tpu.memory_space<vmem>>, vector<2x8x8x8xf32>
    %211 = vector.shape_cast %210 : vector<2x8x8x8xf32> to vector<128x8xf32>
    %212 = tpu.transpose %211, [1, 0] : vector<128x8xf32> -> vector<8x128xf32>
    %c32_234 = arith.constant 32 : index
    %c0_235 = arith.constant 0 : index
    %213 = vector.load %arg19[%c32_234, %c0_235] : memref<72x128xf32, #tpu.memory_space<vmem>>, vector<8x128xf32>
    tpu.vector_store %arg19[%c32_234, %c0_235], %212 {strides = array<i32>} : memref<72x128xf32, #tpu.memory_space<vmem>>, vector<8x128xf32>,
    %c0_236 = arith.constant 0 : index
    %c1_237 = arith.constant 1 : index
    %c2_238 = arith.constant 2 : index
    %c0_239 = arith.constant 0 : index
    %214 = vector.load %arg18[%c0_236, %c1_237, %c2_238, %c0_239] : memref<2x10x10x8xf32, #tpu.memory_space<vmem>>, vector<2x8x8x8xf32>
    %215 = vector.shape_cast %214 : vector<2x8x8x8xf32> to vector<128x8xf32>
    %216 = tpu.transpose %215, [1, 0] : vector<128x8xf32> -> vector<8x128xf32>
    %c40_240 = arith.constant 40 : index
    %c0_241 = arith.constant 0 : index
    %217 = vector.load %arg19[%c40_240, %c0_241] : memref<72x128xf32, #tpu.memory_space<vmem>>, vector<8x128xf32>
    tpu.vector_store %arg19[%c40_240, %c0_241], %216 {strides = array<i32>} : memref<72x128xf32, #tpu.memory_space<vmem>>, vector<8x128xf32>,
    %c0_242 = arith.constant 0 : index
    %c2_243 = arith.constant 2 : index
    %c0_244 = arith.constant 0 : index
    %c0_245 = arith.constant 0 : index
    %218 = vector.load %arg18[%c0_242, %c2_243, %c0_244, %c0_245] : memref<2x10x10x8xf32, #tpu.memory_space<vmem>>, vector<2x8x8x8xf32>
    %219 = vector.shape_cast %218 : vector<2x8x8x8xf32> to vector<128x8xf32>
    %220 = tpu.transpose %219, [1, 0] : vector<128x8xf32> -> vector<8x128xf32>
    %c48_246 = arith.constant 48 : index
    %c0_247 = arith.constant 0 : index
    %221 = vector.load %arg19[%c48_246, %c0_247] : memref<72x128xf32, #tpu.memory_space<vmem>>, vector<8x128xf32>
    tpu.vector_store %arg19[%c48_246, %c0_247], %220 {strides = array<i32>} : memref<72x128xf32, #tpu.memory_space<vmem>>, vector<8x128xf32>,
    %c0_248 = arith.constant 0 : index
    %c2_249 = arith.constant 2 : index
    %c1_250 = arith.constant 1 : index
    %c0_251 = arith.constant 0 : index
    %222 = vector.load %arg18[%c0_248, %c2_249, %c1_250, %c0_251] : memref<2x10x10x8xf32, #tpu.memory_space<vmem>>, vector<2x8x8x8xf32>
    %223 = vector.shape_cast %222 : vector<2x8x8x8xf32> to vector<128x8xf32>
    %224 = tpu.transpose %223, [1, 0] : vector<128x8xf32> -> vector<8x128xf32>
    %c56_252 = arith.constant 56 : index
    %c0_253 = arith.constant 0 : index
    %225 = vector.load %arg19[%c56_252, %c0_253] : memref<72x128xf32, #tpu.memory_space<vmem>>, vector<8x128xf32>
    tpu.vector_store %arg19[%c56_252, %c0_253], %224 {strides = array<i32>} : memref<72x128xf32, #tpu.memory_space<vmem>>, vector<8x128xf32>,
    %c0_254 = arith.constant 0 : index
    %c2_255 = arith.constant 2 : index
    %c2_256 = arith.constant 2 : index
    %c0_257 = arith.constant 0 : index
    %226 = vector.load %arg18[%c0_254, %c2_255, %c2_256, %c0_257] : memref<2x10x10x8xf32, #tpu.memory_space<vmem>>, vector<2x8x8x8xf32>
    %227 = vector.shape_cast %226 : vector<2x8x8x8xf32> to vector<128x8xf32>
    %228 = tpu.transpose %227, [1, 0] : vector<128x8xf32> -> vector<8x128xf32>
    %c64_258 = arith.constant 64 : index
    %c0_259 = arith.constant 0 : index
    %229 = vector.load %arg19[%c64_258, %c0_259] : memref<72x128xf32, #tpu.memory_space<vmem>>, vector<8x128xf32>
    tpu.vector_store %arg19[%c64_258, %c0_259], %228 {strides = array<i32>} : memref<72x128xf32, #tpu.memory_space<vmem>>, vector<8x128xf32>,
    %c0_260 = arith.constant 0 : index
    %c0_261 = arith.constant 0 : index
    %230 = vector.load %arg9[%c0_260, %c0_261] : memref<8x72xbf16, #tpu.memory_space<vmem>>, vector<8x72xbf16>
    %c0_262 = arith.constant 0 : index
    %c0_263 = arith.constant 0 : index
    %231 = vector.load %arg19[%c0_262, %c0_263] : memref<72x128xf32, #tpu.memory_space<vmem>>, vector<72x128xf32>
    %232 = arith.truncf %231 : vector<72x128xf32> to vector<72x128xbf16>
    %cst_264 = arith.constant dense<0.000000e+00> : vector<8x128xf32>
    %233 = tpu.matmul %230, %232, %cst_264 {dimension_numbers = #tpu.dot_dimension_numbers<[1], [0], [0], [1], [0, 0, 1, 1], [], []>} : vector<8x72xbf16>, vector<72x128xbf16>, vector<8x128xf32> -> vector<8x128xf32>
    %cst_265 = arith.constant dense<0.000000e+00> : vector<8xf32>
    %234 = vector.multi_reduction <add>, %233, %cst_265 [1] : vector<8x128xf32> to vector<8xf32>
    %235 = vector.shape_cast %234 : vector<8xf32> to vector<8x1xf32>
    %cst_266 = arith.constant 1.280000e+02 : f32
    %236 = vector.broadcast %cst_266 : f32 to vector<8x1xf32>
    %237 = arith.divf %235, %236 : vector<8x1xf32>
    %238 = vector.broadcast %237 : vector<8x1xf32> to vector<8x128xf32>
    %239 = arith.subf %233, %238 : vector<8x128xf32>
    %240 = arith.mulf %239, %239 : vector<8x128xf32>
    %cst_267 = arith.constant dense<0.000000e+00> : vector<8xf32>
    %241 = vector.multi_reduction <add>, %240, %cst_267 [1] : vector<8x128xf32> to vector<8xf32>
    %242 = vector.shape_cast %241 : vector<8xf32> to vector<8x1xf32>
    %cst_268 = arith.constant 1.280000e+02 : f32
    %243 = vector.broadcast %cst_268 : f32 to vector<8x1xf32>
    %244 = arith.divf %242, %243 : vector<8x1xf32>
    %c0_269 = arith.constant 0 : index
    %c0_270 = arith.constant 0 : index
    %245 = vector.load %arg10[%c0_269, %c0_270] : memref<8x1xf32, #tpu.memory_space<vmem>>, vector<8x1xf32>
    %cst_271 = arith.constant 9.99999974E-6 : f32
    %246 = vector.broadcast %cst_271 : f32 to vector<8x1xf32>
    %247 = arith.addf %244, %246 : vector<8x1xf32>
    %248 = math.rsqrt %247 : vector<8x1xf32>
    %249 = arith.mulf %245, %248 : vector<8x1xf32>
    %c0_272 = arith.constant 0 : index
    %c0_273 = arith.constant 0 : index
    %250 = vector.load %arg11[%c0_272, %c0_273] : memref<8x1xf32, #tpu.memory_space<vmem>>, vector<8x1xf32>
    %251 = arith.mulf %237, %249 : vector<8x1xf32>
    %252 = arith.subf %250, %251 : vector<8x1xf32>
    %253 = vector.broadcast %249 : vector<8x1xf32> to vector<8x128xf32>
    %254 = arith.mulf %233, %253 : vector<8x128xf32>
    %255 = vector.broadcast %252 : vector<8x1xf32> to vector<8x128xf32>
    %256 = arith.addf %254, %255 : vector<8x128xf32>
    %cst_274 = arith.constant 0.000000e+00 : f32
    %257 = vector.broadcast %cst_274 : f32 to vector<8x128xf32>
    %258 = arith.maximumf %256, %257 : vector<8x128xf32>
    %259 = tpu.transpose %258, [1, 0] : vector<8x128xf32> -> vector<128x8xf32>
    %260 = vector.shape_cast %259 : vector<128x8xf32> to vector<2x8x8x8xf32>
    %cst_275 = arith.constant 0.000000e+00 : f32
    %261 = vector.broadcast %cst_275 : f32 to vector<2x1x10x8xf32>
    %c0_276 = arith.constant 0 : index
    %c0_277 = arith.constant 0 : index
    %c0_278 = arith.constant 0 : index
    %c0_279 = arith.constant 0 : index
    %262 = vector.load %arg20[%c0_276, %c0_277, %c0_278, %c0_279] : memref<2x10x10x8xf32, #tpu.memory_space<vmem>>, vector<2x1x10x8xf32>
    tpu.vector_store %arg20[%c0_276, %c0_277, %c0_278, %c0_279], %261 {strides = array<i32>} : memref<2x10x10x8xf32, #tpu.memory_space<vmem>>, vector<2x1x10x8xf32>,
    %cst_280 = arith.constant 0.000000e+00 : f32
    %263 = vector.broadcast %cst_280 : f32 to vector<2x1x10x8xf32>
    %c0_281 = arith.constant 0 : index
    %c9_282 = arith.constant 9 : index
    %c0_283 = arith.constant 0 : index
    %c0_284 = arith.constant 0 : index
    %264 = vector.load %arg20[%c0_281, %c9_282, %c0_283, %c0_284] : memref<2x10x10x8xf32, #tpu.memory_space<vmem>>, vector<2x1x10x8xf32>
    tpu.vector_store %arg20[%c0_281, %c9_282, %c0_283, %c0_284], %263 {strides = array<i32>} : memref<2x10x10x8xf32, #tpu.memory_space<vmem>>, vector<2x1x10x8xf32>,
    %cst_285 = arith.constant 0.000000e+00 : f32
    %265 = vector.broadcast %cst_285 : f32 to vector<2x10x1x8xf32>
    %c0_286 = arith.constant 0 : index
    %c0_287 = arith.constant 0 : index
    %c0_288 = arith.constant 0 : index
    %c0_289 = arith.constant 0 : index
    %266 = vector.load %arg20[%c0_286, %c0_287, %c0_288, %c0_289] : memref<2x10x10x8xf32, #tpu.memory_space<vmem>>, vector<2x10x1x8xf32>
    tpu.vector_store %arg20[%c0_286, %c0_287, %c0_288, %c0_289], %265 {strides = array<i32>} : memref<2x10x10x8xf32, #tpu.memory_space<vmem>>, vector<2x10x1x8xf32>,
    %cst_290 = arith.constant 0.000000e+00 : f32
    %267 = vector.broadcast %cst_290 : f32 to vector<2x10x1x8xf32>
    %c0_291 = arith.constant 0 : index
    %c0_292 = arith.constant 0 : index
    %c9_293 = arith.constant 9 : index
    %c0_294 = arith.constant 0 : index
    %268 = vector.load %arg20[%c0_291, %c0_292, %c9_293, %c0_294] : memref<2x10x10x8xf32, #tpu.memory_space<vmem>>, vector<2x10x1x8xf32>
    tpu.vector_store %arg20[%c0_291, %c0_292, %c9_293, %c0_294], %267 {strides = array<i32>} : memref<2x10x10x8xf32, #tpu.memory_space<vmem>>, vector<2x10x1x8xf32>,
    %c0_295 = arith.constant 0 : index
    %c1_296 = arith.constant 1 : index
    %c1_297 = arith.constant 1 : index
    %c0_298 = arith.constant 0 : index
    %269 = vector.load %arg20[%c0_295, %c1_296, %c1_297, %c0_298] : memref<2x10x10x8xf32, #tpu.memory_space<vmem>>, vector<2x8x8x8xf32>
    tpu.vector_store %arg20[%c0_295, %c1_296, %c1_297, %c0_298], %260 {strides = array<i32>} : memref<2x10x10x8xf32, #tpu.memory_space<vmem>>, vector<2x8x8x8xf32>,
    %c0_299 = arith.constant 0 : index
    %c0_300 = arith.constant 0 : index
    %c0_301 = arith.constant 0 : index
    %c0_302 = arith.constant 0 : index
    %270 = vector.load %arg20[%c0_299, %c0_300, %c0_301, %c0_302] : memref<2x10x10x8xf32, #tpu.memory_space<vmem>>, vector<2x8x8x8xf32>
    %271 = vector.shape_cast %270 : vector<2x8x8x8xf32> to vector<128x8xf32>
    %272 = tpu.transpose %271, [1, 0] : vector<128x8xf32> -> vector<8x128xf32>
    %c0_303 = arith.constant 0 : index
    %c0_304 = arith.constant 0 : index
    %273 = vector.load %arg21[%c0_303, %c0_304] : memref<72x128xf32, #tpu.memory_space<vmem>>, vector<8x128xf32>
    tpu.vector_store %arg21[%c0_303, %c0_304], %272 {strides = array<i32>} : memref<72x128xf32, #tpu.memory_space<vmem>>, vector<8x128xf32>,
    %c0_305 = arith.constant 0 : index
    %c0_306 = arith.constant 0 : index
    %c1_307 = arith.constant 1 : index
    %c0_308 = arith.constant 0 : index
    %274 = vector.load %arg20[%c0_305, %c0_306, %c1_307, %c0_308] : memref<2x10x10x8xf32, #tpu.memory_space<vmem>>, vector<2x8x8x8xf32>
    %275 = vector.shape_cast %274 : vector<2x8x8x8xf32> to vector<128x8xf32>
    %276 = tpu.transpose %275, [1, 0] : vector<128x8xf32> -> vector<8x128xf32>
    %c8_309 = arith.constant 8 : index
    %c0_310 = arith.constant 0 : index
    %277 = vector.load %arg21[%c8_309, %c0_310] : memref<72x128xf32, #tpu.memory_space<vmem>>, vector<8x128xf32>
    tpu.vector_store %arg21[%c8_309, %c0_310], %276 {strides = array<i32>} : memref<72x128xf32, #tpu.memory_space<vmem>>, vector<8x128xf32>,
    %c0_311 = arith.constant 0 : index
    %c0_312 = arith.constant 0 : index
    %c2_313 = arith.constant 2 : index
    %c0_314 = arith.constant 0 : index
    %278 = vector.load %arg20[%c0_311, %c0_312, %c2_313, %c0_314] : memref<2x10x10x8xf32, #tpu.memory_space<vmem>>, vector<2x8x8x8xf32>
    %279 = vector.shape_cast %278 : vector<2x8x8x8xf32> to vector<128x8xf32>
    %280 = tpu.transpose %279, [1, 0] : vector<128x8xf32> -> vector<8x128xf32>
    %c16_315 = arith.constant 16 : index
    %c0_316 = arith.constant 0 : index
    %281 = vector.load %arg21[%c16_315, %c0_316] : memref<72x128xf32, #tpu.memory_space<vmem>>, vector<8x128xf32>
    tpu.vector_store %arg21[%c16_315, %c0_316], %280 {strides = array<i32>} : memref<72x128xf32, #tpu.memory_space<vmem>>, vector<8x128xf32>,
    %c0_317 = arith.constant 0 : index
    %c1_318 = arith.constant 1 : index
    %c0_319 = arith.constant 0 : index
    %c0_320 = arith.constant 0 : index
    %282 = vector.load %arg20[%c0_317, %c1_318, %c0_319, %c0_320] : memref<2x10x10x8xf32, #tpu.memory_space<vmem>>, vector<2x8x8x8xf32>
    %283 = vector.shape_cast %282 : vector<2x8x8x8xf32> to vector<128x8xf32>
    %284 = tpu.transpose %283, [1, 0] : vector<128x8xf32> -> vector<8x128xf32>
    %c24_321 = arith.constant 24 : index
    %c0_322 = arith.constant 0 : index
    %285 = vector.load %arg21[%c24_321, %c0_322] : memref<72x128xf32, #tpu.memory_space<vmem>>, vector<8x128xf32>
    tpu.vector_store %arg21[%c24_321, %c0_322], %284 {strides = array<i32>} : memref<72x128xf32, #tpu.memory_space<vmem>>, vector<8x128xf32>,
    %c0_323 = arith.constant 0 : index
    %c1_324 = arith.constant 1 : index
    %c1_325 = arith.constant 1 : index
    %c0_326 = arith.constant 0 : index
    %286 = vector.load %arg20[%c0_323, %c1_324, %c1_325, %c0_326] : memref<2x10x10x8xf32, #tpu.memory_space<vmem>>, vector<2x8x8x8xf32>
    %287 = vector.shape_cast %286 : vector<2x8x8x8xf32> to vector<128x8xf32>
    %288 = tpu.transpose %287, [1, 0] : vector<128x8xf32> -> vector<8x128xf32>
    %c32_327 = arith.constant 32 : index
    %c0_328 = arith.constant 0 : index
    %289 = vector.load %arg21[%c32_327, %c0_328] : memref<72x128xf32, #tpu.memory_space<vmem>>, vector<8x128xf32>
    tpu.vector_store %arg21[%c32_327, %c0_328], %288 {strides = array<i32>} : memref<72x128xf32, #tpu.memory_space<vmem>>, vector<8x128xf32>,
    %c0_329 = arith.constant 0 : index
    %c1_330 = arith.constant 1 : index
    %c2_331 = arith.constant 2 : index
    %c0_332 = arith.constant 0 : index
    %290 = vector.load %arg20[%c0_329, %c1_330, %c2_331, %c0_332] : memref<2x10x10x8xf32, #tpu.memory_space<vmem>>, vector<2x8x8x8xf32>
    %291 = vector.shape_cast %290 : vector<2x8x8x8xf32> to vector<128x8xf32>
    %292 = tpu.transpose %291, [1, 0] : vector<128x8xf32> -> vector<8x128xf32>
    %c40_333 = arith.constant 40 : index
    %c0_334 = arith.constant 0 : index
    %293 = vector.load %arg21[%c40_333, %c0_334] : memref<72x128xf32, #tpu.memory_space<vmem>>, vector<8x128xf32>
    tpu.vector_store %arg21[%c40_333, %c0_334], %292 {strides = array<i32>} : memref<72x128xf32, #tpu.memory_space<vmem>>, vector<8x128xf32>,
    %c0_335 = arith.constant 0 : index
    %c2_336 = arith.constant 2 : index
    %c0_337 = arith.constant 0 : index
    %c0_338 = arith.constant 0 : index
    %294 = vector.load %arg20[%c0_335, %c2_336, %c0_337, %c0_338] : memref<2x10x10x8xf32, #tpu.memory_space<vmem>>, vector<2x8x8x8xf32>
    %295 = vector.shape_cast %294 : vector<2x8x8x8xf32> to vector<128x8xf32>
    %296 = tpu.transpose %295, [1, 0] : vector<128x8xf32> -> vector<8x128xf32>
    %c48_339 = arith.constant 48 : index
    %c0_340 = arith.constant 0 : index
    %297 = vector.load %arg21[%c48_339, %c0_340] : memref<72x128xf32, #tpu.memory_space<vmem>>, vector<8x128xf32>
    tpu.vector_store %arg21[%c48_339, %c0_340], %296 {strides = array<i32>} : memref<72x128xf32, #tpu.memory_space<vmem>>, vector<8x128xf32>,
    %c0_341 = arith.constant 0 : index
    %c2_342 = arith.constant 2 : index
    %c1_343 = arith.constant 1 : index
    %c0_344 = arith.constant 0 : index
    %298 = vector.load %arg20[%c0_341, %c2_342, %c1_343, %c0_344] : memref<2x10x10x8xf32, #tpu.memory_space<vmem>>, vector<2x8x8x8xf32>
    %299 = vector.shape_cast %298 : vector<2x8x8x8xf32> to vector<128x8xf32>
    %300 = tpu.transpose %299, [1, 0] : vector<128x8xf32> -> vector<8x128xf32>
    %c56_345 = arith.constant 56 : index
    %c0_346 = arith.constant 0 : index
    %301 = vector.load %arg21[%c56_345, %c0_346] : memref<72x128xf32, #tpu.memory_space<vmem>>, vector<8x128xf32>
    tpu.vector_store %arg21[%c56_345, %c0_346], %300 {strides = array<i32>} : memref<72x128xf32, #tpu.memory_space<vmem>>, vector<8x128xf32>,
    %c0_347 = arith.constant 0 : index
    %c2_348 = arith.constant 2 : index
    %c2_349 = arith.constant 2 : index
    %c0_350 = arith.constant 0 : index
    %302 = vector.load %arg20[%c0_347, %c2_348, %c2_349, %c0_350] : memref<2x10x10x8xf32, #tpu.memory_space<vmem>>, vector<2x8x8x8xf32>
    %303 = vector.shape_cast %302 : vector<2x8x8x8xf32> to vector<128x8xf32>
    %304 = tpu.transpose %303, [1, 0] : vector<128x8xf32> -> vector<8x128xf32>
    %c64_351 = arith.constant 64 : index
    %c0_352 = arith.constant 0 : index
    %305 = vector.load %arg21[%c64_351, %c0_352] : memref<72x128xf32, #tpu.memory_space<vmem>>, vector<8x128xf32>
    tpu.vector_store %arg21[%c64_351, %c0_352], %304 {strides = array<i32>} : memref<72x128xf32, #tpu.memory_space<vmem>>, vector<8x128xf32>,
    %c0_353 = arith.constant 0 : index
    %c0_354 = arith.constant 0 : index
    %306 = vector.load %arg12[%c0_353, %c0_354] : memref<8x72xbf16, #tpu.memory_space<vmem>>, vector<8x72xbf16>
    %c0_355 = arith.constant 0 : index
    %c0_356 = arith.constant 0 : index
    %307 = vector.load %arg21[%c0_355, %c0_356] : memref<72x128xf32, #tpu.memory_space<vmem>>, vector<72x128xf32>
    %308 = arith.truncf %307 : vector<72x128xf32> to vector<72x128xbf16>
    %cst_357 = arith.constant dense<0.000000e+00> : vector<8x128xf32>
    %309 = tpu.matmul %306, %308, %cst_357 {dimension_numbers = #tpu.dot_dimension_numbers<[1], [0], [0], [1], [0, 0, 1, 1], [], []>} : vector<8x72xbf16>, vector<72x128xbf16>, vector<8x128xf32> -> vector<8x128xf32>
    %310 = arith.addf %309, %155 : vector<8x128xf32>
    %c0_358 = arith.constant 0 : index
    %c0_359 = arith.constant 0 : index
    %311 = vector.load %arg13[%c0_358, %c0_359] : memref<8x128xf32, #tpu.memory_space<vmem>>, vector<8x128xf32>
    tpu.vector_store %arg13[%c0_358, %c0_359], %310 {strides = array<i32>} : memref<8x128xf32, #tpu.memory_space<vmem>>, vector<8x128xf32>,
    return
  }
}

</mosaic_0001>

<llo_original>
// kernel: network_block_forward.1
$region0: #{network_block_forward.1}
  #allocation0 [shape = 'u32[]', space=smem, size = 0x4, offset = 0x4, fixed_abs, tag = 'smem constant byte address 0x4 - core index']
  #allocation1 [shape = 'u32[144,128]{1,0:T(1,128)}', space=vmem, size = 0x12000, scoped, tag = 'internal scratch']
  #allocation2 [shape = 'f32[2,18,18,4]{3,2,1,0:T(8,128)}', space=vmem, size = 0x6c000, scoped, tag = 'scratch operand']
  #allocation3 [shape = 'f32[36,128]{1,0:T(8,128)}', space=vmem, size = 0x5000, scoped, tag = 'scratch operand']
  #allocation4 [shape = 'f32[2,10,10,8]{3,2,1,0:T(8,128)}', space=vmem, size = 0x28000, scoped, tag = 'scratch operand']
  #allocation5 [shape = 'f32[72,128]{1,0:T(8,128)}', space=vmem, size = 0x9000, scoped, tag = 'scratch operand']
  #allocation6 [shape = 'f32[2,10,10,8]{3,2,1,0:T(8,128)}', space=vmem, size = 0x28000, scoped, tag = 'scratch operand']
  #allocation7 [shape = 'f32[72,128]{1,0:T(8,128)}', space=vmem, size = 0x9000, scoped, tag = 'scratch operand']
  #allocation8 [shape = 'f32[2,10,10,8]{3,2,1,0:T(8,128)}', space=vmem, size = 0x28000, scoped, tag = 'scratch operand']
  #allocation9 [shape = 'f32[72,128]{1,0:T(8,128)}', space=vmem, size = 0x9000, scoped, tag = 'scratch operand']
  %s0 = inlined_call_operand.vmem [shape: f32[2,16,16,4], index: 0, kind: input, shape index: {}]
  %s1 = inlined_call_operand.vmem [shape: f32[1,4], index: 1, kind: input, shape index: {}]
  %s2 = inlined_call_operand.vmem [shape: f32[1,4], index: 2, kind: input, shape index: {}]
  %s3 = inlined_call_operand.vmem [shape: bf16[16,36], index: 3, kind: input, shape index: {}]
  %s4 = inlined_call_operand.vmem [shape: f32[8,1], index: 4, kind: input, shape index: {}]
  %s5 = inlined_call_operand.vmem [shape: f32[8,1], index: 5, kind: input, shape index: {}]
  %s6 = inlined_call_operand.vmem [shape: bf16[8,72], index: 6, kind: input, shape index: {}]
  %s7 = inlined_call_operand.vmem [shape: f32[1,8], index: 7, kind: input, shape index: {}]
  %s8 = inlined_call_operand.vmem [shape: f32[1,8], index: 8, kind: input, shape index: {}]
  %s9 = inlined_call_operand.vmem [shape: bf16[8,72], index: 9, kind: input, shape index: {}]
  %s10 = inlined_call_operand.vmem [shape: f32[8,1], index: 10, kind: input, shape index: {}]
  %s11 = inlined_call_operand.vmem [shape: f32[8,1], index: 11, kind: input, shape index: {}]
  %s12 = inlined_call_operand.vmem [shape: bf16[8,72], index: 12, kind: input, shape index: {}]
  %s13 = inlined_call_operand.vmem [shape: f32[8,128], index: 13, kind: output, shape index: {}]
  %s14 = sld [smem:[#allocation0]]
  $region62: #{network_block_forward.1} parent=0
    _
  %s16 = ssub.s32 1, %s14
  %s17 = scalar_select 0, %s16, %s14
  // Predicated region
  $region2: #{network_block_forward.1} parent=0 // pred_check
    _
  $region3: #{network_block_forward.1} parent=0 // pred_check_branch
    %19 = sbr.rel (0) target = $region5
  $region4: #{network_block_forward.1} parent=0 // pred_region
    _
  $region5: #{network_block_forward.1} parent=0 // pred_fallthru
    _
  // Predicated region
  $region6: #{network_block_forward.1} parent=0 // pred_check
    _
  $region7: #{network_block_forward.1} parent=0 // pred_check_branch
    %21 = sbr.rel (0) target = $region9
  $region8: #{network_block_forward.1} parent=0 // pred_region
    _
  $region9: #{network_block_forward.1} parent=0 // pred_fallthru
    _
  // Predicated region
  $region10: #{network_block_forward.1} parent=0 // pred_check
    _
  $region11: #{network_block_forward.1} parent=0 // pred_check_branch
    %23 = sbr.rel (0) target = $region13
  $region12: #{network_block_forward.1} parent=0 // pred_region
    _
  $region13: #{network_block_forward.1} parent=0 // pred_fallthru
    _
  // Predicated region
  $region14: #{network_block_forward.1} parent=0 // pred_check
    _
  $region15: #{network_block_forward.1} parent=0 // pred_check_branch
    %25 = sbr.rel (0) target = $region17
  $region16: #{network_block_forward.1} parent=0 // pred_region
    _
  $region17: #{network_block_forward.1} parent=0 // pred_fallthru
    _
  // Predicated region
  $region18: #{network_block_forward.1} parent=0 // pred_check
    _
  $region19: #{network_block_forward.1} parent=0 // pred_check_branch
    %27 = sbr.rel (0) target = $region21
  $region20: #{network_block_forward.1} parent=0 // pred_region
    _
  $region21: #{network_block_forward.1} parent=0 // pred_fallthru
    _
  // Predicated region
  $region22: #{network_block_forward.1} parent=0 // pred_check
    _
  $region23: #{network_block_forward.1} parent=0 // pred_check_branch
    %29 = sbr.rel (0) target = $region25
  $region24: #{network_block_forward.1} parent=0 // pred_region
    _
  $region25: #{network_block_forward.1} parent=0 // pred_fallthru
    _
  // Predicated region
  $region26: #{network_block_forward.1} parent=0 // pred_check
    _
  $region27: #{network_block_forward.1} parent=0 // pred_check_branch
    %31 = sbr.rel (0) target = $region29
  $region28: #{network_block_forward.1} parent=0 // pred_region
    _
  $region29: #{network_block_forward.1} parent=0 // pred_fallthru
    _
  // Predicated region
  $region30: #{network_block_forward.1} parent=0 // pred_check
    _
  $region31: #{network_block_forward.1} parent=0 // pred_check_branch
    %33 = sbr.rel (0) target = $region33
  $region32: #{network_block_forward.1} parent=0 // pred_region
    _
  $region33: #{network_block_forward.1} parent=0 // pred_fallthru
    _
  // Predicated region
  $region34: #{network_block_forward.1} parent=0 // pred_check
    _
  $region35: #{network_block_forward.1} parent=0 // pred_check_branch
    %35 = sbr.rel (0) target = $region37
  $region36: #{network_block_forward.1} parent=0 // pred_region
    _
  $region37: #{network_block_forward.1} parent=0 // pred_fallthru
    _
  // Predicated region
  $region38: #{network_block_forward.1} parent=0 // pred_check
    _
  $region39: #{network_block_forward.1} parent=0 // pred_check_branch
    %37 = sbr.rel (0) target = $region41
  $region40: #{network_block_forward.1} parent=0 // pred_region
    _
  $region41: #{network_block_forward.1} parent=0 // pred_fallthru
    _
  // Predicated region
  $region42: #{network_block_forward.1} parent=0 // pred_check
    _
  $region43: #{network_block_forward.1} parent=0 // pred_check_branch
    %39 = sbr.rel (0) target = $region45
  $region44: #{network_block_forward.1} parent=0 // pred_region
    _
  $region45: #{network_block_forward.1} parent=0 // pred_fallthru
    _
  // Predicated region
  $region46: #{network_block_forward.1} parent=0 // pred_check
    _
  $region47: #{network_block_forward.1} parent=0 // pred_check_branch
    %41 = sbr.rel (0) target = $region49
  $region48: #{network_block_forward.1} parent=0 // pred_region
    _
  $region49: #{network_block_forward.1} parent=0 // pred_fallthru
    _
  // Predicated region
  $region50: #{network_block_forward.1} parent=0 // pred_check
    _
  $region51: #{network_block_forward.1} parent=0 // pred_check_branch
    %43 = sbr.rel (0) target = $region53
  $region52: #{network_block_forward.1} parent=0 // pred_region
    _
  $region53: #{network_block_forward.1} parent=0 // pred_fallthru
    _
  %v45 = vld [vmem:[%s0] sm:$0xff]
  %v46 = vld [vmem:[%s0 + $0x8] sm:$0xff]
  %v47 = vld [vmem:[%s0 + $0x10] sm:$0xff]
  %v48 = vld [vmem:[%s0 + $0x18] sm:$0xff]
  %v49 = vld [vmem:[%s0 + $0x20] sm:$0xff]
  %v50 = vld [vmem:[%s0 + $0x28] sm:$0xff]
  %v51 = vld [vmem:[%s0 + $0x30] sm:$0xff]
  %v52 = vld [vmem:[%s0 + $0x38] sm:$0xff]
  %v53 = vld [vmem:[%s0 + $0x40] sm:$0xff]
  %v54 = vld [vmem:[%s0 + $0x48] sm:$0xff]
  %v55 = vld [vmem:[%s0 + $0x50] sm:$0xff]
  %v56 = vld [vmem:[%s0 + $0x58] sm:$0xff]
  %v57 = vld [vmem:[%s0 + $0x60] sm:$0xff]
  %v58 = vld [vmem:[%s0 + $0x68] sm:$0xff]
  %v59 = vld [vmem:[%s0 + $0x70] sm:$0xff]
  %v60 = vld [vmem:[%s0 + $0x78] sm:$0xff]
  %v61 = vld [vmem:[%s0 + $0x80] sm:$0xff]
  %v62 = vld [vmem:[%s0 + $0x88] sm:$0xff]
  %v63 = vld [vmem:[%s0 + $0x90] sm:$0xff]
  %v64 = vld [vmem:[%s0 + $0x98] sm:$0xff]
  %v65 = vld [vmem:[%s0 + $0xa0] sm:$0xff]
  %v66 = vld [vmem:[%s0 + $0xa8] sm:$0xff]
  %v67 = vld [vmem:[%s0 + $0xb0] sm:$0xff]
  %v68 = vld [vmem:[%s0 + $0xb8] sm:$0xff]
  %v69 = vld [vmem:[%s0 + $0xc0] sm:$0xff]
  %v70 = vld [vmem:[%s0 + $0xc8] sm:$0xff]
  %v71 = vld [vmem:[%s0 + $0xd0] sm:$0xff]
  %v72 = vld [vmem:[%s0 + $0xd8] sm:$0xff]
  %v73 = vld [vmem:[%s0 + $0xe0] sm:$0xff]
  %v74 = vld [vmem:[%s0 + $0xe8] sm:$0xff]
  %v75 = vld [vmem:[%s0 + $0xf0] sm:$0xff]
  %v76 = vld [vmem:[%s0 + $0xf8] sm:$0xff]
  %v77 = vld [vmem:[%s0 + $0x100] sm:$0xff]
  %v78 = vld [vmem:[%s0 + $0x108] sm:$0xff]
  %v79 = vld [vmem:[%s0 + $0x110] sm:$0xff]
  %v80 = vld [vmem:[%s0 + $0x118] sm:$0xff]
  %v81 = vld [vmem:[%s0 + $0x120] sm:$0xff]
  %v82 = vld [vmem:[%s0 + $0x128] sm:$0xff]
  %v83 = vld [vmem:[%s0 + $0x130] sm:$0xff]
  %v84 = vld [vmem:[%s0 + $0x138] sm:$0xff]
  %v85 = vld [vmem:[%s0 + $0x140] sm:$0xff]
  %v86 = vld [vmem:[%s0 + $0x148] sm:$0xff]
  %v87 = vld [vmem:[%s0 + $0x150] sm:$0xff]
  %v88 = vld [vmem:[%s0 + $0x158] sm:$0xff]
  %v89 = vld [vmem:[%s0 + $0x160] sm:$0xff]
  %v90 = vld [vmem:[%s0 + $0x168] sm:$0xff]
  %v91 = vld [vmem:[%s0 + $0x170] sm:$0xff]
  %v92 = vld [vmem:[%s0 + $0x178] sm:$0xff]
  %v93 = vld [vmem:[%s0 + $0x180] sm:$0xff]
  %v94 = vld [vmem:[%s0 + $0x188] sm:$0xff]
  %v95 = vld [vmem:[%s0 + $0x190] sm:$0xff]
  %v96 = vld [vmem:[%s0 + $0x198] sm:$0xff]
  %v97 = vld [vmem:[%s0 + $0x1a0] sm:$0xff]
  %v98 = vld [vmem:[%s0 + $0x1a8] sm:$0xff]
  %v99 = vld [vmem:[%s0 + $0x1b0] sm:$0xff]
  %v100 = vld [vmem:[%s0 + $0x1b8] sm:$0xff]
  %v101 = vld [vmem:[%s0 + $0x1c0] sm:$0xff]
  %v102 = vld [vmem:[%s0 + $0x1c8] sm:$0xff]
  %v103 = vld [vmem:[%s0 + $0x1d0] sm:$0xff]
  %v104 = vld [vmem:[%s0 + $0x1d8] sm:$0xff]
  %v105 = vld [vmem:[%s0 + $0x1e0] sm:$0xff]
  %v106 = vld [vmem:[%s0 + $0x1e8] sm:$0xff]
  %v107 = vld [vmem:[%s0 + $0x1f0] sm:$0xff]
  %v108 = vld [vmem:[%s0 + $0x1f8] sm:$0xff]
  %vm109 = vcmask 31744
  %v110 = vsel %vm109, %v45, 0.0
  %v111 = vsel %vm109, %v46, 0.0
  %v112 = vadd.f32 %v110, %v111
  %v113 = vsel %vm109, %v47, 0.0
  %v114 = vadd.f32 %v112, %v113
  %v115 = vsel %vm109, %v48, 0.0
  %v116 = vadd.f32 %v114, %v115
  %v117 = vsel %vm109, %v49, 0.0
  %v118 = vadd.f32 %v116, %v117
  %v119 = vsel %vm109, %v50, 0.0
  %v120 = vadd.f32 %v118, %v119
  %v121 = vsel %vm109, %v51, 0.0
  %v122 = vadd.f32 %v120, %v121
  %v123 = vsel %vm109, %v52, 0.0
  %v124 = vadd.f32 %v122, %v123
  %v125 = vsel %vm109, %v53, 0.0
  %v126 = vadd.f32 %v124, %v125
  %v127 = vsel %vm109, %v54, 0.0
  %v128 = vadd.f32 %v126, %v127
  %v129 = vsel %vm109, %v55, 0.0
  %v130 = vadd.f32 %v128, %v129
  %v131 = vsel %vm109, %v56, 0.0
  %v132 = vadd.f32 %v130, %v131
  %v133 = vsel %vm109, %v57, 0.0
  %v134 = vadd.f32 %v132, %v133
  %v135 = vsel %vm109, %v58, 0.0
  %v136 = vadd.f32 %v134, %v135
  %v137 = vsel %vm109, %v59, 0.0
  %v138 = vadd.f32 %v136, %v137
  %v139 = vsel %vm109, %v60, 0.0
  %v140 = vadd.f32 %v138, %v139
  %v141 = vsel %vm109, %v61, 0.0
  %v142 = vadd.f32 %v140, %v141
  %v143 = vsel %vm109, %v62, 0.0
  %v144 = vadd.f32 %v142, %v143
  %v145 = vsel %vm109, %v63, 0.0
  %v146 = vadd.f32 %v144, %v145
  %v147 = vsel %vm109, %v64, 0.0
  %v148 = vadd.f32 %v146, %v147
  %v149 = vsel %vm109, %v65, 0.0
  %v150 = vadd.f32 %v148, %v149
  %v151 = vsel %vm109, %v66, 0.0
  %v152 = vadd.f32 %v150, %v151
  %v153 = vsel %vm109, %v67, 0.0
  %v154 = vadd.f32 %v152, %v153
  %v155 = vsel %vm109, %v68, 0.0
  %v156 = vadd.f32 %v154, %v155
  %v157 = vsel %vm109, %v69, 0.0
  %v158 = vadd.f32 %v156, %v157
  %v159 = vsel %vm109, %v70, 0.0
  %v160 = vadd.f32 %v158, %v159
  %v161 = vsel %vm109, %v71, 0.0
  %v162 = vadd.f32 %v160, %v161
  %v163 = vsel %vm109, %v72, 0.0
  %v164 = vadd.f32 %v162, %v163
  %v165 = vsel %vm109, %v73, 0.0
  %v166 = vadd.f32 %v164, %v165
  %v167 = vsel %vm109, %v74, 0.0
  %v168 = vadd.f32 %v166, %v167
  %v169 = vsel %vm109, %v75, 0.0
  %v170 = vadd.f32 %v168, %v169
  %v171 = vsel %vm109, %v76, 0.0
  %v172 = vadd.f32 %v170, %v171
  %v173 = vsel %vm109, %v77, 0.0
  %v174 = vadd.f32 %v172, %v173
  %v175 = vsel %vm109, %v78, 0.0
  %v176 = vadd.f32 %v174, %v175
  %v177 = vsel %vm109, %v79, 0.0
  %v178 = vadd.f32 %v176, %v177
  %v179 = vsel %vm109, %v80, 0.0
  %v180 = vadd.f32 %v178, %v179
  %v181 = vsel %vm109, %v81, 0.0
  %v182 = vadd.f32 %v180, %v181
  %v183 = vsel %vm109, %v82, 0.0
  %v184 = vadd.f32 %v182, %v183
  %v185 = vsel %vm109, %v83, 0.0
  %v186 = vadd.f32 %v184, %v185
  %v187 = vsel %vm109, %v84, 0.0
  %v188 = vadd.f32 %v186, %v187
  %v189 = vsel %vm109, %v85, 0.0
  %v190 = vadd.f32 %v188, %v189
  %v191 = vsel %vm109, %v86, 0.0
  %v192 = vadd.f32 %v190, %v191
  %v193 = vsel %vm109, %v87, 0.0
  %v194 = vadd.f32 %v192, %v193
  %v195 = vsel %vm109, %v88, 0.0
  %v196 = vadd.f32 %v194, %v195
  %v197 = vsel %vm109, %v89, 0.0
  %v198 = vadd.f32 %v196, %v197
  %v199 = vsel %vm109, %v90, 0.0
  %v200 = vadd.f32 %v198, %v199
  %v201 = vsel %vm109, %v91, 0.0
  %v202 = vadd.f32 %v200, %v201
  %v203 = vsel %vm109, %v92, 0.0
  %v204 = vadd.f32 %v202, %v203
  %v205 = vsel %vm109, %v93, 0.0
  %v206 = vadd.f32 %v204, %v205
  %v207 = vsel %vm109, %v94, 0.0
  %v208 = vadd.f32 %v206, %v207
  %v209 = vsel %vm109, %v95, 0.0
  %v210 = vadd.f32 %v208, %v209
  %v211 = vsel %vm109, %v96, 0.0
  %v212 = vadd.f32 %v210, %v211
  %v213 = vsel %vm109, %v97, 0.0
  %v214 = vadd.f32 %v212, %v213
  %v215 = vsel %vm109, %v98, 0.0
  %v216 = vadd.f32 %v214, %v215
  %v217 = vsel %vm109, %v99, 0.0
  %v218 = vadd.f32 %v216, %v217
  %v219 = vsel %vm109, %v100, 0.0
  %v220 = vadd.f32 %v218, %v219
  %v221 = vsel %vm109, %v101, 0.0
  %v222 = vadd.f32 %v220, %v221
  %v223 = vsel %vm109, %v102, 0.0
  %v224 = vadd.f32 %v222, %v223
  %v225 = vsel %vm109, %v103, 0.0
  %v226 = vadd.f32 %v224, %v225
  %v227 = vsel %vm109, %v104, 0.0
  %v228 = vadd.f32 %v226, %v227
  %v229 = vsel %vm109, %v105, 0.0
  %v230 = vadd.f32 %v228, %v229
  %v231 = vsel %vm109, %v106, 0.0
  %v232 = vadd.f32 %v230, %v231
  %v233 = vsel %vm109, %v107, 0.0
  %v234 = vadd.f32 %v232, %v233
  %v235 = vsel %vm109, %v108, 0.0
  %v236 = vadd.f32 %v234, %v235
  %v237 = vrot.slane %v236, 4
  %v238 = vadd.f32 %v236, %v237
  %v239 = vrot.slane %v238, 2
  %v240 = vadd.f32 %v238, %v239
  %v241 = vrot.slane %v240, 1
  %v242 = vadd.f32 %v240, %v241
  %v243 = vrcp.pop 512.0
  %v244 = vmul.f32 %v242, %v243
  %v245 = vsub.f32 %v45, %v244
  %v246 = vsub.f32 %v46, %v244
  %v247 = vsub.f32 %v47, %v244
  %v248 = vsub.f32 %v48, %v244
  %v249 = vsub.f32 %v49, %v244
  %v250 = vsub.f32 %v50, %v244
  %v251 = vsub.f32 %v51, %v244
  %v252 = vsub.f32 %v52, %v244
  %v253 = vsub.f32 %v53, %v244
  %v254 = vsub.f32 %v54, %v244
  %v255 = vsub.f32 %v55, %v244
  %v256 = vsub.f32 %v56, %v244
  %v257 = vsub.f32 %v57, %v244
  %v258 = vsub.f32 %v58, %v244
  %v259 = vsub.f32 %v59, %v244
  %v260 = vsub.f32 %v60, %v244
  %v261 = vsub.f32 %v61, %v244
  %v262 = vsub.f32 %v62, %v244
  %v263 = vsub.f32 %v63, %v244
  %v264 = vsub.f32 %v64, %v244
  %v265 = vsub.f32 %v65, %v244
  %v266 = vsub.f32 %v66, %v244
  %v267 = vsub.f32 %v67, %v244
  %v268 = vsub.f32 %v68, %v244
  %v269 = vsub.f32 %v69, %v244
  %v270 = vsub.f32 %v70, %v244
  %v271 = vsub.f32 %v71, %v244
  %v272 = vsub.f32 %v72, %v244
  %v273 = vsub.f32 %v73, %v244
  %v274 = vsub.f32 %v74, %v244
  %v275 = vsub.f32 %v75, %v244
  %v276 = vsub.f32 %v76, %v244
  %v277 = vsub.f32 %v77, %v244
  %v278 = vsub.f32 %v78, %v244
  %v279 = vsub.f32 %v79, %v244
  %v280 = vsub.f32 %v80, %v244
  %v281 = vsub.f32 %v81, %v244
  %v282 = vsub.f32 %v82, %v244
  %v283 = vsub.f32 %v83, %v244
  %v284 = vsub.f32 %v84, %v244
  %v285 = vsub.f32 %v85, %v244
  %v286 = vsub.f32 %v86, %v244
  %v287 = vsub.f32 %v87, %v244
  %v288 = vsub.f32 %v88, %v244
  %v289 = vsub.f32 %v89, %v244
  %v290 = vsub.f32 %v90, %v244
  %v291 = vsub.f32 %v91, %v244
  %v292 = vsub.f32 %v92, %v244
  %v293 = vsub.f32 %v93, %v244
  %v294 = vsub.f32 %v94, %v244
  %v295 = vsub.f32 %v95, %v244
  %v296 = vsub.f32 %v96, %v244
  %v297 = vsub.f32 %v97, %v244
  %v298 = vsub.f32 %v98, %v244
  %v299 = vsub.f32 %v99, %v244
  %v300 = vsub.f32 %v100, %v244
  %v301 = vsub.f32 %v101, %v244
  %v302 = vsub.f32 %v102, %v244
  %v303 = vsub.f32 %v103, %v244
  %v304 = vsub.f32 %v104, %v244
  %v305 = vsub.f32 %v105, %v244
  %v306 = vsub.f32 %v106, %v244
  %v307 = vsub.f32 %v107, %v244
  %v308 = vsub.f32 %v108, %v244
  %v309 = vmul.f32 %v245, %v245
  %v310 = vmul.f32 %v246, %v246
  %v311 = vmul.f32 %v247, %v247
  %v312 = vmul.f32 %v248, %v248
  %v313 = vmul.f32 %v249, %v249
  %v314 = vmul.f32 %v250, %v250
  %v315 = vmul.f32 %v251, %v251
  %v316 = vmul.f32 %v252, %v252
  %v317 = vmul.f32 %v253, %v253
  %v318 = vmul.f32 %v254, %v254
  %v319 = vmul.f32 %v255, %v255
  %v320 = vmul.f32 %v256, %v256
  %v321 = vmul.f32 %v257, %v257
  %v322 = vmul.f32 %v258, %v258
  %v323 = vmul.f32 %v259, %v259
  %v324 = vmul.f32 %v260, %v260
  %v325 = vmul.f32 %v261, %v261
  %v326 = vmul.f32 %v262, %v262
  %v327 = vmul.f32 %v263, %v263
  %v328 = vmul.f32 %v264, %v264
  %v329 = vmul.f32 %v265, %v265
  %v330 = vmul.f32 %v266, %v266
  %v331 = vmul.f32 %v267, %v267
  %v332 = vmul.f32 %v268, %v268
  %v333 = vmul.f32 %v269, %v269
  %v334 = vmul.f32 %v270, %v270
  %v335 = vmul.f32 %v271, %v271
  %v336 = vmul.f32 %v272, %v272
  %v337 = vmul.f32 %v273, %v273
  %v338 = vmul.f32 %v274, %v274
  %v339 = vmul.f32 %v275, %v275
  %v340 = vmul.f32 %v276, %v276
  %v341 = vmul.f32 %v277, %v277
  %v342 = vmul.f32 %v278, %v278
  %v343 = vmul.f32 %v279, %v279
  %v344 = vmul.f32 %v280, %v280
  %v345 = vmul.f32 %v281, %v281
  %v346 = vmul.f32 %v282, %v282
  %v347 = vmul.f32 %v283, %v283
  %v348 = vmul.f32 %v284, %v284
  %v349 = vmul.f32 %v285, %v285
  %v350 = vmul.f32 %v286, %v286
  %v351 = vmul.f32 %v287, %v287
  %v352 = vmul.f32 %v288, %v288
  %v353 = vmul.f32 %v289, %v289
  %v354 = vmul.f32 %v290, %v290
  %v355 = vmul.f32 %v291, %v291
  %v356 = vmul.f32 %v292, %v292
  %v357 = vmul.f32 %v293, %v293
  %v358 = vmul.f32 %v294, %v294
  %v359 = vmul.f32 %v295, %v295
  %v360 = vmul.f32 %v296, %v296
  %v361 = vmul.f32 %v297, %v297
  %v362 = vmul.f32 %v298, %v298
  %v363 = vmul.f32 %v299, %v299
  %v364 = vmul.f32 %v300, %v300
  %v365 = vmul.f32 %v301, %v301
  %v366 = vmul.f32 %v302, %v302
  %v367 = vmul.f32 %v303, %v303
  %v368 = vmul.f32 %v304, %v304
  %v369 = vmul.f32 %v305, %v305
  %v370 = vmul.f32 %v306, %v306
  %v371 = vmul.f32 %v307, %v307
  %v372 = vmul.f32 %v308, %v308
  %v373 = vsel %vm109, %v309, 0.0
  %v374 = vsel %vm109, %v310, 0.0
  %v375 = vadd.f32 %v373, %v374
  %v376 = vsel %vm109, %v311, 0.0
  %v377 = vadd.f32 %v375, %v376
  %v378 = vsel %vm109, %v312, 0.0
  %v379 = vadd.f32 %v377, %v378
  %v380 = vsel %vm109, %v313, 0.0
  %v381 = vadd.f32 %v379, %v380
  %v382 = vsel %vm109, %v314, 0.0
  %v383 = vadd.f32 %v381, %v382
  %v384 = vsel %vm109, %v315, 0.0
  %v385 = vadd.f32 %v383, %v384
  %v386 = vsel %vm109, %v316, 0.0
  %v387 = vadd.f32 %v385, %v386
  %v388 = vsel %vm109, %v317, 0.0
  %v389 = vadd.f32 %v387, %v388
  %v390 = vsel %vm109, %v318, 0.0
  %v391 = vadd.f32 %v389, %v390
  %v392 = vsel %vm109, %v319, 0.0
  %v393 = vadd.f32 %v391, %v392
  %v394 = vsel %vm109, %v320, 0.0
  %v395 = vadd.f32 %v393, %v394
  %v396 = vsel %vm109, %v321, 0.0
  %v397 = vadd.f32 %v395, %v396
  %v398 = vsel %vm109, %v322, 0.0
  %v399 = vadd.f32 %v397, %v398
  %v400 = vsel %vm109, %v323, 0.0
  %v401 = vadd.f32 %v399, %v400
  %v402 = vsel %vm109, %v324, 0.0
  %v403 = vadd.f32 %v401, %v402
  %v404 = vsel %vm109, %v325, 0.0
  %v405 = vadd.f32 %v403, %v404
  %v406 = vsel %vm109, %v326, 0.0
  %v407 = vadd.f32 %v405, %v406
  %v408 = vsel %vm109, %v327, 0.0
  %v409 = vadd.f32 %v407, %v408
  %v410 = vsel %vm109, %v328, 0.0
  %v411 = vadd.f32 %v409, %v410
  %v412 = vsel %vm109, %v329, 0.0
  %v413 = vadd.f32 %v411, %v412
  %v414 = vsel %vm109, %v330, 0.0
  %v415 = vadd.f32 %v413, %v414
  %v416 = vsel %vm109, %v331, 0.0
  %v417 = vadd.f32 %v415, %v416
  %v418 = vsel %vm109, %v332, 0.0
  %v419 = vadd.f32 %v417, %v418
  %v420 = vsel %vm109, %v333, 0.0
  %v421 = vadd.f32 %v419, %v420
  %v422 = vsel %vm109, %v334, 0.0
  %v423 = vadd.f32 %v421, %v422
  %v424 = vsel %vm109, %v335, 0.0
  %v425 = vadd.f32 %v423, %v424
  %v426 = vsel %vm109, %v336, 0.0
  %v427 = vadd.f32 %v425, %v426
  %v428 = vsel %vm109, %v337, 0.0
  %v429 = vadd.f32 %v427, %v428
  %v430 = vsel %vm109, %v338, 0.0
  %v431 = vadd.f32 %v429, %v430
  %v432 = vsel %vm109, %v339, 0.0
  %v433 = vadd.f32 %v431, %v432
  %v434 = vsel %vm109, %v340, 0.0
  %v435 = vadd.f32 %v433, %v434
  %v436 = vsel %vm109, %v341, 0.0
  %v437 = vadd.f32 %v435, %v436
  %v438 = vsel %vm109, %v342, 0.0
  %v439 = vadd.f32 %v437, %v438
  %v440 = vsel %vm109, %v343, 0.0
  %v441 = vadd.f32 %v439, %v440
  %v442 = vsel %vm109, %v344, 0.0
  %v443 = vadd.f32 %v441, %v442
  %v444 = vsel %vm109, %v345, 0.0
  %v445 = vadd.f32 %v443, %v444
  %v446 = vsel %vm109, %v346, 0.0
  %v447 = vadd.f32 %v445, %v446
  %v448 = vsel %vm109, %v347, 0.0
  %v449 = vadd.f32 %v447, %v448
  %v450 = vsel %vm109, %v348, 0.0
  %v451 = vadd.f32 %v449, %v450
  %v452 = vsel %vm109, %v349, 0.0
  %v453 = vadd.f32 %v451, %v452
  %v454 = vsel %vm109, %v350, 0.0
  %v455 = vadd.f32 %v453, %v454
  %v456 = vsel %vm109, %v351, 0.0
  %v457 = vadd.f32 %v455, %v456
  %v458 = vsel %vm109, %v352, 0.0
  %v459 = vadd.f32 %v457, %v458
  %v460 = vsel %vm109, %v353, 0.0
  %v461 = vadd.f32 %v459, %v460
  %v462 = vsel %vm109, %v354, 0.0
  %v463 = vadd.f32 %v461, %v462
  %v464 = vsel %vm109, %v355, 0.0
  %v465 = vadd.f32 %v463, %v464
  %v466 = vsel %vm109, %v356, 0.0
  %v467 = vadd.f32 %v465, %v466
  %v468 = vsel %vm109, %v357, 0.0
  %v469 = vadd.f32 %v467, %v468
  %v470 = vsel %vm109, %v358, 0.0
  %v471 = vadd.f32 %v469, %v470
  %v472 = vsel %vm109, %v359, 0.0
  %v473 = vadd.f32 %v471, %v472
  %v474 = vsel %vm109, %v360, 0.0
  %v475 = vadd.f32 %v473, %v474
  %v476 = vsel %vm109, %v361, 0.0
  %v477 = vadd.f32 %v475, %v476
  %v478 = vsel %vm109, %v362, 0.0
  %v479 = vadd.f32 %v477, %v478
  %v480 = vsel %vm109, %v363, 0.0
  %v481 = vadd.f32 %v479, %v480
  %v482 = vsel %vm109, %v364, 0.0
  %v483 = vadd.f32 %v481, %v482
  %v484 = vsel %vm109, %v365, 0.0
  %v485 = vadd.f32 %v483, %v484
  %v486 = vsel %vm109, %v366, 0.0
  %v487 = vadd.f32 %v485, %v486
  %v488 = vsel %vm109, %v367, 0.0
  %v489 = vadd.f32 %v487, %v488
  %v490 = vsel %vm109, %v368, 0.0
  %v491 = vadd.f32 %v489, %v490
  %v492 = vsel %vm109, %v369, 0.0
  %v493 = vadd.f32 %v491, %v492
  %v494 = vsel %vm109, %v370, 0.0
  %v495 = vadd.f32 %v493, %v494
  %v496 = vsel %vm109, %v371, 0.0
  %v497 = vadd.f32 %v495, %v496
  %v498 = vsel %vm109, %v372, 0.0
  %v499 = vadd.f32 %v497, %v498
  %v500 = vrot.slane %v499, 4
  %v501 = vadd.f32 %v499, %v500
  %v502 = vrot.slane %v501, 2
  %v503 = vadd.f32 %v501, %v502
  %v504 = vrot.slane %v503, 1
  %v505 = vadd.f32 %v503, %v504
  %v506 = vmul.f32 %v505, %v243
  %v507 = vld [vmem:[%s1] sm:$0x1]
  %v508 = vadd.f32 %v506, 1e-05
  %v509 = vrsqrt.pop %v508
  %v510 = vmul.f32 %v507, %v509
  %v511 = vld [vmem:[%s2] sm:$0x1]
  %v512 = vmul.f32 %v244, %v510
  %v513 = vsub.f32 %v511, %v512
  %v515 = vlaneseq
  %v516 = vshrl.u32 %v515, 7
  %v517 = vsub.s32 0, %v516
  %v518 = vrot.slane %v510, %v517
  %v520 = vmul.f32 %v45, %v518
  %v521 = vmul.f32 %v46, %v518
  %v522 = vmul.f32 %v47, %v518
  %v523 = vmul.f32 %v48, %v518
  %v524 = vmul.f32 %v49, %v518
  %v525 = vmul.f32 %v50, %v518
  %v526 = vmul.f32 %v51, %v518
  %v527 = vmul.f32 %v52, %v518
  %v528 = vmul.f32 %v53, %v518
  %v529 = vmul.f32 %v54, %v518
  %v530 = vmul.f32 %v55, %v518
  %v531 = vmul.f32 %v56, %v518
  %v532 = vmul.f32 %v57, %v518
  %v533 = vmul.f32 %v58, %v518
  %v534 = vmul.f32 %v59, %v518
  %v535 = vmul.f32 %v60, %v518
  %v536 = vmul.f32 %v61, %v518
  %v537 = vmul.f32 %v62, %v518
  %v538 = vmul.f32 %v63, %v518
  %v539 = vmul.f32 %v64, %v518
  %v540 = vmul.f32 %v65, %v518
  %v541 = vmul.f32 %v66, %v518
  %v542 = vmul.f32 %v67, %v518
  %v543 = vmul.f32 %v68, %v518
  %v544 = vmul.f32 %v69, %v518
  %v545 = vmul.f32 %v70, %v518
  %v546 = vmul.f32 %v71, %v518
  %v547 = vmul.f32 %v72, %v518
  %v548 = vmul.f32 %v73, %v518
  %v549 = vmul.f32 %v74, %v518
  %v550 = vmul.f32 %v75, %v518
  %v551 = vmul.f32 %v76, %v518
  %v552 = vmul.f32 %v77, %v518
  %v553 = vmul.f32 %v78, %v518
  %v554 = vmul.f32 %v79, %v518
  %v555 = vmul.f32 %v80, %v518
  %v556 = vmul.f32 %v81, %v518
  %v557 = vmul.f32 %v82, %v518
  %v558 = vmul.f32 %v83, %v518
  %v559 = vmul.f32 %v84, %v518
  %v560 = vmul.f32 %v85, %v518
  %v561 = vmul.f32 %v86, %v518
  %v562 = vmul.f32 %v87, %v518
  %v563 = vmul.f32 %v88, %v518
  %v564 = vmul.f32 %v89, %v518
  %v565 = vmul.f32 %v90, %v518
  %v566 = vmul.f32 %v91, %v518
  %v567 = vmul.f32 %v92, %v518
  %v568 = vmul.f32 %v93, %v518
  %v569 = vmul.f32 %v94, %v518
  %v570 = vmul.f32 %v95, %v518
  %v571 = vmul.f32 %v96, %v518
  %v572 = vmul.f32 %v97, %v518
  %v573 = vmul.f32 %v98, %v518
  %v574 = vmul.f32 %v99, %v518
  %v575 = vmul.f32 %v100, %v518
  %v576 = vmul.f32 %v101, %v518
  %v577 = vmul.f32 %v102, %v518
  %v578 = vmul.f32 %v103, %v518
  %v579 = vmul.f32 %v104, %v518
  %v580 = vmul.f32 %v105, %v518
  %v581 = vmul.f32 %v106, %v518
  %v582 = vmul.f32 %v107, %v518
  %v583 = vmul.f32 %v108, %v518
  %v585 = vlaneseq
  %v586 = vshrl.u32 %v585, 7
  %v587 = vsub.s32 0, %v586
  %v588 = vrot.slane %v513, %v587
  %v590 = vadd.f32 %v520, %v588
  %v591 = vadd.f32 %v521, %v588
  %v592 = vadd.f32 %v522, %v588
  %v593 = vadd.f32 %v523, %v588
  %v594 = vadd.f32 %v524, %v588
  %v595 = vadd.f32 %v525, %v588
  %v596 = vadd.f32 %v526, %v588
  %v597 = vadd.f32 %v527, %v588
  %v598 = vadd.f32 %v528, %v588
  %v599 = vadd.f32 %v529, %v588
  %v600 = vadd.f32 %v530, %v588
  %v601 = vadd.f32 %v531, %v588
  %v602 = vadd.f32 %v532, %v588
  %v603 = vadd.f32 %v533, %v588
  %v604 = vadd.f32 %v534, %v588
  %v605 = vadd.f32 %v535, %v588
  %v606 = vadd.f32 %v536, %v588
  %v607 = vadd.f32 %v537, %v588
  %v608 = vadd.f32 %v538, %v588
  %v609 = vadd.f32 %v539, %v588
  %v610 = vadd.f32 %v540, %v588
  %v611 = vadd.f32 %v541, %v588
  %v612 = vadd.f32 %v542, %v588
  %v613 = vadd.f32 %v543, %v588
  %v614 = vadd.f32 %v544, %v588
  %v615 = vadd.f32 %v545, %v588
  %v616 = vadd.f32 %v546, %v588
  %v617 = vadd.f32 %v547, %v588
  %v618 = vadd.f32 %v548, %v588
  %v619 = vadd.f32 %v549, %v588
  %v620 = vadd.f32 %v550, %v588
  %v621 = vadd.f32 %v551, %v588
  %v622 = vadd.f32 %v552, %v588
  %v623 = vadd.f32 %v553, %v588
  %v624 = vadd.f32 %v554, %v588
  %v625 = vadd.f32 %v555, %v588
  %v626 = vadd.f32 %v556, %v588
  %v627 = vadd.f32 %v557, %v588
  %v628 = vadd.f32 %v558, %v588
  %v629 = vadd.f32 %v559, %v588
  %v630 = vadd.f32 %v560, %v588
  %v631 = vadd.f32 %v561, %v588
  %v632 = vadd.f32 %v562, %v588
  %v633 = vadd.f32 %v563, %v588
  %v634 = vadd.f32 %v564, %v588
  %v635 = vadd.f32 %v565, %v588
  %v636 = vadd.f32 %v566, %v588
  %v637 = vadd.f32 %v567, %v588
  %v638 = vadd.f32 %v568, %v588
  %v639 = vadd.f32 %v569, %v588
  %v640 = vadd.f32 %v570, %v588
  %v641 = vadd.f32 %v571, %v588
  %v642 = vadd.f32 %v572, %v588
  %v643 = vadd.f32 %v573, %v588
  %v644 = vadd.f32 %v574, %v588
  %v645 = vadd.f32 %v575, %v588
  %v646 = vadd.f32 %v576, %v588
  %v647 = vadd.f32 %v577, %v588
  %v648 = vadd.f32 %v578, %v588
  %v649 = vadd.f32 %v579, %v588
  %v650 = vadd.f32 %v580, %v588
  %v651 = vadd.f32 %v581, %v588
  %v652 = vadd.f32 %v582, %v588
  %v653 = vadd.f32 %v583, %v588
  %v654 = vmax.f32 %v590, 0.0
  %v655 = vmax.f32 %v591, 0.0
  %v656 = vmax.f32 %v592, 0.0
  %v657 = vmax.f32 %v593, 0.0
  %v658 = vmax.f32 %v594, 0.0
  %v659 = vmax.f32 %v595, 0.0
  %v660 = vmax.f32 %v596, 0.0
  %v661 = vmax.f32 %v597, 0.0
  %v662 = vmax.f32 %v598, 0.0
  %v663 = vmax.f32 %v599, 0.0
  %v664 = vmax.f32 %v600, 0.0
  %v665 = vmax.f32 %v601, 0.0
  %v666 = vmax.f32 %v602, 0.0
  %v667 = vmax.f32 %v603, 0.0
  %v668 = vmax.f32 %v604, 0.0
  %v669 = vmax.f32 %v605, 0.0
  %v670 = vmax.f32 %v606, 0.0
  %v671 = vmax.f32 %v607, 0.0
  %v672 = vmax.f32 %v608, 0.0
  %v673 = vmax.f32 %v609, 0.0
  %v674 = vmax.f32 %v610, 0.0
  %v675 = vmax.f32 %v611, 0.0
  %v676 = vmax.f32 %v612, 0.0
  %v677 = vmax.f32 %v613, 0.0
  %v678 = vmax.f32 %v614, 0.0
  %v679 = vmax.f32 %v615, 0.0
  %v680 = vmax.f32 %v616, 0.0
  %v681 = vmax.f32 %v617, 0.0
  %v682 = vmax.f32 %v618, 0.0
  %v683 = vmax.f32 %v619, 0.0
  %v684 = vmax.f32 %v620, 0.0
  %v685 = vmax.f32 %v621, 0.0
  %v686 = vmax.f32 %v622, 0.0
  %v687 = vmax.f32 %v623, 0.0
  %v688 = vmax.f32 %v624, 0.0
  %v689 = vmax.f32 %v625, 0.0
  %v690 = vmax.f32 %v626, 0.0
  %v691 = vmax.f32 %v627, 0.0
  %v692 = vmax.f32 %v628, 0.0
  %v693 = vmax.f32 %v629, 0.0
  %v694 = vmax.f32 %v630, 0.0
  %v695 = vmax.f32 %v631, 0.0
  %v696 = vmax.f32 %v632, 0.0
  %v697 = vmax.f32 %v633, 0.0
  %v698 = vmax.f32 %v634, 0.0
  %v699 = vmax.f32 %v635, 0.0
  %v700 = vmax.f32 %v636, 0.0
  %v701 = vmax.f32 %v637, 0.0
  %v702 = vmax.f32 %v638, 0.0
  %v703 = vmax.f32 %v639, 0.0
  %v704 = vmax.f32 %v640, 0.0
  %v705 = vmax.f32 %v641, 0.0
  %v706 = vmax.f32 %v642, 0.0
  %v707 = vmax.f32 %v643, 0.0
  %v708 = vmax.f32 %v644, 0.0
  %v709 = vmax.f32 %v645, 0.0
  %v710 = vmax.f32 %v646, 0.0
  %v711 = vmax.f32 %v647, 0.0
  %v712 = vmax.f32 %v648, 0.0
  %v713 = vmax.f32 %v649, 0.0
  %v714 = vmax.f32 %v650, 0.0
  %v715 = vmax.f32 %v651, 0.0
  %v716 = vmax.f32 %v652, 0.0
  %v717 = vmax.f32 %v653, 0.0
  %718 = vst.msk [vmem:[#allocation2] sm:$0xff] %vm109, 0.0
  %719 = vst.msk [vmem:[#allocation2 + $0x8] sm:$0xff] %vm109, 0.0
  %vm720 = vcmask 25600
  %721 = vst.msk [vmem:[#allocation2 + $0x10] sm:$0x3] %vm720, 0.0
  %722 = vst.msk [vmem:[#allocation2 + $0x1b0] sm:$0xff] %vm109, 0.0
  %723 = vst.msk [vmem:[#allocation2 + $0x1b8] sm:$0xff] %vm109, 0.0
  %724 = vst.msk [vmem:[#allocation2 + $0x1c0] sm:$0x3] %vm720, 0.0
  %s725 = scalar_lea.vmem [#allocation2], 408
  %726 = vst.msk [vmem:[%s725] sm:$0xff] %vm109, 0.0
  %727 = vst.msk [vmem:[%s725 + $0x8] sm:$0xff] %vm109, 0.0
  %728 = vst.msk [vmem:[%s725 + $0x10] sm:$0x3] %vm720, 0.0
  %729 = vst.msk [vmem:[%s725 + $0x1b0] sm:$0xff] %vm109, 0.0
  %730 = vst.msk [vmem:[%s725 + $0x1b8] sm:$0xff] %vm109, 0.0
  %731 = vst.msk [vmem:[%s725 + $0x1c0] sm:$0x3] %vm720, 0.0
  %vm732 = vcmask 24576
  %733 = vst.msk [vmem:[#allocation2] sm:$0x1] %vm732, 0.0
  %734 = vst.msk [vmem:[#allocation2 + $0x18] sm:$0x1] %vm732, 0.0
  %735 = vst.msk [vmem:[#allocation2 + $0x30] sm:$0x1] %vm732, 0.0
  %736 = vst.msk [vmem:[#allocation2 + $0x48] sm:$0x1] %vm732, 0.0
  %737 = vst.msk [vmem:[#allocation2 + $0x60] sm:$0x1] %vm732, 0.0
  %738 = vst.msk [vmem:[#allocation2 + $0x78] sm:$0x1] %vm732, 0.0
  %739 = vst.msk [vmem:[#allocation2 + $0x90] sm:$0x1] %vm732, 0.0
  %740 = vst.msk [vmem:[#allocation2 + $0xa8] sm:$0x1] %vm732, 0.0
  %741 = vst.msk [vmem:[#allocation2 + $0xc0] sm:$0x1] %vm732, 0.0
  %742 = vst.msk [vmem:[#allocation2 + $0xd8] sm:$0x1] %vm732, 0.0
  %743 = vst.msk [vmem:[#allocation2 + $0xf0] sm:$0x1] %vm732, 0.0
  %744 = vst.msk [vmem:[#allocation2 + $0x108] sm:$0x1] %vm732, 0.0
  %745 = vst.msk [vmem:[#allocation2 + $0x120] sm:$0x1] %vm732, 0.0
  %746 = vst.msk [vmem:[#allocation2 + $0x138] sm:$0x1] %vm732, 0.0
  %747 = vst.msk [vmem:[#allocation2 + $0x150] sm:$0x1] %vm732, 0.0
  %748 = vst.msk [vmem:[#allocation2 + $0x168] sm:$0x1] %vm732, 0.0
  %749 = vst.msk [vmem:[#allocation2 + $0x180] sm:$0x1] %vm732, 0.0
  %750 = vst.msk [vmem:[#allocation2 + $0x198] sm:$0x1] %vm732, 0.0
  %751 = vst.msk [vmem:[#allocation2 + $0x1b0] sm:$0x1] %vm732, 0.0
  %752 = vst.msk [vmem:[#allocation2 + $0x1c8] sm:$0x1] %vm732, 0.0
  %753 = vst.msk [vmem:[#allocation2 + $0x1e0] sm:$0x1] %vm732, 0.0
  %754 = vst.msk [vmem:[#allocation2 + $0x1f8] sm:$0x1] %vm732, 0.0
  %755 = vst.msk [vmem:[#allocation2 + $0x210] sm:$0x1] %vm732, 0.0
  %756 = vst.msk [vmem:[#allocation2 + $0x228] sm:$0x1] %vm732, 0.0
  %757 = vst.msk [vmem:[#allocation2 + $0x240] sm:$0x1] %vm732, 0.0
  %758 = vst.msk [vmem:[#allocation2 + $0x258] sm:$0x1] %vm732, 0.0
  %759 = vst.msk [vmem:[#allocation2 + $0x270] sm:$0x1] %vm732, 0.0
  %760 = vst.msk [vmem:[#allocation2 + $0x288] sm:$0x1] %vm732, 0.0
  %761 = vst.msk [vmem:[#allocation2 + $0x2a0] sm:$0x1] %vm732, 0.0
  %762 = vst.msk [vmem:[#allocation2 + $0x2b8] sm:$0x1] %vm732, 0.0
  %763 = vst.msk [vmem:[#allocation2 + $0x2d0] sm:$0x1] %vm732, 0.0
  %764 = vst.msk [vmem:[#allocation2 + $0x2e8] sm:$0x1] %vm732, 0.0
  %765 = vst.msk [vmem:[#allocation2 + $0x300] sm:$0x1] %vm732, 0.0
  %766 = vst.msk [vmem:[#allocation2 + $0x318] sm:$0x1] %vm732, 0.0
  %767 = vst.msk [vmem:[#allocation2 + $0x330] sm:$0x1] %vm732, 0.0
  %768 = vst.msk [vmem:[#allocation2 + $0x348] sm:$0x1] %vm732, 0.0
  %769 = vst.msk [vmem:[#allocation2 + $0x11] sm:$0x1] %vm732, 0.0
  %770 = vst.msk [vmem:[#allocation2 + $0x29] sm:$0x1] %vm732, 0.0
  %771 = vst.msk [vmem:[#allocation2 + $0x41] sm:$0x1] %vm732, 0.0
  %772 = vst.msk [vmem:[#allocation2 + $0x59] sm:$0x1] %vm732, 0.0
  %773 = vst.msk [vmem:[#allocation2 + $0x71] sm:$0x1] %vm732, 0.0
  %774 = vst.msk [vmem:[#allocation2 + $0x89] sm:$0x1] %vm732, 0.0
  %775 = vst.msk [vmem:[#allocation2 + $0xa1] sm:$0x1] %vm732, 0.0
  %776 = vst.msk [vmem:[#allocation2 + $0xb9] sm:$0x1] %vm732, 0.0
  %777 = vst.msk [vmem:[#allocation2 + $0xd1] sm:$0x1] %vm732, 0.0
  %778 = vst.msk [vmem:[#allocation2 + $0xe9] sm:$0x1] %vm732, 0.0
  %779 = vst.msk [vmem:[#allocation2 + $0x101] sm:$0x1] %vm732, 0.0
  %780 = vst.msk [vmem:[#allocation2 + $0x119] sm:$0x1] %vm732, 0.0
  %781 = vst.msk [vmem:[#allocation2 + $0x131] sm:$0x1] %vm732, 0.0
  %782 = vst.msk [vmem:[#allocation2 + $0x149] sm:$0x1] %vm732, 0.0
  %783 = vst.msk [vmem:[#allocation2 + $0x161] sm:$0x1] %vm732, 0.0
  %784 = vst.msk [vmem:[#allocation2 + $0x179] sm:$0x1] %vm732, 0.0
  %785 = vst.msk [vmem:[#allocation2 + $0x191] sm:$0x1] %vm732, 0.0
  %786 = vst.msk [vmem:[#allocation2 + $0x1a9] sm:$0x1] %vm732, 0.0
  %787 = vst.msk [vmem:[#allocation2 + $0x1c1] sm:$0x1] %vm732, 0.0
  %788 = vst.msk [vmem:[#allocation2 + $0x1d9] sm:$0x1] %vm732, 0.0
  %789 = vst.msk [vmem:[#allocation2 + $0x1f1] sm:$0x1] %vm732, 0.0
  %790 = vst.msk [vmem:[#allocation2 + $0x209] sm:$0x1] %vm732, 0.0
  %791 = vst.msk [vmem:[#allocation2 + $0x221] sm:$0x1] %vm732, 0.0
  %792 = vst.msk [vmem:[#allocation2 + $0x239] sm:$0x1] %vm732, 0.0
  %793 = vst.msk [vmem:[#allocation2 + $0x251] sm:$0x1] %vm732, 0.0
  %794 = vst.msk [vmem:[#allocation2 + $0x269] sm:$0x1] %vm732, 0.0
  %795 = vst.msk [vmem:[#allocation2 + $0x281] sm:$0x1] %vm732, 0.0
  %796 = vst.msk [vmem:[#allocation2 + $0x299] sm:$0x1] %vm732, 0.0
  %797 = vst.msk [vmem:[#allocation2 + $0x2b1] sm:$0x1] %vm732, 0.0
  %798 = vst.msk [vmem:[#allocation2 + $0x2c9] sm:$0x1] %vm732, 0.0
  %799 = vst.msk [vmem:[#allocation2 + $0x2e1] sm:$0x1] %vm732, 0.0
  %800 = vst.msk [vmem:[#allocation2 + $0x2f9] sm:$0x1] %vm732, 0.0
  %801 = vst.msk [vmem:[#allocation2 + $0x311] sm:$0x1] %vm732, 0.0
  %802 = vst.msk [vmem:[#allocation2 + $0x329] sm:$0x1] %vm732, 0.0
  %803 = vst.msk [vmem:[#allocation2 + $0x341] sm:$0x1] %vm732, 0.0
  %804 = vst.msk [vmem:[#allocation2 + $0x359] sm:$0x1] %vm732, 0.0
  %s805 = scalar_lea.vmem [#allocation2], 24
  %806 = vst.msk [vmem:[%s805 + $0x1] sm:$0xff] %vm109, %v654
  %807 = vst.msk [vmem:[%s805 + $0x9] sm:$0xff] %vm109, %v655
  %808 = vst.msk [vmem:[%s805 + $0x19] sm:$0xff] %vm109, %v656
  %809 = vst.msk [vmem:[%s805 + $0x21] sm:$0xff] %vm109, %v657
  %810 = vst.msk [vmem:[%s805 + $0x31] sm:$0xff] %vm109, %v658
  %811 = vst.msk [vmem:[%s805 + $0x39] sm:$0xff] %vm109, %v659
  %812 = vst.msk [vmem:[%s805 + $0x49] sm:$0xff] %vm109, %v660
  %813 = vst.msk [vmem:[%s805 + $0x51] sm:$0xff] %vm109, %v661
  %814 = vst.msk [vmem:[%s805 + $0x61] sm:$0xff] %vm109, %v662
  %815 = vst.msk [vmem:[%s805 + $0x69] sm:$0xff] %vm109, %v663
  %816 = vst.msk [vmem:[%s805 + $0x79] sm:$0xff] %vm109, %v664
  %817 = vst.msk [vmem:[%s805 + $0x81] sm:$0xff] %vm109, %v665
  %818 = vst.msk [vmem:[%s805 + $0x91] sm:$0xff] %vm109, %v666
  %819 = vst.msk [vmem:[%s805 + $0x99] sm:$0xff] %vm109, %v667
  %820 = vst.msk [vmem:[%s805 + $0xa9] sm:$0xff] %vm109, %v668
  %821 = vst.msk [vmem:[%s805 + $0xb1] sm:$0xff] %vm109, %v669
  %822 = vst.msk [vmem:[%s805 + $0xc1] sm:$0xff] %vm109, %v670
  %823 = vst.msk [vmem:[%s805 + $0xc9] sm:$0xff] %vm109, %v671
  %824 = vst.msk [vmem:[%s805 + $0xd9] sm:$0xff] %vm109, %v672
  %825 = vst.msk [vmem:[%s805 + $0xe1] sm:$0xff] %vm109, %v673
  %826 = vst.msk [vmem:[%s805 + $0xf1] sm:$0xff] %vm109, %v674
  %827 = vst.msk [vmem:[%s805 + $0xf9] sm:$0xff] %vm109, %v675
  %828 = vst.msk [vmem:[%s805 + $0x109] sm:$0xff] %vm109, %v676
  %829 = vst.msk [vmem:[%s805 + $0x111] sm:$0xff] %vm109, %v677
  %830 = vst.msk [vmem:[%s805 + $0x121] sm:$0xff] %vm109, %v678
  %831 = vst.msk [vmem:[%s805 + $0x129] sm:$0xff] %vm109, %v679
  %832 = vst.msk [vmem:[%s805 + $0x139] sm:$0xff] %vm109, %v680
  %833 = vst.msk [vmem:[%s805 + $0x141] sm:$0xff] %vm109, %v681
  %834 = vst.msk [vmem:[%s805 + $0x151] sm:$0xff] %vm109, %v682
  %835 = vst.msk [vmem:[%s805 + $0x159] sm:$0xff] %vm109, %v683
  %836 = vst.msk [vmem:[%s805 + $0x169] sm:$0xff] %vm109, %v684
  %837 = vst.msk [vmem:[%s805 + $0x171] sm:$0xff] %vm109, %v685
  %838 = vst.msk [vmem:[%s805 + $0x1b1] sm:$0xff] %vm109, %v686
  %839 = vst.msk [vmem:[%s805 + $0x1b9] sm:$0xff] %vm109, %v687
  %840 = vst.msk [vmem:[%s805 + $0x1c9] sm:$0xff] %vm109, %v688
  %841 = vst.msk [vmem:[%s805 + $0x1d1] sm:$0xff] %vm109, %v689
  %842 = vst.msk [vmem:[%s805 + $0x1e1] sm:$0xff] %vm109, %v690
  %843 = vst.msk [vmem:[%s805 + $0x1e9] sm:$0xff] %vm109, %v691
  %844 = vst.msk [vmem:[%s805 + $0x1f9] sm:$0xff] %vm109, %v692
  %845 = vst.msk [vmem:[%s805 + $0x201] sm:$0xff] %vm109, %v693
  %846 = vst.msk [vmem:[%s805 + $0x211] sm:$0xff] %vm109, %v694
  %847 = vst.msk [vmem:[%s805 + $0x219] sm:$0xff] %vm109, %v695
  %848 = vst.msk [vmem:[%s805 + $0x229] sm:$0xff] %vm109, %v696
  %849 = vst.msk [vmem:[%s805 + $0x231] sm:$0xff] %vm109, %v697
  %850 = vst.msk [vmem:[%s805 + $0x241] sm:$0xff] %vm109, %v698
  %851 = vst.msk [vmem:[%s805 + $0x249] sm:$0xff] %vm109, %v699
  %852 = vst.msk [vmem:[%s805 + $0x259] sm:$0xff] %vm109, %v700
  %853 = vst.msk [vmem:[%s805 + $0x261] sm:$0xff] %vm109, %v701
  %854 = vst.msk [vmem:[%s805 + $0x271] sm:$0xff] %vm109, %v702
  %855 = vst.msk [vmem:[%s805 + $0x279] sm:$0xff] %vm109, %v703
  %856 = vst.msk [vmem:[%s805 + $0x289] sm:$0xff] %vm109, %v704
  %857 = vst.msk [vmem:[%s805 + $0x291] sm:$0xff] %vm109, %v705
  %858 = vst.msk [vmem:[%s805 + $0x2a1] sm:$0xff] %vm109, %v706
  %859 = vst.msk [vmem:[%s805 + $0x2a9] sm:$0xff] %vm109, %v707
  %860 = vst.msk [vmem:[%s805 + $0x2b9] sm:$0xff] %vm109, %v708
  %861 = vst.msk [vmem:[%s805 + $0x2c1] sm:$0xff] %vm109, %v709
  %862 = vst.msk [vmem:[%s805 + $0x2d1] sm:$0xff] %vm109, %v710
  %863 = vst.msk [vmem:[%s805 + $0x2d9] sm:$0xff] %vm109, %v711
  %864 = vst.msk [vmem:[%s805 + $0x2e9] sm:$0xff] %vm109, %v712
  %865 = vst.msk [vmem:[%s805 + $0x2f1] sm:$0xff] %vm109, %v713
  %866 = vst.msk [vmem:[%s805 + $0x301] sm:$0xff] %vm109, %v714
  %867 = vst.msk [vmem:[%s805 + $0x309] sm:$0xff] %vm109, %v715
  %868 = vst.msk [vmem:[%s805 + $0x319] sm:$0xff] %vm109, %v716
  %869 = vst.msk [vmem:[%s805 + $0x321] sm:$0xff] %vm109, %v717
  %v870 = vld [vmem:[#allocation2] ss:$2 sm:$0xff]
  %s871 = scalar_lea.vmem [#allocation2], 48
  %v872 = vld [vmem:[%s871] ss:$2 sm:$0xff]
  %s873 = scalar_lea.vmem [#allocation2], 96
  %v874 = vld [vmem:[%s873] ss:$2 sm:$0xff]
  %s875 = scalar_lea.vmem [#allocation2], 144
  %v876 = vld [vmem:[%s875] ss:$2 sm:$0xff]
  %s877 = scalar_lea.vmem [#allocation2], 192
  %v878 = vld [vmem:[%s877] ss:$2 sm:$0xff]
  %s879 = scalar_lea.vmem [#allocation2], 240
  %v880 = vld [vmem:[%s879] ss:$2 sm:$0xff]
  %s881 = scalar_lea.vmem [#allocation2], 288
  %v882 = vld [vmem:[%s881] ss:$2 sm:$0xff]
  %s883 = scalar_lea.vmem [#allocation2], 336
  %v884 = vld [vmem:[%s883] ss:$2 sm:$0xff]
  %s885 = scalar_lea.vmem [#allocation2], 432
  %v886 = vld [vmem:[%s885] ss:$2 sm:$0xff]
  %s887 = scalar_lea.vmem [#allocation2], 480
  %v888 = vld [vmem:[%s887] ss:$2 sm:$0xff]
  %s889 = scalar_lea.vmem [#allocation2], 528
  %v890 = vld [vmem:[%s889] ss:$2 sm:$0xff]
  %s891 = scalar_lea.vmem [#allocation2], 576
  %v892 = vld [vmem:[%s891] ss:$2 sm:$0xff]
  %s893 = scalar_lea.vmem [#allocation2], 624
  %v894 = vld [vmem:[%s893] ss:$2 sm:$0xff]
  %s895 = scalar_lea.vmem [#allocation2], 672
  %v896 = vld [vmem:[%s895] ss:$2 sm:$0xff]
  %s897 = scalar_lea.vmem [#allocation2], 720
  %v898 = vld [vmem:[%s897] ss:$2 sm:$0xff]
  %s899 = scalar_lea.vmem [#allocation2], 768
  %v900 = vld [vmem:[%s899] ss:$2 sm:$0xff]
  %901 = vxpose.xlu0.b32.start [1/16] %v870, 128
  %902 = vxpose.xlu0.b32.cont [2/16] %v872, 128
  %903 = vxpose.xlu0.b32.cont [3/16] %v874, 128
  %904 = vxpose.xlu0.b32.cont [4/16] %v876, 128
  %905 = vxpose.xlu0.b32.cont [5/16] %v878, 128
  %906 = vxpose.xlu0.b32.cont [6/16] %v880, 128
  %907 = vxpose.xlu0.b32.cont [7/16] %v882, 128
  %908 = vxpose.xlu0.b32.cont [8/16] %v884, 128
  %909 = vxpose.xlu0.b32.cont [9/16] %v886, 128
  %910 = vxpose.xlu0.b32.cont [10/16] %v888, 128
  %911 = vxpose.xlu0.b32.cont [11/16] %v890, 128
  %912 = vxpose.xlu0.b32.cont [12/16] %v892, 128
  %913 = vxpose.xlu0.b32.cont [13/16] %v894, 128
  %914 = vxpose.xlu0.b32.cont [14/16] %v896, 128
  %915 = vxpose.xlu0.b32.cont [15/16] %v898, 128
  %916 = vxpose.xlu0.b32.end [16/16] %v900, 128
  %v917 = vpop.trf.xlu0
  %v918 = vpop.trf.xlu0
  %v919 = vpop.trf.xlu0
  %v920 = vpop.trf.xlu0
  %v921 = vpop.trf.xlu0
  %v922 = vpop.trf.xlu0
  %v923 = vpop.trf.xlu0
  %v924 = vpop.trf.xlu0
  %v925 = vpop.trf.xlu0
  %v926 = vpop.trf.xlu0
  %v927 = vpop.trf.xlu0
  %v928 = vpop.trf.xlu0
  %v929 = vpop.trf.xlu0
  %v930 = vpop.trf.xlu0
  %v931 = vpop.trf.xlu0
  %v932 = vpop.trf.xlu0
  %933 = vst [vmem:[#allocation3] sm:$0xf] %v917
  %s934 = scalar_lea.vmem [#allocation2], 1
  %v935 = vld [vmem:[%s934] ss:$2 sm:$0xff]
  %s936 = scalar_lea.vmem [#allocation2], 49
  %v937 = vld [vmem:[%s936] ss:$2 sm:$0xff]
  %s938 = scalar_lea.vmem [#allocation2], 97
  %v939 = vld [vmem:[%s938] ss:$2 sm:$0xff]
  %s940 = scalar_lea.vmem [#allocation2], 145
  %v941 = vld [vmem:[%s940] ss:$2 sm:$0xff]
  %s942 = scalar_lea.vmem [#allocation2], 193
  %v943 = vld [vmem:[%s942] ss:$2 sm:$0xff]
  %s944 = scalar_lea.vmem [#allocation2], 241
  %v945 = vld [vmem:[%s944] ss:$2 sm:$0xff]
  %s946 = scalar_lea.vmem [#allocation2], 289
  %v947 = vld [vmem:[%s946] ss:$2 sm:$0xff]
  %s948 = scalar_lea.vmem [#allocation2], 337
  %v949 = vld [vmem:[%s948] ss:$2 sm:$0xff]
  %s950 = scalar_lea.vmem [#allocation2], 433
  %v951 = vld [vmem:[%s950] ss:$2 sm:$0xff]
  %s952 = scalar_lea.vmem [#allocation2], 481
  %v953 = vld [vmem:[%s952] ss:$2 sm:$0xff]
  %s954 = scalar_lea.vmem [#allocation2], 529
  %v955 = vld [vmem:[%s954] ss:$2 sm:$0xff]
  %s956 = scalar_lea.vmem [#allocation2], 577
  %v957 = vld [vmem:[%s956] ss:$2 sm:$0xff]
  %s958 = scalar_lea.vmem [#allocation2], 625
  %v959 = vld [vmem:[%s958] ss:$2 sm:$0xff]
  %s960 = scalar_lea.vmem [#allocation2], 673
  %v961 = vld [vmem:[%s960] ss:$2 sm:$0xff]
  %s962 = scalar_lea.vmem [#allocation2], 721
  %v963 = vld [vmem:[%s962] ss:$2 sm:$0xff]
  %s964 = scalar_lea.vmem [#allocation2], 769
  %v965 = vld [vmem:[%s964] ss:$2 sm:$0xff]
  %966 = vxpose.xlu0.b32.start [1/16] %v935, 128
  %967 = vxpose.xlu0.b32.cont [2/16] %v937, 128
  %968 = vxpose.xlu0.b32.cont [3/16] %v939, 128
  %969 = vxpose.xlu0.b32.cont [4/16] %v941, 128
  %970 = vxpose.xlu0.b32.cont [5/16] %v943, 128
  %971 = vxpose.xlu0.b32.cont [6/16] %v945, 128
  %972 = vxpose.xlu0.b32.cont [7/16] %v947, 128
  %973 = vxpose.xlu0.b32.cont [8/16] %v949, 128
  %974 = vxpose.xlu0.b32.cont [9/16] %v951, 128
  %975 = vxpose.xlu0.b32.cont [10/16] %v953, 128
  %976 = vxpose.xlu0.b32.cont [11/16] %v955, 128
  %977 = vxpose.xlu0.b32.cont [12/16] %v957, 128
  %978 = vxpose.xlu0.b32.cont [13/16] %v959, 128
  %979 = vxpose.xlu0.b32.cont [14/16] %v961, 128
  %980 = vxpose.xlu0.b32.cont [15/16] %v963, 128
  %981 = vxpose.xlu0.b32.end [16/16] %v965, 128
  %v982 = vpop.trf.xlu0
  %v983 = vpop.trf.xlu0
  %v984 = vpop.trf.xlu0
  %v985 = vpop.trf.xlu0
  %v986 = vpop.trf.xlu0
  %v987 = vpop.trf.xlu0
  %v988 = vpop.trf.xlu0
  %v989 = vpop.trf.xlu0
  %v990 = vpop.trf.xlu0
  %v991 = vpop.trf.xlu0
  %v992 = vpop.trf.xlu0
  %v993 = vpop.trf.xlu0
  %v994 = vpop.trf.xlu0
  %v995 = vpop.trf.xlu0
  %v996 = vpop.trf.xlu0
  %v997 = vpop.trf.xlu0
  %998 = vst [vmem:[#allocation3 + $0x4] sm:$0xf] %v982
  %s999 = scalar_lea.vmem [#allocation2], 2
  %v1000 = vld [vmem:[%s999] ss:$2 sm:$0xff]
  %s1001 = scalar_lea.vmem [#allocation2], 50
  %v1002 = vld [vmem:[%s1001] ss:$2 sm:$0xff]
  %s1003 = scalar_lea.vmem [#allocation2], 98
  %v1004 = vld [vmem:[%s1003] ss:$2 sm:$0xff]
  %s1005 = scalar_lea.vmem [#allocation2], 146
  %v1006 = vld [vmem:[%s1005] ss:$2 sm:$0xff]
  %s1007 = scalar_lea.vmem [#allocation2], 194
  %v1008 = vld [vmem:[%s1007] ss:$2 sm:$0xff]
  %s1009 = scalar_lea.vmem [#allocation2], 242
  %v1010 = vld [vmem:[%s1009] ss:$2 sm:$0xff]
  %s1011 = scalar_lea.vmem [#allocation2], 290
  %v1012 = vld [vmem:[%s1011] ss:$2 sm:$0xff]
  %s1013 = scalar_lea.vmem [#allocation2], 338
  %v1014 = vld [vmem:[%s1013] ss:$2 sm:$0xff]
  %s1015 = scalar_lea.vmem [#allocation2], 434
  %v1016 = vld [vmem:[%s1015] ss:$2 sm:$0xff]
  %s1017 = scalar_lea.vmem [#allocation2], 482
  %v1018 = vld [vmem:[%s1017] ss:$2 sm:$0xff]
  %s1019 = scalar_lea.vmem [#allocation2], 530
  %v1020 = vld [vmem:[%s1019] ss:$2 sm:$0xff]
  %s1021 = scalar_lea.vmem [#allocation2], 578
  %v1022 = vld [vmem:[%s1021] ss:$2 sm:$0xff]
  %s1023 = scalar_lea.vmem [#allocation2], 626
  %v1024 = vld [vmem:[%s1023] ss:$2 sm:$0xff]
  %s1025 = scalar_lea.vmem [#allocation2], 674
  %v1026 = vld [vmem:[%s1025] ss:$2 sm:$0xff]
  %s1027 = scalar_lea.vmem [#allocation2], 722
  %v1028 = vld [vmem:[%s1027] ss:$2 sm:$0xff]
  %s1029 = scalar_lea.vmem [#allocation2], 770
  %v1030 = vld [vmem:[%s1029] ss:$2 sm:$0xff]
  %1031 = vxpose.xlu0.b32.start [1/16] %v1000, 128
  %1032 = vxpose.xlu0.b32.cont [2/16] %v1002, 128
  %1033 = vxpose.xlu0.b32.cont [3/16] %v1004, 128
  %1034 = vxpose.xlu0.b32.cont [4/16] %v1006, 128
  %1035 = vxpose.xlu0.b32.cont [5/16] %v1008, 128
  %1036 = vxpose.xlu0.b32.cont [6/16] %v1010, 128
  %1037 = vxpose.xlu0.b32.cont [7/16] %v1012, 128
  %1038 = vxpose.xlu0.b32.cont [8/16] %v1014, 128
  %1039 = vxpose.xlu0.b32.cont [9/16] %v1016, 128
  %1040 = vxpose.xlu0.b32.cont [10/16] %v1018, 128
  %1041 = vxpose.xlu0.b32.cont [11/16] %v1020, 128
  %1042 = vxpose.xlu0.b32.cont [12/16] %v1022, 128
  %1043 = vxpose.xlu0.b32.cont [13/16] %v1024, 128
  %1044 = vxpose.xlu0.b32.cont [14/16] %v1026, 128
  %1045 = vxpose.xlu0.b32.cont [15/16] %v1028, 128
  %1046 = vxpose.xlu0.b32.end [16/16] %v1030, 128
  %v1047 = vpop.trf.xlu0
  %v1048 = vpop.trf.xlu0
  %v1049 = vpop.trf.xlu0
  %v1050 = vpop.trf.xlu0
  %v1051 = vpop.trf.xlu0
  %v1052 = vpop.trf.xlu0
  %v1053 = vpop.trf.xlu0
  %v1054 = vpop.trf.xlu0
  %v1055 = vpop.trf.xlu0
  %v1056 = vpop.trf.xlu0
  %v1057 = vpop.trf.xlu0
  %v1058 = vpop.trf.xlu0
  %v1059 = vpop.trf.xlu0
  %v1060 = vpop.trf.xlu0
  %v1061 = vpop.trf.xlu0
  %v1062 = vpop.trf.xlu0
  %1063 = vst [vmem:[#allocation3 + $0x8] sm:$0xf] %v1047
  %v1064 = vld [vmem:[%s805] ss:$2 sm:$0xff]
  %s1065 = scalar_lea.vmem %s805, 48 [#allocation2]
  %v1066 = vld [vmem:[%s1065] ss:$2 sm:$0xff]
  %s1067 = scalar_lea.vmem %s805, 96 [#allocation2]
  %v1068 = vld [vmem:[%s1067] ss:$2 sm:$0xff]
  %s1069 = scalar_lea.vmem %s805, 144 [#allocation2]
  %v1070 = vld [vmem:[%s1069] ss:$2 sm:$0xff]
  %s1071 = scalar_lea.vmem %s805, 192 [#allocation2]
  %v1072 = vld [vmem:[%s1071] ss:$2 sm:$0xff]
  %s1073 = scalar_lea.vmem %s805, 240 [#allocation2]
  %v1074 = vld [vmem:[%s1073] ss:$2 sm:$0xff]
  %s1075 = scalar_lea.vmem %s805, 288 [#allocation2]
  %v1076 = vld [vmem:[%s1075] ss:$2 sm:$0xff]
  %s1077 = scalar_lea.vmem %s805, 336 [#allocation2]
  %v1078 = vld [vmem:[%s1077] ss:$2 sm:$0xff]
  %s1079 = scalar_lea.vmem %s805, 432 [#allocation2]
  %v1080 = vld [vmem:[%s1079] ss:$2 sm:$0xff]
  %s1081 = scalar_lea.vmem %s805, 480 [#allocation2]
  %v1082 = vld [vmem:[%s1081] ss:$2 sm:$0xff]
  %s1083 = scalar_lea.vmem %s805, 528 [#allocation2]
  %v1084 = vld [vmem:[%s1083] ss:$2 sm:$0xff]
  %s1085 = scalar_lea.vmem %s805, 576 [#allocation2]
  %v1086 = vld [vmem:[%s1085] ss:$2 sm:$0xff]
  %s1087 = scalar_lea.vmem %s805, 624 [#allocation2]
  %v1088 = vld [vmem:[%s1087] ss:$2 sm:$0xff]
  %s1089 = scalar_lea.vmem %s805, 672 [#allocation2]
  %v1090 = vld [vmem:[%s1089] ss:$2 sm:$0xff]
  %s1091 = scalar_lea.vmem %s805, 720 [#allocation2]
  %v1092 = vld [vmem:[%s1091] ss:$2 sm:$0xff]
  %s1093 = scalar_lea.vmem %s805, 768 [#allocation2]
  %v1094 = vld [vmem:[%s1093] ss:$2 sm:$0xff]
  %1095 = vxpose.xlu0.b32.start [1/16] %v1064, 128
  %1096 = vxpose.xlu0.b32.cont [2/16] %v1066, 128
  %1097 = vxpose.xlu0.b32.cont [3/16] %v1068, 128
  %1098 = vxpose.xlu0.b32.cont [4/16] %v1070, 128
  %1099 = vxpose.xlu0.b32.cont [5/16] %v1072, 128
  %1100 = vxpose.xlu0.b32.cont [6/16] %v1074, 128
  %1101 = vxpose.xlu0.b32.cont [7/16] %v1076, 128
  %1102 = vxpose.xlu0.b32.cont [8/16] %v1078, 128
  %1103 = vxpose.xlu0.b32.cont [9/16] %v1080, 128
  %1104 = vxpose.xlu0.b32.cont [10/16] %v1082, 128
  %1105 = vxpose.xlu0.b32.cont [11/16] %v1084, 128
  %1106 = vxpose.xlu0.b32.cont [12/16] %v1086, 128
  %1107 = vxpose.xlu0.b32.cont [13/16] %v1088, 128
  %1108 = vxpose.xlu0.b32.cont [14/16] %v1090, 128
  %1109 = vxpose.xlu0.b32.cont [15/16] %v1092, 128
  %1110 = vxpose.xlu0.b32.end [16/16] %v1094, 128
  %v1111 = vpop.trf.xlu0
  %v1112 = vpop.trf.xlu0
  %v1113 = vpop.trf.xlu0
  %v1114 = vpop.trf.xlu0
  %v1115 = vpop.trf.xlu0
  %v1116 = vpop.trf.xlu0
  %v1117 = vpop.trf.xlu0
  %v1118 = vpop.trf.xlu0
  %v1119 = vpop.trf.xlu0
  %v1120 = vpop.trf.xlu0
  %v1121 = vpop.trf.xlu0
  %v1122 = vpop.trf.xlu0
  %v1123 = vpop.trf.xlu0
  %v1124 = vpop.trf.xlu0
  %v1125 = vpop.trf.xlu0
  %v1126 = vpop.trf.xlu0
  %1127 = vst [vmem:[#allocation3 + $0xc] sm:$0xf] %v1111
  %s1128 = scalar_lea.vmem %s805, 1 [#allocation2]
  %v1129 = vld [vmem:[%s1128] ss:$2 sm:$0xff]
  %s1130 = scalar_lea.vmem %s805, 49 [#allocation2]
  %v1131 = vld [vmem:[%s1130] ss:$2 sm:$0xff]
  %s1132 = scalar_lea.vmem %s805, 97 [#allocation2]
  %v1133 = vld [vmem:[%s1132] ss:$2 sm:$0xff]
  %s1134 = scalar_lea.vmem %s805, 145 [#allocation2]
  %v1135 = vld [vmem:[%s1134] ss:$2 sm:$0xff]
  %s1136 = scalar_lea.vmem %s805, 193 [#allocation2]
  %v1137 = vld [vmem:[%s1136] ss:$2 sm:$0xff]
  %s1138 = scalar_lea.vmem %s805, 241 [#allocation2]
  %v1139 = vld [vmem:[%s1138] ss:$2 sm:$0xff]
  %s1140 = scalar_lea.vmem %s805, 289 [#allocation2]
  %v1141 = vld [vmem:[%s1140] ss:$2 sm:$0xff]
  %s1142 = scalar_lea.vmem %s805, 337 [#allocation2]
  %v1143 = vld [vmem:[%s1142] ss:$2 sm:$0xff]
  %s1144 = scalar_lea.vmem %s805, 433 [#allocation2]
  %v1145 = vld [vmem:[%s1144] ss:$2 sm:$0xff]
  %s1146 = scalar_lea.vmem %s805, 481 [#allocation2]
  %v1147 = vld [vmem:[%s1146] ss:$2 sm:$0xff]
  %s1148 = scalar_lea.vmem %s805, 529 [#allocation2]
  %v1149 = vld [vmem:[%s1148] ss:$2 sm:$0xff]
  %s1150 = scalar_lea.vmem %s805, 577 [#allocation2]
  %v1151 = vld [vmem:[%s1150] ss:$2 sm:$0xff]
  %s1152 = scalar_lea.vmem %s805, 625 [#allocation2]
  %v1153 = vld [vmem:[%s1152] ss:$2 sm:$0xff]
  %s1154 = scalar_lea.vmem %s805, 673 [#allocation2]
  %v1155 = vld [vmem:[%s1154] ss:$2 sm:$0xff]
  %s1156 = scalar_lea.vmem %s805, 721 [#allocation2]
  %v1157 = vld [vmem:[%s1156] ss:$2 sm:$0xff]
  %s1158 = scalar_lea.vmem %s805, 769 [#allocation2]
  %v1159 = vld [vmem:[%s1158] ss:$2 sm:$0xff]
  %1160 = vxpose.xlu0.b32.start [1/16] %v1129, 128
  %1161 = vxpose.xlu0.b32.cont [2/16] %v1131, 128
  %1162 = vxpose.xlu0.b32.cont [3/16] %v1133, 128
  %1163 = vxpose.xlu0.b32.cont [4/16] %v1135, 128
  %1164 = vxpose.xlu0.b32.cont [5/16] %v1137, 128
  %1165 = vxpose.xlu0.b32.cont [6/16] %v1139, 128
  %1166 = vxpose.xlu0.b32.cont [7/16] %v1141, 128
  %1167 = vxpose.xlu0.b32.cont [8/16] %v1143, 128
  %1168 = vxpose.xlu0.b32.cont [9/16] %v1145, 128
  %1169 = vxpose.xlu0.b32.cont [10/16] %v1147, 128
  %1170 = vxpose.xlu0.b32.cont [11/16] %v1149, 128
  %1171 = vxpose.xlu0.b32.cont [12/16] %v1151, 128
  %1172 = vxpose.xlu0.b32.cont [13/16] %v1153, 128
  %1173 = vxpose.xlu0.b32.cont [14/16] %v1155, 128
  %1174 = vxpose.xlu0.b32.cont [15/16] %v1157, 128
  %1175 = vxpose.xlu0.b32.end [16/16] %v1159, 128
  %v1176 = vpop.trf.xlu0
  %v1177 = vpop.trf.xlu0
  %v1178 = vpop.trf.xlu0
  %v1179 = vpop.trf.xlu0
  %v1180 = vpop.trf.xlu0
  %v1181 = vpop.trf.xlu0
  %v1182 = vpop.trf.xlu0
  %v1183 = vpop.trf.xlu0
  %v1184 = vpop.trf.xlu0
  %v1185 = vpop.trf.xlu0
  %v1186 = vpop.trf.xlu0
  %v1187 = vpop.trf.xlu0
  %v1188 = vpop.trf.xlu0
  %v1189 = vpop.trf.xlu0
  %v1190 = vpop.trf.xlu0
  %v1191 = vpop.trf.xlu0
  %1192 = vst [vmem:[#allocation3 + $0x10] sm:$0xf] %v1176
  %s1193 = scalar_lea.vmem %s805, 2 [#allocation2]
  %v1194 = vld [vmem:[%s1193] ss:$2 sm:$0xff]
  %s1195 = scalar_lea.vmem %s805, 50 [#allocation2]
  %v1196 = vld [vmem:[%s1195] ss:$2 sm:$0xff]
  %s1197 = scalar_lea.vmem %s805, 98 [#allocation2]
  %v1198 = vld [vmem:[%s1197] ss:$2 sm:$0xff]
  %s1199 = scalar_lea.vmem %s805, 146 [#allocation2]
  %v1200 = vld [vmem:[%s1199] ss:$2 sm:$0xff]
  %s1201 = scalar_lea.vmem %s805, 194 [#allocation2]
  %v1202 = vld [vmem:[%s1201] ss:$2 sm:$0xff]
  %s1203 = scalar_lea.vmem %s805, 242 [#allocation2]
  %v1204 = vld [vmem:[%s1203] ss:$2 sm:$0xff]
  %s1205 = scalar_lea.vmem %s805, 290 [#allocation2]
  %v1206 = vld [vmem:[%s1205] ss:$2 sm:$0xff]
  %s1207 = scalar_lea.vmem %s805, 338 [#allocation2]
  %v1208 = vld [vmem:[%s1207] ss:$2 sm:$0xff]
  %s1209 = scalar_lea.vmem %s805, 434 [#allocation2]
  %v1210 = vld [vmem:[%s1209] ss:$2 sm:$0xff]
  %s1211 = scalar_lea.vmem %s805, 482 [#allocation2]
  %v1212 = vld [vmem:[%s1211] ss:$2 sm:$0xff]
  %s1213 = scalar_lea.vmem %s805, 530 [#allocation2]
  %v1214 = vld [vmem:[%s1213] ss:$2 sm:$0xff]
  %s1215 = scalar_lea.vmem %s805, 578 [#allocation2]
  %v1216 = vld [vmem:[%s1215] ss:$2 sm:$0xff]
  %s1217 = scalar_lea.vmem %s805, 626 [#allocation2]
  %v1218 = vld [vmem:[%s1217] ss:$2 sm:$0xff]
  %s1219 = scalar_lea.vmem %s805, 674 [#allocation2]
  %v1220 = vld [vmem:[%s1219] ss:$2 sm:$0xff]
  %s1221 = scalar_lea.vmem %s805, 722 [#allocation2]
  %v1222 = vld [vmem:[%s1221] ss:$2 sm:$0xff]
  %s1223 = scalar_lea.vmem %s805, 770 [#allocation2]
  %v1224 = vld [vmem:[%s1223] ss:$2 sm:$0xff]
  %1225 = vxpose.xlu0.b32.start [1/16] %v1194, 128
  %1226 = vxpose.xlu0.b32.cont [2/16] %v1196, 128
  %1227 = vxpose.xlu0.b32.cont [3/16] %v1198, 128
  %1228 = vxpose.xlu0.b32.cont [4/16] %v1200, 128
  %1229 = vxpose.xlu0.b32.cont [5/16] %v1202, 128
  %1230 = vxpose.xlu0.b32.cont [6/16] %v1204, 128
  %1231 = vxpose.xlu0.b32.cont [7/16] %v1206, 128
  %1232 = vxpose.xlu0.b32.cont [8/16] %v1208, 128
  %1233 = vxpose.xlu0.b32.cont [9/16] %v1210, 128
  %1234 = vxpose.xlu0.b32.cont [10/16] %v1212, 128
  %1235 = vxpose.xlu0.b32.cont [11/16] %v1214, 128
  %1236 = vxpose.xlu0.b32.cont [12/16] %v1216, 128
  %1237 = vxpose.xlu0.b32.cont [13/16] %v1218, 128
  %1238 = vxpose.xlu0.b32.cont [14/16] %v1220, 128
  %1239 = vxpose.xlu0.b32.cont [15/16] %v1222, 128
  %1240 = vxpose.xlu0.b32.end [16/16] %v1224, 128
  %v1241 = vpop.trf.xlu0
  %v1242 = vpop.trf.xlu0
  %v1243 = vpop.trf.xlu0
  %v1244 = vpop.trf.xlu0
  %v1245 = vpop.trf.xlu0
  %v1246 = vpop.trf.xlu0
  %v1247 = vpop.trf.xlu0
  %v1248 = vpop.trf.xlu0
  %v1249 = vpop.trf.xlu0
  %v1250 = vpop.trf.xlu0
  %v1251 = vpop.trf.xlu0
  %v1252 = vpop.trf.xlu0
  %v1253 = vpop.trf.xlu0
  %v1254 = vpop.trf.xlu0
  %v1255 = vpop.trf.xlu0
  %v1256 = vpop.trf.xlu0
  %1257 = vst [vmem:[#allocation3 + $0x14] sm:$0xf] %v1241
  %s1258 = scalar_lea.vmem [#allocation2], 48
  %v1259 = vld [vmem:[%s1258] ss:$2 sm:$0xff]
  %s1260 = scalar_lea.vmem %s1258, 48 [#allocation2]
  %v1261 = vld [vmem:[%s1260] ss:$2 sm:$0xff]
  %s1262 = scalar_lea.vmem %s1258, 96 [#allocation2]
  %v1263 = vld [vmem:[%s1262] ss:$2 sm:$0xff]
  %s1264 = scalar_lea.vmem %s1258, 144 [#allocation2]
  %v1265 = vld [vmem:[%s1264] ss:$2 sm:$0xff]
  %s1266 = scalar_lea.vmem %s1258, 192 [#allocation2]
  %v1267 = vld [vmem:[%s1266] ss:$2 sm:$0xff]
  %s1268 = scalar_lea.vmem %s1258, 240 [#allocation2]
  %v1269 = vld [vmem:[%s1268] ss:$2 sm:$0xff]
  %s1270 = scalar_lea.vmem %s1258, 288 [#allocation2]
  %v1271 = vld [vmem:[%s1270] ss:$2 sm:$0xff]
  %s1272 = scalar_lea.vmem %s1258, 336 [#allocation2]
  %v1273 = vld [vmem:[%s1272] ss:$2 sm:$0xff]
  %s1274 = scalar_lea.vmem %s1258, 432 [#allocation2]
  %v1275 = vld [vmem:[%s1274] ss:$2 sm:$0xff]
  %s1276 = scalar_lea.vmem %s1258, 480 [#allocation2]
  %v1277 = vld [vmem:[%s1276] ss:$2 sm:$0xff]
  %s1278 = scalar_lea.vmem %s1258, 528 [#allocation2]
  %v1279 = vld [vmem:[%s1278] ss:$2 sm:$0xff]
  %s1280 = scalar_lea.vmem %s1258, 576 [#allocation2]
  %v1281 = vld [vmem:[%s1280] ss:$2 sm:$0xff]
  %s1282 = scalar_lea.vmem %s1258, 624 [#allocation2]
  %v1283 = vld [vmem:[%s1282] ss:$2 sm:$0xff]
  %s1284 = scalar_lea.vmem %s1258, 672 [#allocation2]
  %v1285 = vld [vmem:[%s1284] ss:$2 sm:$0xff]
  %s1286 = scalar_lea.vmem %s1258, 720 [#allocation2]
  %v1287 = vld [vmem:[%s1286] ss:$2 sm:$0xff]
  %s1288 = scalar_lea.vmem %s1258, 768 [#allocation2]
  %v1289 = vld [vmem:[%s1288] ss:$2 sm:$0xff]
  %1290 = vxpose.xlu0.b32.start [1/16] %v1259, 128
  %1291 = vxpose.xlu0.b32.cont [2/16] %v1261, 128
  %1292 = vxpose.xlu0.b32.cont [3/16] %v1263, 128
  %1293 = vxpose.xlu0.b32.cont [4/16] %v1265, 128
  %1294 = vxpose.xlu0.b32.cont [5/16] %v1267, 128
  %1295 = vxpose.xlu0.b32.cont [6/16] %v1269, 128
  %1296 = vxpose.xlu0.b32.cont [7/16] %v1271, 128
  %1297 = vxpose.xlu0.b32.cont [8/16] %v1273, 128
  %1298 = vxpose.xlu0.b32.cont [9/16] %v1275, 128
  %1299 = vxpose.xlu0.b32.cont [10/16] %v1277, 128
  %1300 = vxpose.xlu0.b32.cont [11/16] %v1279, 128
  %1301 = vxpose.xlu0.b32.cont [12/16] %v1281, 128
  %1302 = vxpose.xlu0.b32.cont [13/16] %v1283, 128
  %1303 = vxpose.xlu0.b32.cont [14/16] %v1285, 128
  %1304 = vxpose.xlu0.b32.cont [15/16] %v1287, 128
  %1305 = vxpose.xlu0.b32.end [16/16] %v1289, 128
  %v1306 = vpop.trf.xlu0
  %v1307 = vpop.trf.xlu0
  %v1308 = vpop.trf.xlu0
  %v1309 = vpop.trf.xlu0
  %v1310 = vpop.trf.xlu0
  %v1311 = vpop.trf.xlu0
  %v1312 = vpop.trf.xlu0
  %v1313 = vpop.trf.xlu0
  %v1314 = vpop.trf.xlu0
  %v1315 = vpop.trf.xlu0
  %v1316 = vpop.trf.xlu0
  %v1317 = vpop.trf.xlu0
  %v1318 = vpop.trf.xlu0
  %v1319 = vpop.trf.xlu0
  %v1320 = vpop.trf.xlu0
  %v1321 = vpop.trf.xlu0
  %1322 = vst [vmem:[#allocation3 + $0x18] sm:$0xf] %v1306
  %s1323 = scalar_lea.vmem %s1258, 1 [#allocation2]
  %v1324 = vld [vmem:[%s1323] ss:$2 sm:$0xff]
  %s1325 = scalar_lea.vmem %s1258, 49 [#allocation2]
  %v1326 = vld [vmem:[%s1325] ss:$2 sm:$0xff]
  %s1327 = scalar_lea.vmem %s1258, 97 [#allocation2]
  %v1328 = vld [vmem:[%s1327] ss:$2 sm:$0xff]
  %s1329 = scalar_lea.vmem %s1258, 145 [#allocation2]
  %v1330 = vld [vmem:[%s1329] ss:$2 sm:$0xff]
  %s1331 = scalar_lea.vmem %s1258, 193 [#allocation2]
  %v1332 = vld [vmem:[%s1331] ss:$2 sm:$0xff]
  %s1333 = scalar_lea.vmem %s1258, 241 [#allocation2]
  %v1334 = vld [vmem:[%s1333] ss:$2 sm:$0xff]
  %s1335 = scalar_lea.vmem %s1258, 289 [#allocation2]
  %v1336 = vld [vmem:[%s1335] ss:$2 sm:$0xff]
  %s1337 = scalar_lea.vmem %s1258, 337 [#allocation2]
  %v1338 = vld [vmem:[%s1337] ss:$2 sm:$0xff]
  %s1339 = scalar_lea.vmem %s1258, 433 [#allocation2]
  %v1340 = vld [vmem:[%s1339] ss:$2 sm:$0xff]
  %s1341 = scalar_lea.vmem %s1258, 481 [#allocation2]
  %v1342 = vld [vmem:[%s1341] ss:$2 sm:$0xff]
  %s1343 = scalar_lea.vmem %s1258, 529 [#allocation2]
  %v1344 = vld [vmem:[%s1343] ss:$2 sm:$0xff]
  %s1345 = scalar_lea.vmem %s1258, 577 [#allocation2]
  %v1346 = vld [vmem:[%s1345] ss:$2 sm:$0xff]
  %s1347 = scalar_lea.vmem %s1258, 625 [#allocation2]
  %v1348 = vld [vmem:[%s1347] ss:$2 sm:$0xff]
  %s1349 = scalar_lea.vmem %s1258, 673 [#allocation2]
  %v1350 = vld [vmem:[%s1349] ss:$2 sm:$0xff]
  %s1351 = scalar_lea.vmem %s1258, 721 [#allocation2]
  %v1352 = vld [vmem:[%s1351] ss:$2 sm:$0xff]
  %s1353 = scalar_lea.vmem %s1258, 769 [#allocation2]
  %v1354 = vld [vmem:[%s1353] ss:$2 sm:$0xff]
  %1355 = vxpose.xlu0.b32.start [1/16] %v1324, 128
  %1356 = vxpose.xlu0.b32.cont [2/16] %v1326, 128
  %1357 = vxpose.xlu0.b32.cont [3/16] %v1328, 128
  %1358 = vxpose.xlu0.b32.cont [4/16] %v1330, 128
  %1359 = vxpose.xlu0.b32.cont [5/16] %v1332, 128
  %1360 = vxpose.xlu0.b32.cont [6/16] %v1334, 128
  %1361 = vxpose.xlu0.b32.cont [7/16] %v1336, 128
  %1362 = vxpose.xlu0.b32.cont [8/16] %v1338, 128
  %1363 = vxpose.xlu0.b32.cont [9/16] %v1340, 128
  %1364 = vxpose.xlu0.b32.cont [10/16] %v1342, 128
  %1365 = vxpose.xlu0.b32.cont [11/16] %v1344, 128
  %1366 = vxpose.xlu0.b32.cont [12/16] %v1346, 128
  %1367 = vxpose.xlu0.b32.cont [13/16] %v1348, 128
  %1368 = vxpose.xlu0.b32.cont [14/16] %v1350, 128
  %1369 = vxpose.xlu0.b32.cont [15/16] %v1352, 128
  %1370 = vxpose.xlu0.b32.end [16/16] %v1354, 128
  %v1371 = vpop.trf.xlu0
  %v1372 = vpop.trf.xlu0
  %v1373 = vpop.trf.xlu0
  %v1374 = vpop.trf.xlu0
  %v1375 = vpop.trf.xlu0
  %v1376 = vpop.trf.xlu0
  %v1377 = vpop.trf.xlu0
  %v1378 = vpop.trf.xlu0
  %v1379 = vpop.trf.xlu0
  %v1380 = vpop.trf.xlu0
  %v1381 = vpop.trf.xlu0
  %v1382 = vpop.trf.xlu0
  %v1383 = vpop.trf.xlu0
  %v1384 = vpop.trf.xlu0
  %v1385 = vpop.trf.xlu0
  %v1386 = vpop.trf.xlu0
  %1387 = vst [vmem:[#allocation3 + $0x1c] sm:$0xf] %v1371
  %s1388 = scalar_lea.vmem %s1258, 2 [#allocation2]
  %v1389 = vld [vmem:[%s1388] ss:$2 sm:$0xff]
  %s1390 = scalar_lea.vmem %s1258, 50 [#allocation2]
  %v1391 = vld [vmem:[%s1390] ss:$2 sm:$0xff]
  %s1392 = scalar_lea.vmem %s1258, 98 [#allocation2]
  %v1393 = vld [vmem:[%s1392] ss:$2 sm:$0xff]
  %s1394 = scalar_lea.vmem %s1258, 146 [#allocation2]
  %v1395 = vld [vmem:[%s1394] ss:$2 sm:$0xff]
  %s1396 = scalar_lea.vmem %s1258, 194 [#allocation2]
  %v1397 = vld [vmem:[%s1396] ss:$2 sm:$0xff]
  %s1398 = scalar_lea.vmem %s1258, 242 [#allocation2]
  %v1399 = vld [vmem:[%s1398] ss:$2 sm:$0xff]
  %s1400 = scalar_lea.vmem %s1258, 290 [#allocation2]
  %v1401 = vld [vmem:[%s1400] ss:$2 sm:$0xff]
  %s1402 = scalar_lea.vmem %s1258, 338 [#allocation2]
  %v1403 = vld [vmem:[%s1402] ss:$2 sm:$0xff]
  %s1404 = scalar_lea.vmem %s1258, 434 [#allocation2]
  %v1405 = vld [vmem:[%s1404] ss:$2 sm:$0xff]
  %s1406 = scalar_lea.vmem %s1258, 482 [#allocation2]
  %v1407 = vld [vmem:[%s1406] ss:$2 sm:$0xff]
  %s1408 = scalar_lea.vmem %s1258, 530 [#allocation2]
  %v1409 = vld [vmem:[%s1408] ss:$2 sm:$0xff]
  %s1410 = scalar_lea.vmem %s1258, 578 [#allocation2]
  %v1411 = vld [vmem:[%s1410] ss:$2 sm:$0xff]
  %s1412 = scalar_lea.vmem %s1258, 626 [#allocation2]
  %v1413 = vld [vmem:[%s1412] ss:$2 sm:$0xff]
  %s1414 = scalar_lea.vmem %s1258, 674 [#allocation2]
  %v1415 = vld [vmem:[%s1414] ss:$2 sm:$0xff]
  %s1416 = scalar_lea.vmem %s1258, 722 [#allocation2]
  %v1417 = vld [vmem:[%s1416] ss:$2 sm:$0xff]
  %s1418 = scalar_lea.vmem %s1258, 770 [#allocation2]
  %v1419 = vld [vmem:[%s1418] ss:$2 sm:$0xff]
  %1420 = vxpose.xlu0.b32.start [1/16] %v1389, 128
  %1421 = vxpose.xlu0.b32.cont [2/16] %v1391, 128
  %1422 = vxpose.xlu0.b32.cont [3/16] %v1393, 128
  %1423 = vxpose.xlu0.b32.cont [4/16] %v1395, 128
  %1424 = vxpose.xlu0.b32.cont [5/16] %v1397, 128
  %1425 = vxpose.xlu0.b32.cont [6/16] %v1399, 128
  %1426 = vxpose.xlu0.b32.cont [7/16] %v1401, 128
  %1427 = vxpose.xlu0.b32.cont [8/16] %v1403, 128
  %1428 = vxpose.xlu0.b32.cont [9/16] %v1405, 128
  %1429 = vxpose.xlu0.b32.cont [10/16] %v1407, 128
  %1430 = vxpose.xlu0.b32.cont [11/16] %v1409, 128
  %1431 = vxpose.xlu0.b32.cont [12/16] %v1411, 128
  %1432 = vxpose.xlu0.b32.cont [13/16] %v1413, 128
  %1433 = vxpose.xlu0.b32.cont [14/16] %v1415, 128
  %1434 = vxpose.xlu0.b32.cont [15/16] %v1417, 128
  %1435 = vxpose.xlu0.b32.end [16/16] %v1419, 128
  %v1436 = vpop.trf.xlu0
  %v1437 = vpop.trf.xlu0
  %v1438 = vpop.trf.xlu0
  %v1439 = vpop.trf.xlu0
  %v1440 = vpop.trf.xlu0
  %v1441 = vpop.trf.xlu0
  %v1442 = vpop.trf.xlu0
  %v1443 = vpop.trf.xlu0
  %v1444 = vpop.trf.xlu0
  %v1445 = vpop.trf.xlu0
  %v1446 = vpop.trf.xlu0
  %v1447 = vpop.trf.xlu0
  %v1448 = vpop.trf.xlu0
  %v1449 = vpop.trf.xlu0
  %v1450 = vpop.trf.xlu0
  %v1451 = vpop.trf.xlu0
  %1452 = vst [vmem:[#allocation3 + $0x20] sm:$0xf] %v1436
  %v1453 = vld [vmem:[%s3] sm:$0xf]
  %v1454 = vld [vmem:[%s3 + $0x4] sm:$0xf]
  %v1455 = vld [vmem:[#allocation3] sm:$0xff]
  %v1456 = vld [vmem:[#allocation3 + $0x8] sm:$0xff]
  %v1457 = vld [vmem:[#allocation3 + $0x10] sm:$0xff]
  %v1458 = vld [vmem:[#allocation3 + $0x18] sm:$0xff]
  %v1459 = vld [vmem:[#allocation3 + $0x20] sm:$0xf]
  %v1460 = vpack.c.bf16 %v1456, %v1455
  %v1461 = vpack.c.bf16 %v1458, %v1457
  %v1462 = vpack.c.bf16 %v1459, %v1459
  %v1465 = vunpack.c.l.b16 %v1453
  %v1466 = vunpack.c.l.b16 %v1454
  %v1467 = vpack.c.b16 %v1466, %v1465
  %vm1468 = vcmask 293888
  %v1470 = vsel %vm1468, %v1467, 0
  %vm1472 = vcmask 1041408
  %v1474 = vsel %vm1472, %v1462, 0
  %1476 = vmatprep.subr.bf16.mxu0 0
  %1477 = vmatpush1.bf16.msra.mxu0 %v1460
  %1478 = vmatprep.subr.bf16.mxu0 0
  %1479 = vmatpush1.bf16.msra.mxu0 %v1461
  %1480 = vmatprep.subr.bf16.mxu0 0
  %1481 = vmatpush1.bf16.msra.mxu0 %v1474
  %1482 = vmatprep.subr.bf16.mxu0 0
  %1483 = vmatpush1.bf16.msra.mxu0 0
  %1484 = vmatprep.subr.bf16.mxu0 0
  %1485 = vmatpush1.bf16.msra.mxu0 0
  %1486 = vmatprep.subr.bf16.mxu0 0
  %1487 = vmatpush1.bf16.msra.mxu0 0
  %1488 = vmatprep.subr.bf16.mxu0 0
  %1489 = vmatpush1.bf16.msra.mxu0 0
  %1490 = vmatprep.subr.bf16.mxu0 0
  %1491 = vmatpush1.bf16.msra.mxu0 0
  %1492 = vmatprep.subr.bf16.mxu0 0
  %1493 = vmatpush1.bf16.msra.mxu0 0
  %1494 = vmatprep.subr.bf16.mxu0 0
  %1495 = vmatpush1.bf16.msra.mxu0 0
  %1496 = vmatprep.subr.bf16.mxu0 0
  %1497 = vmatpush1.bf16.msra.mxu0 0
  %1498 = vmatprep.subr.bf16.mxu0 0
  %1499 = vmatpush1.bf16.msra.mxu0 0
  %1500 = vmatprep.subr.bf16.mxu0 0
  %1501 = vmatpush1.bf16.msra.mxu0 0
  %1502 = vmatprep.subr.bf16.mxu0 0
  %1503 = vmatpush1.bf16.msra.mxu0 0
  %1504 = vmatprep.subr.bf16.mxu0 0
  %1505 = vmatpush1.bf16.msra.mxu0 0
  %1506 = vmatprep.subr.bf16.mxu0 0
  %1507 = vmatpush1.bf16.msra.mxu0 0
  %1508 = vmatprep.mubr.bf16.mxu0 0
  %1509 = vmatmul.mubr.bf16.gmra.mrb[0].mxu0 %v1470
  %v1510 = vpop.f32.mrb[0].mxu0
  %v1511 = vadd.f32 0.0, %v1510
  %v1512 = vpop.f32.mrb[0].mxu0
  %v1513 = vpop.f32.mrb[0].mxu0
  %v1514 = vadd.f32 0.0, %v1513
  %v1515 = vpop.f32.mrb[0].mxu0
  %1516 = vdwg.mxu0
  %1517 = vadd.xlane.f32.xlu0 %v1511
  %v1518 = vpop.xlane.xlu0 %1517
  %v1519 = vrcp.pop 128.0
  %v1520 = vmul.f32 %v1518, %v1519
  %v1521 = vsub.f32 %v1511, %v1520
  %v1522 = vmul.f32 %v1521, %v1521
  %1523 = vadd.xlane.f32.xlu0 %v1522
  %v1524 = vpop.xlane.xlu0 %1523
  %v1525 = vmul.f32 %v1524, %v1519
  %v1526 = vld [vmem:[%s4] sm:$0xff]
  %v1527 = vadd.f32 %v1525, 1e-05
  %v1528 = vrsqrt.pop %v1527
  %v1529 = vmul.f32 %v1526, %v1528
  %v1530 = vld [vmem:[%s5] sm:$0xff]
  %v1531 = vmul.f32 %v1520, %v1529
  %v1532 = vsub.f32 %v1530, %v1531
  %1534 = vset.pattern.permute.xlu0 0
  %1535 = vperm.xlu0 %1534, %v1529
  %v1536 = vpop.permute.xlu0 %1535
  %v1538 = vmul.f32 %v1511, %v1536
  %1540 = vset.pattern.permute.xlu0 0
  %1541 = vperm.xlu0 %1540, %v1532
  %v1542 = vpop.permute.xlu0 %1541
  %v1544 = vadd.f32 %v1538, %v1542
  %v1545 = vmax.f32 %v1544, 0.0
  %1546 = vxpose.xlu0.b32.start [1/16] %v1545, 128
  %1547 = vxpose.xlu0.b32.cont [2/16] 0.0, 128
  %1548 = vxpose.xlu0.b32.cont [3/16] 0.0, 128
  %1549 = vxpose.xlu0.b32.cont [4/16] 0.0, 128
  %1550 = vxpose.xlu0.b32.cont [5/16] 0.0, 128
  %1551 = vxpose.xlu0.b32.cont [6/16] 0.0, 128
  %1552 = vxpose.xlu0.b32.cont [7/16] 0.0, 128
  %1553 = vxpose.xlu0.b32.cont [8/16] 0.0, 128
  %1554 = vxpose.xlu0.b32.cont [9/16] 0.0, 128
  %1555 = vxpose.xlu0.b32.cont [10/16] 0.0, 128
  %1556 = vxpose.xlu0.b32.cont [11/16] 0.0, 128
  %1557 = vxpose.xlu0.b32.cont [12/16] 0.0, 128
  %1558 = vxpose.xlu0.b32.cont [13/16] 0.0, 128
  %1559 = vxpose.xlu0.b32.cont [14/16] 0.0, 128
  %1560 = vxpose.xlu0.b32.cont [15/16] 0.0, 128
  %1561 = vxpose.xlu0.b32.end [16/16] 0.0, 128
  %v1562 = vpop.trf.xlu0
  %v1563 = vpop.trf.xlu0
  %v1564 = vpop.trf.xlu0
  %v1565 = vpop.trf.xlu0
  %v1566 = vpop.trf.xlu0
  %v1567 = vpop.trf.xlu0
  %v1568 = vpop.trf.xlu0
  %v1569 = vpop.trf.xlu0
  %v1570 = vpop.trf.xlu0
  %v1571 = vpop.trf.xlu0
  %v1572 = vpop.trf.xlu0
  %v1573 = vpop.trf.xlu0
  %v1574 = vpop.trf.xlu0
  %v1575 = vpop.trf.xlu0
  %v1576 = vpop.trf.xlu0
  %v1577 = vpop.trf.xlu0
  %vm1578 = vcmask 64512
  %1579 = vst.msk [vmem:[#allocation4] sm:$0xff] %vm1578, 0.0
  %vm1580 = vcmask 58368
  %1581 = vst.msk [vmem:[#allocation4 + $0x8] sm:$0x3] %vm1580, 0.0
  %1582 = vst.msk [vmem:[#allocation4 + $0xa0] sm:$0xff] %vm1578, 0.0
  %1583 = vst.msk [vmem:[#allocation4 + $0xa8] sm:$0x3] %vm1580, 0.0
  %s1584 = scalar_lea.vmem [#allocation4], 144
  %1585 = vst.msk [vmem:[%s1584] sm:$0xff] %vm1578, 0.0
  %1586 = vst.msk [vmem:[%s1584 + $0x8] sm:$0x3] %vm1580, 0.0
  %1587 = vst.msk [vmem:[%s1584 + $0xa0] sm:$0xff] %vm1578, 0.0
  %1588 = vst.msk [vmem:[%s1584 + $0xa8] sm:$0x3] %vm1580, 0.0
  %vm1589 = vcmask 57344
  %1590 = vst.msk [vmem:[#allocation4] sm:$0x1] %vm1589, 0.0
  %1591 = vst.msk [vmem:[#allocation4 + $0x10] sm:$0x1] %vm1589, 0.0
  %1592 = vst.msk [vmem:[#allocation4 + $0x20] sm:$0x1] %vm1589, 0.0
  %1593 = vst.msk [vmem:[#allocation4 + $0x30] sm:$0x1] %vm1589, 0.0
  %1594 = vst.msk [vmem:[#allocation4 + $0x40] sm:$0x1] %vm1589, 0.0
  %1595 = vst.msk [vmem:[#allocation4 + $0x50] sm:$0x1] %vm1589, 0.0
  %1596 = vst.msk [vmem:[#allocation4 + $0x60] sm:$0x1] %vm1589, 0.0
  %1597 = vst.msk [vmem:[#allocation4 + $0x70] sm:$0x1] %vm1589, 0.0
  %1598 = vst.msk [vmem:[#allocation4 + $0x80] sm:$0x1] %vm1589, 0.0
  %1599 = vst.msk [vmem:[#allocation4 + $0x90] sm:$0x1] %vm1589, 0.0
  %1600 = vst.msk [vmem:[#allocation4 + $0xa0] sm:$0x1] %vm1589, 0.0
  %1601 = vst.msk [vmem:[#allocation4 + $0xb0] sm:$0x1] %vm1589, 0.0
  %1602 = vst.msk [vmem:[#allocation4 + $0xc0] sm:$0x1] %vm1589, 0.0
  %1603 = vst.msk [vmem:[#allocation4 + $0xd0] sm:$0x1] %vm1589, 0.0
  %1604 = vst.msk [vmem:[#allocation4 + $0xe0] sm:$0x1] %vm1589, 0.0
  %1605 = vst.msk [vmem:[#allocation4 + $0xf0] sm:$0x1] %vm1589, 0.0
  %1606 = vst.msk [vmem:[#allocation4 + $0x100] sm:$0x1] %vm1589, 0.0
  %1607 = vst.msk [vmem:[#allocation4 + $0x110] sm:$0x1] %vm1589, 0.0
  %1608 = vst.msk [vmem:[#allocation4 + $0x120] sm:$0x1] %vm1589, 0.0
  %1609 = vst.msk [vmem:[#allocation4 + $0x130] sm:$0x1] %vm1589, 0.0
  %1610 = vst.msk [vmem:[#allocation4 + $0x9] sm:$0x1] %vm1589, 0.0
  %1611 = vst.msk [vmem:[#allocation4 + $0x19] sm:$0x1] %vm1589, 0.0
  %1612 = vst.msk [vmem:[#allocation4 + $0x29] sm:$0x1] %vm1589, 0.0
  %1613 = vst.msk [vmem:[#allocation4 + $0x39] sm:$0x1] %vm1589, 0.0
  %1614 = vst.msk [vmem:[#allocation4 + $0x49] sm:$0x1] %vm1589, 0.0
  %1615 = vst.msk [vmem:[#allocation4 + $0x59] sm:$0x1] %vm1589, 0.0
  %1616 = vst.msk [vmem:[#allocation4 + $0x69] sm:$0x1] %vm1589, 0.0
  %1617 = vst.msk [vmem:[#allocation4 + $0x79] sm:$0x1] %vm1589, 0.0
  %1618 = vst.msk [vmem:[#allocation4 + $0x89] sm:$0x1] %vm1589, 0.0
  %1619 = vst.msk [vmem:[#allocation4 + $0x99] sm:$0x1] %vm1589, 0.0
  %1620 = vst.msk [vmem:[#allocation4 + $0xa9] sm:$0x1] %vm1589, 0.0
  %1621 = vst.msk [vmem:[#allocation4 + $0xb9] sm:$0x1] %vm1589, 0.0
  %1622 = vst.msk [vmem:[#allocation4 + $0xc9] sm:$0x1] %vm1589, 0.0
  %1623 = vst.msk [vmem:[#allocation4 + $0xd9] sm:$0x1] %vm1589, 0.0
  %1624 = vst.msk [vmem:[#allocation4 + $0xe9] sm:$0x1] %vm1589, 0.0
  %1625 = vst.msk [vmem:[#allocation4 + $0xf9] sm:$0x1] %vm1589, 0.0
  %1626 = vst.msk [vmem:[#allocation4 + $0x109] sm:$0x1] %vm1589, 0.0
  %1627 = vst.msk [vmem:[#allocation4 + $0x119] sm:$0x1] %vm1589, 0.0
  %1628 = vst.msk [vmem:[#allocation4 + $0x129] sm:$0x1] %vm1589, 0.0
  %1629 = vst.msk [vmem:[#allocation4 + $0x139] sm:$0x1] %vm1589, 0.0
  %s1630 = scalar_lea.vmem [#allocation4], 16
  %1631 = vst.msk [vmem:[%s1630 + $0x1] sm:$0xff] %vm1578, %v1562
  %1632 = vst.msk [vmem:[%s1630 + $0x11] sm:$0xff] %vm1578, %v1563
  %1633 = vst.msk [vmem:[%s1630 + $0x21] sm:$0xff] %vm1578, %v1564
  %1634 = vst.msk [vmem:[%s1630 + $0x31] sm:$0xff] %vm1578, %v1565
  %1635 = vst.msk [vmem:[%s1630 + $0x41] sm:$0xff] %vm1578, %v1566
  %1636 = vst.msk [vmem:[%s1630 + $0x51] sm:$0xff] %vm1578, %v1567
  %1637 = vst.msk [vmem:[%s1630 + $0x61] sm:$0xff] %vm1578, %v1568
  %1638 = vst.msk [vmem:[%s1630 + $0x71] sm:$0xff] %vm1578, %v1569
  %1639 = vst.msk [vmem:[%s1630 + $0xa1] sm:$0xff] %vm1578, %v1570
  %1640 = vst.msk [vmem:[%s1630 + $0xb1] sm:$0xff] %vm1578, %v1571
  %1641 = vst.msk [vmem:[%s1630 + $0xc1] sm:$0xff] %vm1578, %v1572
  %1642 = vst.msk [vmem:[%s1630 + $0xd1] sm:$0xff] %vm1578, %v1573
  %1643 = vst.msk [vmem:[%s1630 + $0xe1] sm:$0xff] %vm1578, %v1574
  %1644 = vst.msk [vmem:[%s1630 + $0xf1] sm:$0xff] %vm1578, %v1575
  %1645 = vst.msk [vmem:[%s1630 + $0x101] sm:$0xff] %vm1578, %v1576
  %1646 = vst.msk [vmem:[%s1630 + $0x111] sm:$0xff] %vm1578, %v1577
  %v1647 = vld [vmem:[#allocation4] sm:$0xff]
  %v1648 = vld [vmem:[#allocation4 + $0x10] sm:$0xff]
  %v1649 = vld [vmem:[#allocation4 + $0x20] sm:$0xff]
  %v1650 = vld [vmem:[#allocation4 + $0x30] sm:$0xff]
  %v1651 = vld [vmem:[#allocation4 + $0x40] sm:$0xff]
  %v1652 = vld [vmem:[#allocation4 + $0x50] sm:$0xff]
  %v1653 = vld [vmem:[#allocation4 + $0x60] sm:$0xff]
  %v1654 = vld [vmem:[#allocation4 + $0x70] sm:$0xff]
  %v1655 = vld [vmem:[#allocation4 + $0xa0] sm:$0xff]
  %v1656 = vld [vmem:[#allocation4 + $0xb0] sm:$0xff]
  %v1657 = vld [vmem:[#allocation4 + $0xc0] sm:$0xff]
  %v1658 = vld [vmem:[#allocation4 + $0xd0] sm:$0xff]
  %v1659 = vld [vmem:[#allocation4 + $0xe0] sm:$0xff]
  %v1660 = vld [vmem:[#allocation4 + $0xf0] sm:$0xff]
  %v1661 = vld [vmem:[#allocation4 + $0x100] sm:$0xff]
  %v1662 = vld [vmem:[#allocation4 + $0x110] sm:$0xff]
  %1663 = vxpose.xlu0.b32.start [1/16] %v1647, 128
  %1664 = vxpose.xlu0.b32.cont [2/16] %v1648, 128
  %1665 = vxpose.xlu0.b32.cont [3/16] %v1649, 128
  %1666 = vxpose.xlu0.b32.cont [4/16] %v1650, 128
  %1667 = vxpose.xlu0.b32.cont [5/16] %v1651, 128
  %1668 = vxpose.xlu0.b32.cont [6/16] %v1652, 128
  %1669 = vxpose.xlu0.b32.cont [7/16] %v1653, 128
  %1670 = vxpose.xlu0.b32.cont [8/16] %v1654, 128
  %1671 = vxpose.xlu0.b32.cont [9/16] %v1655, 128
  %1672 = vxpose.xlu0.b32.cont [10/16] %v1656, 128
  %1673 = vxpose.xlu0.b32.cont [11/16] %v1657, 128
  %1674 = vxpose.xlu0.b32.cont [12/16] %v1658, 128
  %1675 = vxpose.xlu0.b32.cont [13/16] %v1659, 128
  %1676 = vxpose.xlu0.b32.cont [14/16] %v1660, 128
  %1677 = vxpose.xlu0.b32.cont [15/16] %v1661, 128
  %1678 = vxpose.xlu0.b32.end [16/16] %v1662, 128
  %v1679 = vpop.trf.xlu0
  %v1680 = vpop.trf.xlu0
  %v1681 = vpop.trf.xlu0
  %v1682 = vpop.trf.xlu0
  %v1683 = vpop.trf.xlu0
  %v1684 = vpop.trf.xlu0
  %v1685 = vpop.trf.xlu0
  %v1686 = vpop.trf.xlu0
  %v1687 = vpop.trf.xlu0
  %v1688 = vpop.trf.xlu0
  %v1689 = vpop.trf.xlu0
  %v1690 = vpop.trf.xlu0
  %v1691 = vpop.trf.xlu0
  %v1692 = vpop.trf.xlu0
  %v1693 = vpop.trf.xlu0
  %v1694 = vpop.trf.xlu0
  %1695 = vst [vmem:[#allocation5] sm:$0xff] %v1679
  %v1696 = vld [vmem:[#allocation4 + $0x1] sm:$0xff]
  %v1697 = vld [vmem:[#allocation4 + $0x11] sm:$0xff]
  %v1698 = vld [vmem:[#allocation4 + $0x21] sm:$0xff]
  %v1699 = vld [vmem:[#allocation4 + $0x31] sm:$0xff]
  %v1700 = vld [vmem:[#allocation4 + $0x41] sm:$0xff]
  %v1701 = vld [vmem:[#allocation4 + $0x51] sm:$0xff]
  %v1702 = vld [vmem:[#allocation4 + $0x61] sm:$0xff]
  %v1703 = vld [vmem:[#allocation4 + $0x71] sm:$0xff]
  %v1704 = vld [vmem:[#allocation4 + $0xa1] sm:$0xff]
  %v1705 = vld [vmem:[#allocation4 + $0xb1] sm:$0xff]
  %v1706 = vld [vmem:[#allocation4 + $0xc1] sm:$0xff]
  %v1707 = vld [vmem:[#allocation4 + $0xd1] sm:$0xff]
  %v1708 = vld [vmem:[#allocation4 + $0xe1] sm:$0xff]
  %v1709 = vld [vmem:[#allocation4 + $0xf1] sm:$0xff]
  %v1710 = vld [vmem:[#allocation4 + $0x101] sm:$0xff]
  %v1711 = vld [vmem:[#allocation4 + $0x111] sm:$0xff]
  %1712 = vxpose.xlu0.b32.start [1/16] %v1696, 128
  %1713 = vxpose.xlu0.b32.cont [2/16] %v1697, 128
  %1714 = vxpose.xlu0.b32.cont [3/16] %v1698, 128
  %1715 = vxpose.xlu0.b32.cont [4/16] %v1699, 128
  %1716 = vxpose.xlu0.b32.cont [5/16] %v1700, 128
  %1717 = vxpose.xlu0.b32.cont [6/16] %v1701, 128
  %1718 = vxpose.xlu0.b32.cont [7/16] %v1702, 128
  %1719 = vxpose.xlu0.b32.cont [8/16] %v1703, 128
  %1720 = vxpose.xlu0.b32.cont [9/16] %v1704, 128
  %1721 = vxpose.xlu0.b32.cont [10/16] %v1705, 128
  %1722 = vxpose.xlu0.b32.cont [11/16] %v1706, 128
  %1723 = vxpose.xlu0.b32.cont [12/16] %v1707, 128
  %1724 = vxpose.xlu0.b32.cont [13/16] %v1708, 128
  %1725 = vxpose.xlu0.b32.cont [14/16] %v1709, 128
  %1726 = vxpose.xlu0.b32.cont [15/16] %v1710, 128
  %1727 = vxpose.xlu0.b32.end [16/16] %v1711, 128
  %v1728 = vpop.trf.xlu0
  %v1729 = vpop.trf.xlu0
  %v1730 = vpop.trf.xlu0
  %v1731 = vpop.trf.xlu0
  %v1732 = vpop.trf.xlu0
  %v1733 = vpop.trf.xlu0
  %v1734 = vpop.trf.xlu0
  %v1735 = vpop.trf.xlu0
  %v1736 = vpop.trf.xlu0
  %v1737 = vpop.trf.xlu0
  %v1738 = vpop.trf.xlu0
  %v1739 = vpop.trf.xlu0
  %v1740 = vpop.trf.xlu0
  %v1741 = vpop.trf.xlu0
  %v1742 = vpop.trf.xlu0
  %v1743 = vpop.trf.xlu0
  %1744 = vst [vmem:[#allocation5 + $0x8] sm:$0xff] %v1728
  %v1745 = vld [vmem:[#allocation4 + $0x2] sm:$0xff]
  %v1746 = vld [vmem:[#allocation4 + $0x12] sm:$0xff]
  %v1747 = vld [vmem:[#allocation4 + $0x22] sm:$0xff]
  %v1748 = vld [vmem:[#allocation4 + $0x32] sm:$0xff]
  %v1749 = vld [vmem:[#allocation4 + $0x42] sm:$0xff]
  %v1750 = vld [vmem:[#allocation4 + $0x52] sm:$0xff]
  %v1751 = vld [vmem:[#allocation4 + $0x62] sm:$0xff]
  %v1752 = vld [vmem:[#allocation4 + $0x72] sm:$0xff]
  %v1753 = vld [vmem:[#allocation4 + $0xa2] sm:$0xff]
  %v1754 = vld [vmem:[#allocation4 + $0xb2] sm:$0xff]
  %v1755 = vld [vmem:[#allocation4 + $0xc2] sm:$0xff]
  %v1756 = vld [vmem:[#allocation4 + $0xd2] sm:$0xff]
  %v1757 = vld [vmem:[#allocation4 + $0xe2] sm:$0xff]
  %v1758 = vld [vmem:[#allocation4 + $0xf2] sm:$0xff]
  %v1759 = vld [vmem:[#allocation4 + $0x102] sm:$0xff]
  %v1760 = vld [vmem:[#allocation4 + $0x112] sm:$0xff]
  %1761 = vxpose.xlu0.b32.start [1/16] %v1745, 128
  %1762 = vxpose.xlu0.b32.cont [2/16] %v1746, 128
  %1763 = vxpose.xlu0.b32.cont [3/16] %v1747, 128
  %1764 = vxpose.xlu0.b32.cont [4/16] %v1748, 128
  %1765 = vxpose.xlu0.b32.cont [5/16] %v1749, 128
  %1766 = vxpose.xlu0.b32.cont [6/16] %v1750, 128
  %1767 = vxpose.xlu0.b32.cont [7/16] %v1751, 128
  %1768 = vxpose.xlu0.b32.cont [8/16] %v1752, 128
  %1769 = vxpose.xlu0.b32.cont [9/16] %v1753, 128
  %1770 = vxpose.xlu0.b32.cont [10/16] %v1754, 128
  %1771 = vxpose.xlu0.b32.cont [11/16] %v1755, 128
  %1772 = vxpose.xlu0.b32.cont [12/16] %v1756, 128
  %1773 = vxpose.xlu0.b32.cont [13/16] %v1757, 128
  %1774 = vxpose.xlu0.b32.cont [14/16] %v1758, 128
  %1775 = vxpose.xlu0.b32.cont [15/16] %v1759, 128
  %1776 = vxpose.xlu0.b32.end [16/16] %v1760, 128
  %v1777 = vpop.trf.xlu0
  %v1778 = vpop.trf.xlu0
  %v1779 = vpop.trf.xlu0
  %v1780 = vpop.trf.xlu0
  %v1781 = vpop.trf.xlu0
  %v1782 = vpop.trf.xlu0
  %v1783 = vpop.trf.xlu0
  %v1784 = vpop.trf.xlu0
  %v1785 = vpop.trf.xlu0
  %v1786 = vpop.trf.xlu0
  %v1787 = vpop.trf.xlu0
  %v1788 = vpop.trf.xlu0
  %v1789 = vpop.trf.xlu0
  %v1790 = vpop.trf.xlu0
  %v1791 = vpop.trf.xlu0
  %v1792 = vpop.trf.xlu0
  %1793 = vst [vmem:[#allocation5 + $0x10] sm:$0xff] %v1777
  %v1794 = vld [vmem:[%s1630] sm:$0xff]
  %v1795 = vld [vmem:[%s1630 + $0x10] sm:$0xff]
  %v1796 = vld [vmem:[%s1630 + $0x20] sm:$0xff]
  %v1797 = vld [vmem:[%s1630 + $0x30] sm:$0xff]
  %v1798 = vld [vmem:[%s1630 + $0x40] sm:$0xff]
  %v1799 = vld [vmem:[%s1630 + $0x50] sm:$0xff]
  %v1800 = vld [vmem:[%s1630 + $0x60] sm:$0xff]
  %v1801 = vld [vmem:[%s1630 + $0x70] sm:$0xff]
  %v1802 = vld [vmem:[%s1630 + $0xa0] sm:$0xff]
  %v1803 = vld [vmem:[%s1630 + $0xb0] sm:$0xff]
  %v1804 = vld [vmem:[%s1630 + $0xc0] sm:$0xff]
  %v1805 = vld [vmem:[%s1630 + $0xd0] sm:$0xff]
  %v1806 = vld [vmem:[%s1630 + $0xe0] sm:$0xff]
  %v1807 = vld [vmem:[%s1630 + $0xf0] sm:$0xff]
  %v1808 = vld [vmem:[%s1630 + $0x100] sm:$0xff]
  %v1809 = vld [vmem:[%s1630 + $0x110] sm:$0xff]
  %1810 = vxpose.xlu0.b32.start [1/16] %v1794, 128
  %1811 = vxpose.xlu0.b32.cont [2/16] %v1795, 128
  %1812 = vxpose.xlu0.b32.cont [3/16] %v1796, 128
  %1813 = vxpose.xlu0.b32.cont [4/16] %v1797, 128
  %1814 = vxpose.xlu0.b32.cont [5/16] %v1798, 128
  %1815 = vxpose.xlu0.b32.cont [6/16] %v1799, 128
  %1816 = vxpose.xlu0.b32.cont [7/16] %v1800, 128
  %1817 = vxpose.xlu0.b32.cont [8/16] %v1801, 128
  %1818 = vxpose.xlu0.b32.cont [9/16] %v1802, 128
  %1819 = vxpose.xlu0.b32.cont [10/16] %v1803, 128
  %1820 = vxpose.xlu0.b32.cont [11/16] %v1804, 128
  %1821 = vxpose.xlu0.b32.cont [12/16] %v1805, 128
  %1822 = vxpose.xlu0.b32.cont [13/16] %v1806, 128
  %1823 = vxpose.xlu0.b32.cont [14/16] %v1807, 128
  %1824 = vxpose.xlu0.b32.cont [15/16] %v1808, 128
  %1825 = vxpose.xlu0.b32.end [16/16] %v1809, 128
  %v1826 = vpop.trf.xlu0
  %v1827 = vpop.trf.xlu0
  %v1828 = vpop.trf.xlu0
  %v1829 = vpop.trf.xlu0
  %v1830 = vpop.trf.xlu0
  %v1831 = vpop.trf.xlu0
  %v1832 = vpop.trf.xlu0
  %v1833 = vpop.trf.xlu0
  %v1834 = vpop.trf.xlu0
  %v1835 = vpop.trf.xlu0
  %v1836 = vpop.trf.xlu0
  %v1837 = vpop.trf.xlu0
  %v1838 = vpop.trf.xlu0
  %v1839 = vpop.trf.xlu0
  %v1840 = vpop.trf.xlu0
  %v1841 = vpop.trf.xlu0
  %1842 = vst [vmem:[#allocation5 + $0x18] sm:$0xff] %v1826
  %v1843 = vld [vmem:[%s1630 + $0x1] sm:$0xff]
  %v1844 = vld [vmem:[%s1630 + $0x11] sm:$0xff]
  %v1845 = vld [vmem:[%s1630 + $0x21] sm:$0xff]
  %v1846 = vld [vmem:[%s1630 + $0x31] sm:$0xff]
  %v1847 = vld [vmem:[%s1630 + $0x41] sm:$0xff]
  %v1848 = vld [vmem:[%s1630 + $0x51] sm:$0xff]
  %v1849 = vld [vmem:[%s1630 + $0x61] sm:$0xff]
  %v1850 = vld [vmem:[%s1630 + $0x71] sm:$0xff]
  %v1851 = vld [vmem:[%s1630 + $0xa1] sm:$0xff]
  %v1852 = vld [vmem:[%s1630 + $0xb1] sm:$0xff]
  %v1853 = vld [vmem:[%s1630 + $0xc1] sm:$0xff]
  %v1854 = vld [vmem:[%s1630 + $0xd1] sm:$0xff]
  %v1855 = vld [vmem:[%s1630 + $0xe1] sm:$0xff]
  %v1856 = vld [vmem:[%s1630 + $0xf1] sm:$0xff]
  %v1857 = vld [vmem:[%s1630 + $0x101] sm:$0xff]
  %v1858 = vld [vmem:[%s1630 + $0x111] sm:$0xff]
  %1859 = vxpose.xlu0.b32.start [1/16] %v1843, 128
  %1860 = vxpose.xlu0.b32.cont [2/16] %v1844, 128
  %1861 = vxpose.xlu0.b32.cont [3/16] %v1845, 128
  %1862 = vxpose.xlu0.b32.cont [4/16] %v1846, 128
  %1863 = vxpose.xlu0.b32.cont [5/16] %v1847, 128
  %1864 = vxpose.xlu0.b32.cont [6/16] %v1848, 128
  %1865 = vxpose.xlu0.b32.cont [7/16] %v1849, 128
  %1866 = vxpose.xlu0.b32.cont [8/16] %v1850, 128
  %1867 = vxpose.xlu0.b32.cont [9/16] %v1851, 128
  %1868 = vxpose.xlu0.b32.cont [10/16] %v1852, 128
  %1869 = vxpose.xlu0.b32.cont [11/16] %v1853, 128
  %1870 = vxpose.xlu0.b32.cont [12/16] %v1854, 128
  %1871 = vxpose.xlu0.b32.cont [13/16] %v1855, 128
  %1872 = vxpose.xlu0.b32.cont [14/16] %v1856, 128
  %1873 = vxpose.xlu0.b32.cont [15/16] %v1857, 128
  %1874 = vxpose.xlu0.b32.end [16/16] %v1858, 128
  %v1875 = vpop.trf.xlu0
  %v1876 = vpop.trf.xlu0
  %v1877 = vpop.trf.xlu0
  %v1878 = vpop.trf.xlu0
  %v1879 = vpop.trf.xlu0
  %v1880 = vpop.trf.xlu0
  %v1881 = vpop.trf.xlu0
  %v1882 = vpop.trf.xlu0
  %v1883 = vpop.trf.xlu0
  %v1884 = vpop.trf.xlu0
  %v1885 = vpop.trf.xlu0
  %v1886 = vpop.trf.xlu0
  %v1887 = vpop.trf.xlu0
  %v1888 = vpop.trf.xlu0
  %v1889 = vpop.trf.xlu0
  %v1890 = vpop.trf.xlu0
  %1891 = vst [vmem:[#allocation5 + $0x20] sm:$0xff] %v1875
  %v1892 = vld [vmem:[%s1630 + $0x2] sm:$0xff]
  %v1893 = vld [vmem:[%s1630 + $0x12] sm:$0xff]
  %v1894 = vld [vmem:[%s1630 + $0x22] sm:$0xff]
  %v1895 = vld [vmem:[%s1630 + $0x32] sm:$0xff]
  %v1896 = vld [vmem:[%s1630 + $0x42] sm:$0xff]
  %v1897 = vld [vmem:[%s1630 + $0x52] sm:$0xff]
  %v1898 = vld [vmem:[%s1630 + $0x62] sm:$0xff]
  %v1899 = vld [vmem:[%s1630 + $0x72] sm:$0xff]
  %v1900 = vld [vmem:[%s1630 + $0xa2] sm:$0xff]
  %v1901 = vld [vmem:[%s1630 + $0xb2] sm:$0xff]
  %v1902 = vld [vmem:[%s1630 + $0xc2] sm:$0xff]
  %v1903 = vld [vmem:[%s1630 + $0xd2] sm:$0xff]
  %v1904 = vld [vmem:[%s1630 + $0xe2] sm:$0xff]
  %v1905 = vld [vmem:[%s1630 + $0xf2] sm:$0xff]
  %v1906 = vld [vmem:[%s1630 + $0x102] sm:$0xff]
  %v1907 = vld [vmem:[%s1630 + $0x112] sm:$0xff]
  %1908 = vxpose.xlu0.b32.start [1/16] %v1892, 128
  %1909 = vxpose.xlu0.b32.cont [2/16] %v1893, 128
  %1910 = vxpose.xlu0.b32.cont [3/16] %v1894, 128
  %1911 = vxpose.xlu0.b32.cont [4/16] %v1895, 128
  %1912 = vxpose.xlu0.b32.cont [5/16] %v1896, 128
  %1913 = vxpose.xlu0.b32.cont [6/16] %v1897, 128
  %1914 = vxpose.xlu0.b32.cont [7/16] %v1898, 128
  %1915 = vxpose.xlu0.b32.cont [8/16] %v1899, 128
  %1916 = vxpose.xlu0.b32.cont [9/16] %v1900, 128
  %1917 = vxpose.xlu0.b32.cont [10/16] %v1901, 128
  %1918 = vxpose.xlu0.b32.cont [11/16] %v1902, 128
  %1919 = vxpose.xlu0.b32.cont [12/16] %v1903, 128
  %1920 = vxpose.xlu0.b32.cont [13/16] %v1904, 128
  %1921 = vxpose.xlu0.b32.cont [14/16] %v1905, 128
  %1922 = vxpose.xlu0.b32.cont [15/16] %v1906, 128
  %1923 = vxpose.xlu0.b32.end [16/16] %v1907, 128
  %v1924 = vpop.trf.xlu0
  %v1925 = vpop.trf.xlu0
  %v1926 = vpop.trf.xlu0
  %v1927 = vpop.trf.xlu0
  %v1928 = vpop.trf.xlu0
  %v1929 = vpop.trf.xlu0
  %v1930 = vpop.trf.xlu0
  %v1931 = vpop.trf.xlu0
  %v1932 = vpop.trf.xlu0
  %v1933 = vpop.trf.xlu0
  %v1934 = vpop.trf.xlu0
  %v1935 = vpop.trf.xlu0
  %v1936 = vpop.trf.xlu0
  %v1937 = vpop.trf.xlu0
  %v1938 = vpop.trf.xlu0
  %v1939 = vpop.trf.xlu0
  %1940 = vst [vmem:[#allocation5 + $0x28] sm:$0xff] %v1924
  %s1941 = scalar_lea.vmem [#allocation4], 32
  %v1942 = vld [vmem:[%s1941] sm:$0xff]
  %v1943 = vld [vmem:[%s1941 + $0x10] sm:$0xff]
  %v1944 = vld [vmem:[%s1941 + $0x20] sm:$0xff]
  %v1945 = vld [vmem:[%s1941 + $0x30] sm:$0xff]
  %v1946 = vld [vmem:[%s1941 + $0x40] sm:$0xff]
  %v1947 = vld [vmem:[%s1941 + $0x50] sm:$0xff]
  %v1948 = vld [vmem:[%s1941 + $0x60] sm:$0xff]
  %v1949 = vld [vmem:[%s1941 + $0x70] sm:$0xff]
  %v1950 = vld [vmem:[%s1941 + $0xa0] sm:$0xff]
  %v1951 = vld [vmem:[%s1941 + $0xb0] sm:$0xff]
  %v1952 = vld [vmem:[%s1941 + $0xc0] sm:$0xff]
  %v1953 = vld [vmem:[%s1941 + $0xd0] sm:$0xff]
  %v1954 = vld [vmem:[%s1941 + $0xe0] sm:$0xff]
  %v1955 = vld [vmem:[%s1941 + $0xf0] sm:$0xff]
  %v1956 = vld [vmem:[%s1941 + $0x100] sm:$0xff]
  %v1957 = vld [vmem:[%s1941 + $0x110] sm:$0xff]
  %1958 = vxpose.xlu0.b32.start [1/16] %v1942, 128
  %1959 = vxpose.xlu0.b32.cont [2/16] %v1943, 128
  %1960 = vxpose.xlu0.b32.cont [3/16] %v1944, 128
  %1961 = vxpose.xlu0.b32.cont [4/16] %v1945, 128
  %1962 = vxpose.xlu0.b32.cont [5/16] %v1946, 128
  %1963 = vxpose.xlu0.b32.cont [6/16] %v1947, 128
  %1964 = vxpose.xlu0.b32.cont [7/16] %v1948, 128
  %1965 = vxpose.xlu0.b32.cont [8/16] %v1949, 128
  %1966 = vxpose.xlu0.b32.cont [9/16] %v1950, 128
  %1967 = vxpose.xlu0.b32.cont [10/16] %v1951, 128
  %1968 = vxpose.xlu0.b32.cont [11/16] %v1952, 128
  %1969 = vxpose.xlu0.b32.cont [12/16] %v1953, 128
  %1970 = vxpose.xlu0.b32.cont [13/16] %v1954, 128
  %1971 = vxpose.xlu0.b32.cont [14/16] %v1955, 128
  %1972 = vxpose.xlu0.b32.cont [15/16] %v1956, 128
  %1973 = vxpose.xlu0.b32.end [16/16] %v1957, 128
  %v1974 = vpop.trf.xlu0
  %v1975 = vpop.trf.xlu0
  %v1976 = vpop.trf.xlu0
  %v1977 = vpop.trf.xlu0
  %v1978 = vpop.trf.xlu0
  %v1979 = vpop.trf.xlu0
  %v1980 = vpop.trf.xlu0
  %v1981 = vpop.trf.xlu0
  %v1982 = vpop.trf.xlu0
  %v1983 = vpop.trf.xlu0
  %v1984 = vpop.trf.xlu0
  %v1985 = vpop.trf.xlu0
  %v1986 = vpop.trf.xlu0
  %v1987 = vpop.trf.xlu0
  %v1988 = vpop.trf.xlu0
  %v1989 = vpop.trf.xlu0
  %1990 = vst [vmem:[#allocation5 + $0x30] sm:$0xff] %v1974
  %v1991 = vld [vmem:[%s1941 + $0x1] sm:$0xff]
  %v1992 = vld [vmem:[%s1941 + $0x11] sm:$0xff]
  %v1993 = vld [vmem:[%s1941 + $0x21] sm:$0xff]
  %v1994 = vld [vmem:[%s1941 + $0x31] sm:$0xff]
  %v1995 = vld [vmem:[%s1941 + $0x41] sm:$0xff]
  %v1996 = vld [vmem:[%s1941 + $0x51] sm:$0xff]
  %v1997 = vld [vmem:[%s1941 + $0x61] sm:$0xff]
  %v1998 = vld [vmem:[%s1941 + $0x71] sm:$0xff]
  %v1999 = vld [vmem:[%s1941 + $0xa1] sm:$0xff]
  %v2000 = vld [vmem:[%s1941 + $0xb1] sm:$0xff]
  %v2001 = vld [vmem:[%s1941 + $0xc1] sm:$0xff]
  %v2002 = vld [vmem:[%s1941 + $0xd1] sm:$0xff]
  %v2003 = vld [vmem:[%s1941 + $0xe1] sm:$0xff]
  %v2004 = vld [vmem:[%s1941 + $0xf1] sm:$0xff]
  %v2005 = vld [vmem:[%s1941 + $0x101] sm:$0xff]
  %v2006 = vld [vmem:[%s1941 + $0x111] sm:$0xff]
  %2007 = vxpose.xlu0.b32.start [1/16] %v1991, 128
  %2008 = vxpose.xlu0.b32.cont [2/16] %v1992, 128
  %2009 = vxpose.xlu0.b32.cont [3/16] %v1993, 128
  %2010 = vxpose.xlu0.b32.cont [4/16] %v1994, 128
  %2011 = vxpose.xlu0.b32.cont [5/16] %v1995, 128
  %2012 = vxpose.xlu0.b32.cont [6/16] %v1996, 128
  %2013 = vxpose.xlu0.b32.cont [7/16] %v1997, 128
  %2014 = vxpose.xlu0.b32.cont [8/16] %v1998, 128
  %2015 = vxpose.xlu0.b32.cont [9/16] %v1999, 128
  %2016 = vxpose.xlu0.b32.cont [10/16] %v2000, 128
  %2017 = vxpose.xlu0.b32.cont [11/16] %v2001, 128
  %2018 = vxpose.xlu0.b32.cont [12/16] %v2002, 128
  %2019 = vxpose.xlu0.b32.cont [13/16] %v2003, 128
  %2020 = vxpose.xlu0.b32.cont [14/16] %v2004, 128
  %2021 = vxpose.xlu0.b32.cont [15/16] %v2005, 128
  %2022 = vxpose.xlu0.b32.end [16/16] %v2006, 128
  %v2023 = vpop.trf.xlu0
  %v2024 = vpop.trf.xlu0
  %v2025 = vpop.trf.xlu0
  %v2026 = vpop.trf.xlu0
  %v2027 = vpop.trf.xlu0
  %v2028 = vpop.trf.xlu0
  %v2029 = vpop.trf.xlu0
  %v2030 = vpop.trf.xlu0
  %v2031 = vpop.trf.xlu0
  %v2032 = vpop.trf.xlu0
  %v2033 = vpop.trf.xlu0
  %v2034 = vpop.trf.xlu0
  %v2035 = vpop.trf.xlu0
  %v2036 = vpop.trf.xlu0
  %v2037 = vpop.trf.xlu0
  %v2038 = vpop.trf.xlu0
  %2039 = vst [vmem:[#allocation5 + $0x38] sm:$0xff] %v2023
  %v2040 = vld [vmem:[%s1941 + $0x2] sm:$0xff]
  %v2041 = vld [vmem:[%s1941 + $0x12] sm:$0xff]
  %v2042 = vld [vmem:[%s1941 + $0x22] sm:$0xff]
  %v2043 = vld [vmem:[%s1941 + $0x32] sm:$0xff]
  %v2044 = vld [vmem:[%s1941 + $0x42] sm:$0xff]
  %v2045 = vld [vmem:[%s1941 + $0x52] sm:$0xff]
  %v2046 = vld [vmem:[%s1941 + $0x62] sm:$0xff]
  %v2047 = vld [vmem:[%s1941 + $0x72] sm:$0xff]
  %v2048 = vld [vmem:[%s1941 + $0xa2] sm:$0xff]
  %v2049 = vld [vmem:[%s1941 + $0xb2] sm:$0xff]
  %v2050 = vld [vmem:[%s1941 + $0xc2] sm:$0xff]
  %v2051 = vld [vmem:[%s1941 + $0xd2] sm:$0xff]
  %v2052 = vld [vmem:[%s1941 + $0xe2] sm:$0xff]
  %v2053 = vld [vmem:[%s1941 + $0xf2] sm:$0xff]
  %v2054 = vld [vmem:[%s1941 + $0x102] sm:$0xff]
  %v2055 = vld [vmem:[%s1941 + $0x112] sm:$0xff]
  %2056 = vxpose.xlu0.b32.start [1/16] %v2040, 128
  %2057 = vxpose.xlu0.b32.cont [2/16] %v2041, 128
  %2058 = vxpose.xlu0.b32.cont [3/16] %v2042, 128
  %2059 = vxpose.xlu0.b32.cont [4/16] %v2043, 128
  %2060 = vxpose.xlu0.b32.cont [5/16] %v2044, 128
  %2061 = vxpose.xlu0.b32.cont [6/16] %v2045, 128
  %2062 = vxpose.xlu0.b32.cont [7/16] %v2046, 128
  %2063 = vxpose.xlu0.b32.cont [8/16] %v2047, 128
  %2064 = vxpose.xlu0.b32.cont [9/16] %v2048, 128
  %2065 = vxpose.xlu0.b32.cont [10/16] %v2049, 128
  %2066 = vxpose.xlu0.b32.cont [11/16] %v2050, 128
  %2067 = vxpose.xlu0.b32.cont [12/16] %v2051, 128
  %2068 = vxpose.xlu0.b32.cont [13/16] %v2052, 128
  %2069 = vxpose.xlu0.b32.cont [14/16] %v2053, 128
  %2070 = vxpose.xlu0.b32.cont [15/16] %v2054, 128
  %2071 = vxpose.xlu0.b32.end [16/16] %v2055, 128
  %v2072 = vpop.trf.xlu0
  %v2073 = vpop.trf.xlu0
  %v2074 = vpop.trf.xlu0
  %v2075 = vpop.trf.xlu0
  %v2076 = vpop.trf.xlu0
  %v2077 = vpop.trf.xlu0
  %v2078 = vpop.trf.xlu0
  %v2079 = vpop.trf.xlu0
  %v2080 = vpop.trf.xlu0
  %v2081 = vpop.trf.xlu0
  %v2082 = vpop.trf.xlu0
  %v2083 = vpop.trf.xlu0
  %v2084 = vpop.trf.xlu0
  %v2085 = vpop.trf.xlu0
  %v2086 = vpop.trf.xlu0
  %v2087 = vpop.trf.xlu0
  %2088 = vst [vmem:[#allocation5 + $0x40] sm:$0xff] %v2072
  %v2089 = vld [vmem:[%s6] sm:$0xf]
  %v2090 = vld [vmem:[#allocation5] sm:$0xff]
  %v2091 = vld [vmem:[#allocation5 + $0x8] sm:$0xff]
  %v2092 = vld [vmem:[#allocation5 + $0x10] sm:$0xff]
  %v2093 = vld [vmem:[#allocation5 + $0x18] sm:$0xff]
  %v2094 = vld [vmem:[#allocation5 + $0x20] sm:$0xff]
  %v2095 = vld [vmem:[#allocation5 + $0x28] sm:$0xff]
  %v2096 = vld [vmem:[#allocation5 + $0x30] sm:$0xff]
  %v2097 = vld [vmem:[#allocation5 + $0x38] sm:$0xff]
  %v2098 = vld [vmem:[#allocation5 + $0x40] sm:$0xff]
  %v2099 = vpack.c.bf16 %v2091, %v2090
  %v2100 = vpack.c.bf16 %v2093, %v2092
  %v2101 = vpack.c.bf16 %v2095, %v2094
  %v2102 = vpack.c.bf16 %v2097, %v2096
  %v2103 = vpack.c.bf16 %v2098, %v2098
  %vm2104 = vcmask 588800
  %v2106 = vsel %vm2104, %v2089, 0
  %vm2108 = vcmask 1043456
  %v2110 = vsel %vm2108, %v2103, 0
  %2112 = vmatprep.subr.bf16.mxu0 0
  %2113 = vmatpush1.bf16.msra.mxu0 %v2099
  %2114 = vmatprep.subr.bf16.mxu0 0
  %2115 = vmatpush1.bf16.msra.mxu0 %v2100
  %2116 = vmatprep.subr.bf16.mxu0 0
  %2117 = vmatpush1.bf16.msra.mxu0 %v2101
  %2118 = vmatprep.subr.bf16.mxu0 0
  %2119 = vmatpush1.bf16.msra.mxu0 %v2102
  %2120 = vmatprep.subr.bf16.mxu0 0
  %2121 = vmatpush1.bf16.msra.mxu0 %v2110
  %2122 = vmatprep.subr.bf16.mxu0 0
  %2123 = vmatpush1.bf16.msra.mxu0 0
  %2124 = vmatprep.subr.bf16.mxu0 0
  %2125 = vmatpush1.bf16.msra.mxu0 0
  %2126 = vmatprep.subr.bf16.mxu0 0
  %2127 = vmatpush1.bf16.msra.mxu0 0
  %2128 = vmatprep.subr.bf16.mxu0 0
  %2129 = vmatpush1.bf16.msra.mxu0 0
  %2130 = vmatprep.subr.bf16.mxu0 0
  %2131 = vmatpush1.bf16.msra.mxu0 0
  %2132 = vmatprep.subr.bf16.mxu0 0
  %2133 = vmatpush1.bf16.msra.mxu0 0
  %2134 = vmatprep.subr.bf16.mxu0 0
  %2135 = vmatpush1.bf16.msra.mxu0 0
  %2136 = vmatprep.subr.bf16.mxu0 0
  %2137 = vmatpush1.bf16.msra.mxu0 0
  %2138 = vmatprep.subr.bf16.mxu0 0
  %2139 = vmatpush1.bf16.msra.mxu0 0
  %2140 = vmatprep.subr.bf16.mxu0 0
  %2141 = vmatpush1.bf16.msra.mxu0 0
  %2142 = vmatprep.subr.bf16.mxu0 0
  %2143 = vmatpush1.bf16.msra.mxu0 0
  %2144 = vmatprep.mubr.bf16.mxu0 0
  %2145 = vmatmul.mubr.bf16.gmra.mrb[0].mxu0 %v2106
  %v2146 = vpop.f32.mrb[0].mxu0
  %v2147 = vadd.f32 %v1514, %v2146
  %v2148 = vpop.f32.mrb[0].mxu0
  %v2149 = vpop.f32.mrb[0].mxu0
  %v2150 = vpop.f32.mrb[0].mxu0
  %2151 = vdwg.mxu0
  %2152 = vxpose.xlu0.b32.start [1/16] %v2147, 128
  %2153 = vxpose.xlu0.b32.cont [2/16] 0.0, 128
  %2154 = vxpose.xlu0.b32.cont [3/16] 0.0, 128
  %2155 = vxpose.xlu0.b32.cont [4/16] 0.0, 128
  %2156 = vxpose.xlu0.b32.cont [5/16] 0.0, 128
  %2157 = vxpose.xlu0.b32.cont [6/16] 0.0, 128
  %2158 = vxpose.xlu0.b32.cont [7/16] 0.0, 128
  %2159 = vxpose.xlu0.b32.cont [8/16] 0.0, 128
  %2160 = vxpose.xlu0.b32.cont [9/16] 0.0, 128
  %2161 = vxpose.xlu0.b32.cont [10/16] 0.0, 128
  %2162 = vxpose.xlu0.b32.cont [11/16] 0.0, 128
  %2163 = vxpose.xlu0.b32.cont [12/16] 0.0, 128
  %2164 = vxpose.xlu0.b32.cont [13/16] 0.0, 128
  %2165 = vxpose.xlu0.b32.cont [14/16] 0.0, 128
  %2166 = vxpose.xlu0.b32.cont [15/16] 0.0, 128
  %2167 = vxpose.xlu0.b32.end [16/16] 0.0, 128
  %v2168 = vpop.trf.xlu0
  %v2169 = vpop.trf.xlu0
  %v2170 = vpop.trf.xlu0
  %v2171 = vpop.trf.xlu0
  %v2172 = vpop.trf.xlu0
  %v2173 = vpop.trf.xlu0
  %v2174 = vpop.trf.xlu0
  %v2175 = vpop.trf.xlu0
  %v2176 = vpop.trf.xlu0
  %v2177 = vpop.trf.xlu0
  %v2178 = vpop.trf.xlu0
  %v2179 = vpop.trf.xlu0
  %v2180 = vpop.trf.xlu0
  %v2181 = vpop.trf.xlu0
  %v2182 = vpop.trf.xlu0
  %v2183 = vpop.trf.xlu0
  %v2184 = vsel %vm1578, %v2168, 0.0
  %v2185 = vsel %vm1578, %v2169, 0.0
  %v2186 = vadd.f32 %v2184, %v2185
  %v2187 = vsel %vm1578, %v2170, 0.0
  %v2188 = vadd.f32 %v2186, %v2187
  %v2189 = vsel %vm1578, %v2171, 0.0
  %v2190 = vadd.f32 %v2188, %v2189
  %v2191 = vsel %vm1578, %v2172, 0.0
  %v2192 = vadd.f32 %v2190, %v2191
  %v2193 = vsel %vm1578, %v2173, 0.0
  %v2194 = vadd.f32 %v2192, %v2193
  %v2195 = vsel %vm1578, %v2174, 0.0
  %v2196 = vadd.f32 %v2194, %v2195
  %v2197 = vsel %vm1578, %v2175, 0.0
  %v2198 = vadd.f32 %v2196, %v2197
  %v2199 = vsel %vm1578, %v2176, 0.0
  %v2200 = vadd.f32 %v2198, %v2199
  %v2201 = vsel %vm1578, %v2177, 0.0
  %v2202 = vadd.f32 %v2200, %v2201
  %v2203 = vsel %vm1578, %v2178, 0.0
  %v2204 = vadd.f32 %v2202, %v2203
  %v2205 = vsel %vm1578, %v2179, 0.0
  %v2206 = vadd.f32 %v2204, %v2205
  %v2207 = vsel %vm1578, %v2180, 0.0
  %v2208 = vadd.f32 %v2206, %v2207
  %v2209 = vsel %vm1578, %v2181, 0.0
  %v2210 = vadd.f32 %v2208, %v2209
  %v2211 = vsel %vm1578, %v2182, 0.0
  %v2212 = vadd.f32 %v2210, %v2211
  %v2213 = vsel %vm1578, %v2183, 0.0
  %v2214 = vadd.f32 %v2212, %v2213
  %v2215 = vrot.slane %v2214, 4
  %v2216 = vadd.f32 %v2214, %v2215
  %v2217 = vrot.slane %v2216, 2
  %v2218 = vadd.f32 %v2216, %v2217
  %v2219 = vrot.slane %v2218, 1
  %v2220 = vadd.f32 %v2218, %v2219
  %v2221 = vmul.f32 %v2220, %v1519
  %v2222 = vsub.f32 %v2168, %v2221
  %v2223 = vsub.f32 %v2169, %v2221
  %v2224 = vsub.f32 %v2170, %v2221
  %v2225 = vsub.f32 %v2171, %v2221
  %v2226 = vsub.f32 %v2172, %v2221
  %v2227 = vsub.f32 %v2173, %v2221
  %v2228 = vsub.f32 %v2174, %v2221
  %v2229 = vsub.f32 %v2175, %v2221
  %v2230 = vsub.f32 %v2176, %v2221
  %v2231 = vsub.f32 %v2177, %v2221
  %v2232 = vsub.f32 %v2178, %v2221
  %v2233 = vsub.f32 %v2179, %v2221
  %v2234 = vsub.f32 %v2180, %v2221
  %v2235 = vsub.f32 %v2181, %v2221
  %v2236 = vsub.f32 %v2182, %v2221
  %v2237 = vsub.f32 %v2183, %v2221
  %v2238 = vmul.f32 %v2222, %v2222
  %v2239 = vmul.f32 %v2223, %v2223
  %v2240 = vmul.f32 %v2224, %v2224
  %v2241 = vmul.f32 %v2225, %v2225
  %v2242 = vmul.f32 %v2226, %v2226
  %v2243 = vmul.f32 %v2227, %v2227
  %v2244 = vmul.f32 %v2228, %v2228
  %v2245 = vmul.f32 %v2229, %v2229
  %v2246 = vmul.f32 %v2230, %v2230
  %v2247 = vmul.f32 %v2231, %v2231
  %v2248 = vmul.f32 %v2232, %v2232
  %v2249 = vmul.f32 %v2233, %v2233
  %v2250 = vmul.f32 %v2234, %v2234
  %v2251 = vmul.f32 %v2235, %v2235
  %v2252 = vmul.f32 %v2236, %v2236
  %v2253 = vmul.f32 %v2237, %v2237
  %v2254 = vsel %vm1578, %v2238, 0.0
  %v2255 = vsel %vm1578, %v2239, 0.0
  %v2256 = vadd.f32 %v2254, %v2255
  %v2257 = vsel %vm1578, %v2240, 0.0
  %v2258 = vadd.f32 %v2256, %v2257
  %v2259 = vsel %vm1578, %v2241, 0.0
  %v2260 = vadd.f32 %v2258, %v2259
  %v2261 = vsel %vm1578, %v2242, 0.0
  %v2262 = vadd.f32 %v2260, %v2261
  %v2263 = vsel %vm1578, %v2243, 0.0
  %v2264 = vadd.f32 %v2262, %v2263
  %v2265 = vsel %vm1578, %v2244, 0.0
  %v2266 = vadd.f32 %v2264, %v2265
  %v2267 = vsel %vm1578, %v2245, 0.0
  %v2268 = vadd.f32 %v2266, %v2267
  %v2269 = vsel %vm1578, %v2246, 0.0
  %v2270 = vadd.f32 %v2268, %v2269
  %v2271 = vsel %vm1578, %v2247, 0.0
  %v2272 = vadd.f32 %v2270, %v2271
  %v2273 = vsel %vm1578, %v2248, 0.0
  %v2274 = vadd.f32 %v2272, %v2273
  %v2275 = vsel %vm1578, %v2249, 0.0
  %v2276 = vadd.f32 %v2274, %v2275
  %v2277 = vsel %vm1578, %v2250, 0.0
  %v2278 = vadd.f32 %v2276, %v2277
  %v2279 = vsel %vm1578, %v2251, 0.0
  %v2280 = vadd.f32 %v2278, %v2279
  %v2281 = vsel %vm1578, %v2252, 0.0
  %v2282 = vadd.f32 %v2280, %v2281
  %v2283 = vsel %vm1578, %v2253, 0.0
  %v2284 = vadd.f32 %v2282, %v2283
  %v2285 = vrot.slane %v2284, 4
  %v2286 = vadd.f32 %v2284, %v2285
  %v2287 = vrot.slane %v2286, 2
  %v2288 = vadd.f32 %v2286, %v2287
  %v2289 = vrot.slane %v2288, 1
  %v2290 = vadd.f32 %v2288, %v2289
  %v2291 = vmul.f32 %v2290, %v1519
  %v2292 = vld [vmem:[%s7] sm:$0x1]
  %v2293 = vadd.f32 %v2291, 1e-05
  %v2294 = vrsqrt.pop %v2293
  %v2295 = vmul.f32 %v2292, %v2294
  %v2296 = vld [vmem:[%s8] sm:$0x1]
  %v2297 = vmul.f32 %v2221, %v2295
  %v2298 = vsub.f32 %v2296, %v2297
  %v2300 = vlaneseq
  %v2301 = vshrl.u32 %v2300, 7
  %v2302 = vsub.s32 0, %v2301
  %v2303 = vrot.slane %v2295, %v2302
  %v2305 = vmul.f32 %v2168, %v2303
  %v2306 = vmul.f32 %v2169, %v2303
  %v2307 = vmul.f32 %v2170, %v2303
  %v2308 = vmul.f32 %v2171, %v2303
  %v2309 = vmul.f32 %v2172, %v2303
  %v2310 = vmul.f32 %v2173, %v2303
  %v2311 = vmul.f32 %v2174, %v2303
  %v2312 = vmul.f32 %v2175, %v2303
  %v2313 = vmul.f32 %v2176, %v2303
  %v2314 = vmul.f32 %v2177, %v2303
  %v2315 = vmul.f32 %v2178, %v2303
  %v2316 = vmul.f32 %v2179, %v2303
  %v2317 = vmul.f32 %v2180, %v2303
  %v2318 = vmul.f32 %v2181, %v2303
  %v2319 = vmul.f32 %v2182, %v2303
  %v2320 = vmul.f32 %v2183, %v2303
  %v2322 = vlaneseq
  %v2323 = vshrl.u32 %v2322, 7
  %v2324 = vsub.s32 0, %v2323
  %v2325 = vrot.slane %v2298, %v2324
  %v2327 = vadd.f32 %v2305, %v2325
  %v2328 = vadd.f32 %v2306, %v2325
  %v2329 = vadd.f32 %v2307, %v2325
  %v2330 = vadd.f32 %v2308, %v2325
  %v2331 = vadd.f32 %v2309, %v2325
  %v2332 = vadd.f32 %v2310, %v2325
  %v2333 = vadd.f32 %v2311, %v2325
  %v2334 = vadd.f32 %v2312, %v2325
  %v2335 = vadd.f32 %v2313, %v2325
  %v2336 = vadd.f32 %v2314, %v2325
  %v2337 = vadd.f32 %v2315, %v2325
  %v2338 = vadd.f32 %v2316, %v2325
  %v2339 = vadd.f32 %v2317, %v2325
  %v2340 = vadd.f32 %v2318, %v2325
  %v2341 = vadd.f32 %v2319, %v2325
  %v2342 = vadd.f32 %v2320, %v2325
  %v2343 = vmax.f32 %v2327, 0.0
  %v2344 = vmax.f32 %v2328, 0.0
  %v2345 = vmax.f32 %v2329, 0.0
  %v2346 = vmax.f32 %v2330, 0.0
  %v2347 = vmax.f32 %v2331, 0.0
  %v2348 = vmax.f32 %v2332, 0.0
  %v2349 = vmax.f32 %v2333, 0.0
  %v2350 = vmax.f32 %v2334, 0.0
  %v2351 = vmax.f32 %v2335, 0.0
  %v2352 = vmax.f32 %v2336, 0.0
  %v2353 = vmax.f32 %v2337, 0.0
  %v2354 = vmax.f32 %v2338, 0.0
  %v2355 = vmax.f32 %v2339, 0.0
  %v2356 = vmax.f32 %v2340, 0.0
  %v2357 = vmax.f32 %v2341, 0.0
  %v2358 = vmax.f32 %v2342, 0.0
  %2359 = vst.msk [vmem:[#allocation6] sm:$0xff] %vm1578, 0.0
  %2360 = vst.msk [vmem:[#allocation6 + $0x8] sm:$0x3] %vm1580, 0.0
  %2361 = vst.msk [vmem:[#allocation6 + $0xa0] sm:$0xff] %vm1578, 0.0
  %2362 = vst.msk [vmem:[#allocation6 + $0xa8] sm:$0x3] %vm1580, 0.0
  %s2363 = scalar_lea.vmem [#allocation6], 144
  %2364 = vst.msk [vmem:[%s2363] sm:$0xff] %vm1578, 0.0
  %2365 = vst.msk [vmem:[%s2363 + $0x8] sm:$0x3] %vm1580, 0.0
  %2366 = vst.msk [vmem:[%s2363 + $0xa0] sm:$0xff] %vm1578, 0.0
  %2367 = vst.msk [vmem:[%s2363 + $0xa8] sm:$0x3] %vm1580, 0.0
  %2368 = vst.msk [vmem:[#allocation6] sm:$0x1] %vm1589, 0.0
  %2369 = vst.msk [vmem:[#allocation6 + $0x10] sm:$0x1] %vm1589, 0.0
  %2370 = vst.msk [vmem:[#allocation6 + $0x20] sm:$0x1] %vm1589, 0.0
  %2371 = vst.msk [vmem:[#allocation6 + $0x30] sm:$0x1] %vm1589, 0.0
  %2372 = vst.msk [vmem:[#allocation6 + $0x40] sm:$0x1] %vm1589, 0.0
  %2373 = vst.msk [vmem:[#allocation6 + $0x50] sm:$0x1] %vm1589, 0.0
  %2374 = vst.msk [vmem:[#allocation6 + $0x60] sm:$0x1] %vm1589, 0.0
  %2375 = vst.msk [vmem:[#allocation6 + $0x70] sm:$0x1] %vm1589, 0.0
  %2376 = vst.msk [vmem:[#allocation6 + $0x80] sm:$0x1] %vm1589, 0.0
  %2377 = vst.msk [vmem:[#allocation6 + $0x90] sm:$0x1] %vm1589, 0.0
  %2378 = vst.msk [vmem:[#allocation6 + $0xa0] sm:$0x1] %vm1589, 0.0
  %2379 = vst.msk [vmem:[#allocation6 + $0xb0] sm:$0x1] %vm1589, 0.0
  %2380 = vst.msk [vmem:[#allocation6 + $0xc0] sm:$0x1] %vm1589, 0.0
  %2381 = vst.msk [vmem:[#allocation6 + $0xd0] sm:$0x1] %vm1589, 0.0
  %2382 = vst.msk [vmem:[#allocation6 + $0xe0] sm:$0x1] %vm1589, 0.0
  %2383 = vst.msk [vmem:[#allocation6 + $0xf0] sm:$0x1] %vm1589, 0.0
  %2384 = vst.msk [vmem:[#allocation6 + $0x100] sm:$0x1] %vm1589, 0.0
  %2385 = vst.msk [vmem:[#allocation6 + $0x110] sm:$0x1] %vm1589, 0.0
  %2386 = vst.msk [vmem:[#allocation6 + $0x120] sm:$0x1] %vm1589, 0.0
  %2387 = vst.msk [vmem:[#allocation6 + $0x130] sm:$0x1] %vm1589, 0.0
  %2388 = vst.msk [vmem:[#allocation6 + $0x9] sm:$0x1] %vm1589, 0.0
  %2389 = vst.msk [vmem:[#allocation6 + $0x19] sm:$0x1] %vm1589, 0.0
  %2390 = vst.msk [vmem:[#allocation6 + $0x29] sm:$0x1] %vm1589, 0.0
  %2391 = vst.msk [vmem:[#allocation6 + $0x39] sm:$0x1] %vm1589, 0.0
  %2392 = vst.msk [vmem:[#allocation6 + $0x49] sm:$0x1] %vm1589, 0.0
  %2393 = vst.msk [vmem:[#allocation6 + $0x59] sm:$0x1] %vm1589, 0.0
  %2394 = vst.msk [vmem:[#allocation6 + $0x69] sm:$0x1] %vm1589, 0.0
  %2395 = vst.msk [vmem:[#allocation6 + $0x79] sm:$0x1] %vm1589, 0.0
  %2396 = vst.msk [vmem:[#allocation6 + $0x89] sm:$0x1] %vm1589, 0.0
  %2397 = vst.msk [vmem:[#allocation6 + $0x99] sm:$0x1] %vm1589, 0.0
  %2398 = vst.msk [vmem:[#allocation6 + $0xa9] sm:$0x1] %vm1589, 0.0
  %2399 = vst.msk [vmem:[#allocation6 + $0xb9] sm:$0x1] %vm1589, 0.0
  %2400 = vst.msk [vmem:[#allocation6 + $0xc9] sm:$0x1] %vm1589, 0.0
  %2401 = vst.msk [vmem:[#allocation6 + $0xd9] sm:$0x1] %vm1589, 0.0
  %2402 = vst.msk [vmem:[#allocation6 + $0xe9] sm:$0x1] %vm1589, 0.0
  %2403 = vst.msk [vmem:[#allocation6 + $0xf9] sm:$0x1] %vm1589, 0.0
  %2404 = vst.msk [vmem:[#allocation6 + $0x109] sm:$0x1] %vm1589, 0.0
  %2405 = vst.msk [vmem:[#allocation6 + $0x119] sm:$0x1] %vm1589, 0.0
  %2406 = vst.msk [vmem:[#allocation6 + $0x129] sm:$0x1] %vm1589, 0.0
  %2407 = vst.msk [vmem:[#allocation6 + $0x139] sm:$0x1] %vm1589, 0.0
  %s2408 = scalar_lea.vmem [#allocation6], 16
  %2409 = vst.msk [vmem:[%s2408 + $0x1] sm:$0xff] %vm1578, %v2343
  %2410 = vst.msk [vmem:[%s2408 + $0x11] sm:$0xff] %vm1578, %v2344
  %2411 = vst.msk [vmem:[%s2408 + $0x21] sm:$0xff] %vm1578, %v2345
  %2412 = vst.msk [vmem:[%s2408 + $0x31] sm:$0xff] %vm1578, %v2346
  %2413 = vst.msk [vmem:[%s2408 + $0x41] sm:$0xff] %vm1578, %v2347
  %2414 = vst.msk [vmem:[%s2408 + $0x51] sm:$0xff] %vm1578, %v2348
  %2415 = vst.msk [vmem:[%s2408 + $0x61] sm:$0xff] %vm1578, %v2349
  %2416 = vst.msk [vmem:[%s2408 + $0x71] sm:$0xff] %vm1578, %v2350
  %2417 = vst.msk [vmem:[%s2408 + $0xa1] sm:$0xff] %vm1578, %v2351
  %2418 = vst.msk [vmem:[%s2408 + $0xb1] sm:$0xff] %vm1578, %v2352
  %2419 = vst.msk [vmem:[%s2408 + $0xc1] sm:$0xff] %vm1578, %v2353
  %2420 = vst.msk [vmem:[%s2408 + $0xd1] sm:$0xff] %vm1578, %v2354
  %2421 = vst.msk [vmem:[%s2408 + $0xe1] sm:$0xff] %vm1578, %v2355
  %2422 = vst.msk [vmem:[%s2408 + $0xf1] sm:$0xff] %vm1578, %v2356
  %2423 = vst.msk [vmem:[%s2408 + $0x101] sm:$0xff] %vm1578, %v2357
  %2424 = vst.msk [vmem:[%s2408 + $0x111] sm:$0xff] %vm1578, %v2358
  %v2425 = vld [vmem:[#allocation6] sm:$0xff]
  %v2426 = vld [vmem:[#allocation6 + $0x10] sm:$0xff]
  %v2427 = vld [vmem:[#allocation6 + $0x20] sm:$0xff]
  %v2428 = vld [vmem:[#allocation6 + $0x30] sm:$0xff]
  %v2429 = vld [vmem:[#allocation6 + $0x40] sm:$0xff]
  %v2430 = vld [vmem:[#allocation6 + $0x50] sm:$0xff]
  %v2431 = vld [vmem:[#allocation6 + $0x60] sm:$0xff]
  %v2432 = vld [vmem:[#allocation6 + $0x70] sm:$0xff]
  %v2433 = vld [vmem:[#allocation6 + $0xa0] sm:$0xff]
  %v2434 = vld [vmem:[#allocation6 + $0xb0] sm:$0xff]
  %v2435 = vld [vmem:[#allocation6 + $0xc0] sm:$0xff]
  %v2436 = vld [vmem:[#allocation6 + $0xd0] sm:$0xff]
  %v2437 = vld [vmem:[#allocation6 + $0xe0] sm:$0xff]
  %v2438 = vld [vmem:[#allocation6 + $0xf0] sm:$0xff]
  %v2439 = vld [vmem:[#allocation6 + $0x100] sm:$0xff]
  %v2440 = vld [vmem:[#allocation6 + $0x110] sm:$0xff]
  %2441 = vxpose.xlu0.b32.start [1/16] %v2425, 128
  %2442 = vxpose.xlu0.b32.cont [2/16] %v2426, 128
  %2443 = vxpose.xlu0.b32.cont [3/16] %v2427, 128
  %2444 = vxpose.xlu0.b32.cont [4/16] %v2428, 128
  %2445 = vxpose.xlu0.b32.cont [5/16] %v2429, 128
  %2446 = vxpose.xlu0.b32.cont [6/16] %v2430, 128
  %2447 = vxpose.xlu0.b32.cont [7/16] %v2431, 128
  %2448 = vxpose.xlu0.b32.cont [8/16] %v2432, 128
  %2449 = vxpose.xlu0.b32.cont [9/16] %v2433, 128
  %2450 = vxpose.xlu0.b32.cont [10/16] %v2434, 128
  %2451 = vxpose.xlu0.b32.cont [11/16] %v2435, 128
  %2452 = vxpose.xlu0.b32.cont [12/16] %v2436, 128
  %2453 = vxpose.xlu0.b32.cont [13/16] %v2437, 128
  %2454 = vxpose.xlu0.b32.cont [14/16] %v2438, 128
  %2455 = vxpose.xlu0.b32.cont [15/16] %v2439, 128
  %2456 = vxpose.xlu0.b32.end [16/16] %v2440, 128
  %v2457 = vpop.trf.xlu0
  %v2458 = vpop.trf.xlu0
  %v2459 = vpop.trf.xlu0
  %v2460 = vpop.trf.xlu0
  %v2461 = vpop.trf.xlu0
  %v2462 = vpop.trf.xlu0
  %v2463 = vpop.trf.xlu0
  %v2464 = vpop.trf.xlu0
  %v2465 = vpop.trf.xlu0
  %v2466 = vpop.trf.xlu0
  %v2467 = vpop.trf.xlu0
  %v2468 = vpop.trf.xlu0
  %v2469 = vpop.trf.xlu0
  %v2470 = vpop.trf.xlu0
  %v2471 = vpop.trf.xlu0
  %v2472 = vpop.trf.xlu0
  %2473 = vst [vmem:[#allocation7] sm:$0xff] %v2457
  %v2474 = vld [vmem:[#allocation6 + $0x1] sm:$0xff]
  %v2475 = vld [vmem:[#allocation6 + $0x11] sm:$0xff]
  %v2476 = vld [vmem:[#allocation6 + $0x21] sm:$0xff]
  %v2477 = vld [vmem:[#allocation6 + $0x31] sm:$0xff]
  %v2478 = vld [vmem:[#allocation6 + $0x41] sm:$0xff]
  %v2479 = vld [vmem:[#allocation6 + $0x51] sm:$0xff]
  %v2480 = vld [vmem:[#allocation6 + $0x61] sm:$0xff]
  %v2481 = vld [vmem:[#allocation6 + $0x71] sm:$0xff]
  %v2482 = vld [vmem:[#allocation6 + $0xa1] sm:$0xff]
  %v2483 = vld [vmem:[#allocation6 + $0xb1] sm:$0xff]
  %v2484 = vld [vmem:[#allocation6 + $0xc1] sm:$0xff]
  %v2485 = vld [vmem:[#allocation6 + $0xd1] sm:$0xff]
  %v2486 = vld [vmem:[#allocation6 + $0xe1] sm:$0xff]
  %v2487 = vld [vmem:[#allocation6 + $0xf1] sm:$0xff]
  %v2488 = vld [vmem:[#allocation6 + $0x101] sm:$0xff]
  %v2489 = vld [vmem:[#allocation6 + $0x111] sm:$0xff]
  %2490 = vxpose.xlu0.b32.start [1/16] %v2474, 128
  %2491 = vxpose.xlu0.b32.cont [2/16] %v2475, 128
  %2492 = vxpose.xlu0.b32.cont [3/16] %v2476, 128
  %2493 = vxpose.xlu0.b32.cont [4/16] %v2477, 128
  %2494 = vxpose.xlu0.b32.cont [5/16] %v2478, 128
  %2495 = vxpose.xlu0.b32.cont [6/16] %v2479, 128
  %2496 = vxpose.xlu0.b32.cont [7/16] %v2480, 128
  %2497 = vxpose.xlu0.b32.cont [8/16] %v2481, 128
  %2498 = vxpose.xlu0.b32.cont [9/16] %v2482, 128
  %2499 = vxpose.xlu0.b32.cont [10/16] %v2483, 128
  %2500 = vxpose.xlu0.b32.cont [11/16] %v2484, 128
  %2501 = vxpose.xlu0.b32.cont [12/16] %v2485, 128
  %2502 = vxpose.xlu0.b32.cont [13/16] %v2486, 128
  %2503 = vxpose.xlu0.b32.cont [14/16] %v2487, 128
  %2504 = vxpose.xlu0.b32.cont [15/16] %v2488, 128
  %2505 = vxpose.xlu0.b32.end [16/16] %v2489, 128
  %v2506 = vpop.trf.xlu0
  %v2507 = vpop.trf.xlu0
  %v2508 = vpop.trf.xlu0
  %v2509 = vpop.trf.xlu0
  %v2510 = vpop.trf.xlu0
  %v2511 = vpop.trf.xlu0
  %v2512 = vpop.trf.xlu0
  %v2513 = vpop.trf.xlu0
  %v2514 = vpop.trf.xlu0
  %v2515 = vpop.trf.xlu0
  %v2516 = vpop.trf.xlu0
  %v2517 = vpop.trf.xlu0
  %v2518 = vpop.trf.xlu0
  %v2519 = vpop.trf.xlu0
  %v2520 = vpop.trf.xlu0
  %v2521 = vpop.trf.xlu0
  %2522 = vst [vmem:[#allocation7 + $0x8] sm:$0xff] %v2506
  %v2523 = vld [vmem:[#allocation6 + $0x2] sm:$0xff]
  %v2524 = vld [vmem:[#allocation6 + $0x12] sm:$0xff]
  %v2525 = vld [vmem:[#allocation6 + $0x22] sm:$0xff]
  %v2526 = vld [vmem:[#allocation6 + $0x32] sm:$0xff]
  %v2527 = vld [vmem:[#allocation6 + $0x42] sm:$0xff]
  %v2528 = vld [vmem:[#allocation6 + $0x52] sm:$0xff]
  %v2529 = vld [vmem:[#allocation6 + $0x62] sm:$0xff]
  %v2530 = vld [vmem:[#allocation6 + $0x72] sm:$0xff]
  %v2531 = vld [vmem:[#allocation6 + $0xa2] sm:$0xff]
  %v2532 = vld [vmem:[#allocation6 + $0xb2] sm:$0xff]
  %v2533 = vld [vmem:[#allocation6 + $0xc2] sm:$0xff]
  %v2534 = vld [vmem:[#allocation6 + $0xd2] sm:$0xff]
  %v2535 = vld [vmem:[#allocation6 + $0xe2] sm:$0xff]
  %v2536 = vld [vmem:[#allocation6 + $0xf2] sm:$0xff]
  %v2537 = vld [vmem:[#allocation6 + $0x102] sm:$0xff]
  %v2538 = vld [vmem:[#allocation6 + $0x112] sm:$0xff]
  %2539 = vxpose.xlu0.b32.start [1/16] %v2523, 128
  %2540 = vxpose.xlu0.b32.cont [2/16] %v2524, 128
  %2541 = vxpose.xlu0.b32.cont [3/16] %v2525, 128
  %2542 = vxpose.xlu0.b32.cont [4/16] %v2526, 128
  %2543 = vxpose.xlu0.b32.cont [5/16] %v2527, 128
  %2544 = vxpose.xlu0.b32.cont [6/16] %v2528, 128
  %2545 = vxpose.xlu0.b32.cont [7/16] %v2529, 128
  %2546 = vxpose.xlu0.b32.cont [8/16] %v2530, 128
  %2547 = vxpose.xlu0.b32.cont [9/16] %v2531, 128
  %2548 = vxpose.xlu0.b32.cont [10/16] %v2532, 128
  %2549 = vxpose.xlu0.b32.cont [11/16] %v2533, 128
  %2550 = vxpose.xlu0.b32.cont [12/16] %v2534, 128
  %2551 = vxpose.xlu0.b32.cont [13/16] %v2535, 128
  %2552 = vxpose.xlu0.b32.cont [14/16] %v2536, 128
  %2553 = vxpose.xlu0.b32.cont [15/16] %v2537, 128
  %2554 = vxpose.xlu0.b32.end [16/16] %v2538, 128
  %v2555 = vpop.trf.xlu0
  %v2556 = vpop.trf.xlu0
  %v2557 = vpop.trf.xlu0
  %v2558 = vpop.trf.xlu0
  %v2559 = vpop.trf.xlu0
  %v2560 = vpop.trf.xlu0
  %v2561 = vpop.trf.xlu0
  %v2562 = vpop.trf.xlu0
  %v2563 = vpop.trf.xlu0
  %v2564 = vpop.trf.xlu0
  %v2565 = vpop.trf.xlu0
  %v2566 = vpop.trf.xlu0
  %v2567 = vpop.trf.xlu0
  %v2568 = vpop.trf.xlu0
  %v2569 = vpop.trf.xlu0
  %v2570 = vpop.trf.xlu0
  %2571 = vst [vmem:[#allocation7 + $0x10] sm:$0xff] %v2555
  %v2572 = vld [vmem:[%s2408] sm:$0xff]
  %v2573 = vld [vmem:[%s2408 + $0x10] sm:$0xff]
  %v2574 = vld [vmem:[%s2408 + $0x20] sm:$0xff]
  %v2575 = vld [vmem:[%s2408 + $0x30] sm:$0xff]
  %v2576 = vld [vmem:[%s2408 + $0x40] sm:$0xff]
  %v2577 = vld [vmem:[%s2408 + $0x50] sm:$0xff]
  %v2578 = vld [vmem:[%s2408 + $0x60] sm:$0xff]
  %v2579 = vld [vmem:[%s2408 + $0x70] sm:$0xff]
  %v2580 = vld [vmem:[%s2408 + $0xa0] sm:$0xff]
  %v2581 = vld [vmem:[%s2408 + $0xb0] sm:$0xff]
  %v2582 = vld [vmem:[%s2408 + $0xc0] sm:$0xff]
  %v2583 = vld [vmem:[%s2408 + $0xd0] sm:$0xff]
  %v2584 = vld [vmem:[%s2408 + $0xe0] sm:$0xff]
  %v2585 = vld [vmem:[%s2408 + $0xf0] sm:$0xff]
  %v2586 = vld [vmem:[%s2408 + $0x100] sm:$0xff]
  %v2587 = vld [vmem:[%s2408 + $0x110] sm:$0xff]
  %2588 = vxpose.xlu0.b32.start [1/16] %v2572, 128
  %2589 = vxpose.xlu0.b32.cont [2/16] %v2573, 128
  %2590 = vxpose.xlu0.b32.cont [3/16] %v2574, 128
  %2591 = vxpose.xlu0.b32.cont [4/16] %v2575, 128
  %2592 = vxpose.xlu0.b32.cont [5/16] %v2576, 128
  %2593 = vxpose.xlu0.b32.cont [6/16] %v2577, 128
  %2594 = vxpose.xlu0.b32.cont [7/16] %v2578, 128
  %2595 = vxpose.xlu0.b32.cont [8/16] %v2579, 128
  %2596 = vxpose.xlu0.b32.cont [9/16] %v2580, 128
  %2597 = vxpose.xlu0.b32.cont [10/16] %v2581, 128
  %2598 = vxpose.xlu0.b32.cont [11/16] %v2582, 128
  %2599 = vxpose.xlu0.b32.cont [12/16] %v2583, 128
  %2600 = vxpose.xlu0.b32.cont [13/16] %v2584, 128
  %2601 = vxpose.xlu0.b32.cont [14/16] %v2585, 128
  %2602 = vxpose.xlu0.b32.cont [15/16] %v2586, 128
  %2603 = vxpose.xlu0.b32.end [16/16] %v2587, 128
  %v2604 = vpop.trf.xlu0
  %v2605 = vpop.trf.xlu0
  %v2606 = vpop.trf.xlu0
  %v2607 = vpop.trf.xlu0
  %v2608 = vpop.trf.xlu0
  %v2609 = vpop.trf.xlu0
  %v2610 = vpop.trf.xlu0
  %v2611 = vpop.trf.xlu0
  %v2612 = vpop.trf.xlu0
  %v2613 = vpop.trf.xlu0
  %v2614 = vpop.trf.xlu0
  %v2615 = vpop.trf.xlu0
  %v2616 = vpop.trf.xlu0
  %v2617 = vpop.trf.xlu0
  %v2618 = vpop.trf.xlu0
  %v2619 = vpop.trf.xlu0
  %2620 = vst [vmem:[#allocation7 + $0x18] sm:$0xff] %v2604
  %v2621 = vld [vmem:[%s2408 + $0x1] sm:$0xff]
  %v2622 = vld [vmem:[%s2408 + $0x11] sm:$0xff]
  %v2623 = vld [vmem:[%s2408 + $0x21] sm:$0xff]
  %v2624 = vld [vmem:[%s2408 + $0x31] sm:$0xff]
  %v2625 = vld [vmem:[%s2408 + $0x41] sm:$0xff]
  %v2626 = vld [vmem:[%s2408 + $0x51] sm:$0xff]
  %v2627 = vld [vmem:[%s2408 + $0x61] sm:$0xff]
  %v2628 = vld [vmem:[%s2408 + $0x71] sm:$0xff]
  %v2629 = vld [vmem:[%s2408 + $0xa1] sm:$0xff]
  %v2630 = vld [vmem:[%s2408 + $0xb1] sm:$0xff]
  %v2631 = vld [vmem:[%s2408 + $0xc1] sm:$0xff]
  %v2632 = vld [vmem:[%s2408 + $0xd1] sm:$0xff]
  %v2633 = vld [vmem:[%s2408 + $0xe1] sm:$0xff]
  %v2634 = vld [vmem:[%s2408 + $0xf1] sm:$0xff]
  %v2635 = vld [vmem:[%s2408 + $0x101] sm:$0xff]
  %v2636 = vld [vmem:[%s2408 + $0x111] sm:$0xff]
  %2637 = vxpose.xlu0.b32.start [1/16] %v2621, 128
  %2638 = vxpose.xlu0.b32.cont [2/16] %v2622, 128
  %2639 = vxpose.xlu0.b32.cont [3/16] %v2623, 128
  %2640 = vxpose.xlu0.b32.cont [4/16] %v2624, 128
  %2641 = vxpose.xlu0.b32.cont [5/16] %v2625, 128
  %2642 = vxpose.xlu0.b32.cont [6/16] %v2626, 128
  %2643 = vxpose.xlu0.b32.cont [7/16] %v2627, 128
  %2644 = vxpose.xlu0.b32.cont [8/16] %v2628, 128
  %2645 = vxpose.xlu0.b32.cont [9/16] %v2629, 128
  %2646 = vxpose.xlu0.b32.cont [10/16] %v2630, 128
  %2647 = vxpose.xlu0.b32.cont [11/16] %v2631, 128
  %2648 = vxpose.xlu0.b32.cont [12/16] %v2632, 128
  %2649 = vxpose.xlu0.b32.cont [13/16] %v2633, 128
  %2650 = vxpose.xlu0.b32.cont [14/16] %v2634, 128
  %2651 = vxpose.xlu0.b32.cont [15/16] %v2635, 128
  %2652 = vxpose.xlu0.b32.end [16/16] %v2636, 128
  %v2653 = vpop.trf.xlu0
  %v2654 = vpop.trf.xlu0
  %v2655 = vpop.trf.xlu0
  %v2656 = vpop.trf.xlu0
  %v2657 = vpop.trf.xlu0
  %v2658 = vpop.trf.xlu0
  %v2659 = vpop.trf.xlu0
  %v2660 = vpop.trf.xlu0
  %v2661 = vpop.trf.xlu0
  %v2662 = vpop.trf.xlu0
  %v2663 = vpop.trf.xlu0
  %v2664 = vpop.trf.xlu0
  %v2665 = vpop.trf.xlu0
  %v2666 = vpop.trf.xlu0
  %v2667 = vpop.trf.xlu0
  %v2668 = vpop.trf.xlu0
  %2669 = vst [vmem:[#allocation7 + $0x20] sm:$0xff] %v2653
  %v2670 = vld [vmem:[%s2408 + $0x2] sm:$0xff]
  %v2671 = vld [vmem:[%s2408 + $0x12] sm:$0xff]
  %v2672 = vld [vmem:[%s2408 + $0x22] sm:$0xff]
  %v2673 = vld [vmem:[%s2408 + $0x32] sm:$0xff]
  %v2674 = vld [vmem:[%s2408 + $0x42] sm:$0xff]
  %v2675 = vld [vmem:[%s2408 + $0x52] sm:$0xff]
  %v2676 = vld [vmem:[%s2408 + $0x62] sm:$0xff]
  %v2677 = vld [vmem:[%s2408 + $0x72] sm:$0xff]
  %v2678 = vld [vmem:[%s2408 + $0xa2] sm:$0xff]
  %v2679 = vld [vmem:[%s2408 + $0xb2] sm:$0xff]
  %v2680 = vld [vmem:[%s2408 + $0xc2] sm:$0xff]
  %v2681 = vld [vmem:[%s2408 + $0xd2] sm:$0xff]
  %v2682 = vld [vmem:[%s2408 + $0xe2] sm:$0xff]
  %v2683 = vld [vmem:[%s2408 + $0xf2] sm:$0xff]
  %v2684 = vld [vmem:[%s2408 + $0x102] sm:$0xff]
  %v2685 = vld [vmem:[%s2408 + $0x112] sm:$0xff]
  %2686 = vxpose.xlu0.b32.start [1/16] %v2670, 128
  %2687 = vxpose.xlu0.b32.cont [2/16] %v2671, 128
  %2688 = vxpose.xlu0.b32.cont [3/16] %v2672, 128
  %2689 = vxpose.xlu0.b32.cont [4/16] %v2673, 128
  %2690 = vxpose.xlu0.b32.cont [5/16] %v2674, 128
  %2691 = vxpose.xlu0.b32.cont [6/16] %v2675, 128
  %2692 = vxpose.xlu0.b32.cont [7/16] %v2676, 128
  %2693 = vxpose.xlu0.b32.cont [8/16] %v2677, 128
  %2694 = vxpose.xlu0.b32.cont [9/16] %v2678, 128
  %2695 = vxpose.xlu0.b32.cont [10/16] %v2679, 128
  %2696 = vxpose.xlu0.b32.cont [11/16] %v2680, 128
  %2697 = vxpose.xlu0.b32.cont [12/16] %v2681, 128
  %2698 = vxpose.xlu0.b32.cont [13/16] %v2682, 128
  %2699 = vxpose.xlu0.b32.cont [14/16] %v2683, 128
  %2700 = vxpose.xlu0.b32.cont [15/16] %v2684, 128
  %2701 = vxpose.xlu0.b32.end [16/16] %v2685, 128
  %v2702 = vpop.trf.xlu0
  %v2703 = vpop.trf.xlu0
  %v2704 = vpop.trf.xlu0
  %v2705 = vpop.trf.xlu0
  %v2706 = vpop.trf.xlu0
  %v2707 = vpop.trf.xlu0
  %v2708 = vpop.trf.xlu0
  %v2709 = vpop.trf.xlu0
  %v2710 = vpop.trf.xlu0
  %v2711 = vpop.trf.xlu0
  %v2712 = vpop.trf.xlu0
  %v2713 = vpop.trf.xlu0
  %v2714 = vpop.trf.xlu0
  %v2715 = vpop.trf.xlu0
  %v2716 = vpop.trf.xlu0
  %v2717 = vpop.trf.xlu0
  %2718 = vst [vmem:[#allocation7 + $0x28] sm:$0xff] %v2702
  %s2719 = scalar_lea.vmem [#allocation6], 32
  %v2720 = vld [vmem:[%s2719] sm:$0xff]
  %v2721 = vld [vmem:[%s2719 + $0x10] sm:$0xff]
  %v2722 = vld [vmem:[%s2719 + $0x20] sm:$0xff]
  %v2723 = vld [vmem:[%s2719 + $0x30] sm:$0xff]
  %v2724 = vld [vmem:[%s2719 + $0x40] sm:$0xff]
  %v2725 = vld [vmem:[%s2719 + $0x50] sm:$0xff]
  %v2726 = vld [vmem:[%s2719 + $0x60] sm:$0xff]
  %v2727 = vld [vmem:[%s2719 + $0x70] sm:$0xff]
  %v2728 = vld [vmem:[%s2719 + $0xa0] sm:$0xff]
  %v2729 = vld [vmem:[%s2719 + $0xb0] sm:$0xff]
  %v2730 = vld [vmem:[%s2719 + $0xc0] sm:$0xff]
  %v2731 = vld [vmem:[%s2719 + $0xd0] sm:$0xff]
  %v2732 = vld [vmem:[%s2719 + $0xe0] sm:$0xff]
  %v2733 = vld [vmem:[%s2719 + $0xf0] sm:$0xff]
  %v2734 = vld [vmem:[%s2719 + $0x100] sm:$0xff]
  %v2735 = vld [vmem:[%s2719 + $0x110] sm:$0xff]
  %2736 = vxpose.xlu0.b32.start [1/16] %v2720, 128
  %2737 = vxpose.xlu0.b32.cont [2/16] %v2721, 128
  %2738 = vxpose.xlu0.b32.cont [3/16] %v2722, 128
  %2739 = vxpose.xlu0.b32.cont [4/16] %v2723, 128
  %2740 = vxpose.xlu0.b32.cont [5/16] %v2724, 128
  %2741 = vxpose.xlu0.b32.cont [6/16] %v2725, 128
  %2742 = vxpose.xlu0.b32.cont [7/16] %v2726, 128
  %2743 = vxpose.xlu0.b32.cont [8/16] %v2727, 128
  %2744 = vxpose.xlu0.b32.cont [9/16] %v2728, 128
  %2745 = vxpose.xlu0.b32.cont [10/16] %v2729, 128
  %2746 = vxpose.xlu0.b32.cont [11/16] %v2730, 128
  %2747 = vxpose.xlu0.b32.cont [12/16] %v2731, 128
  %2748 = vxpose.xlu0.b32.cont [13/16] %v2732, 128
  %2749 = vxpose.xlu0.b32.cont [14/16] %v2733, 128
  %2750 = vxpose.xlu0.b32.cont [15/16] %v2734, 128
  %2751 = vxpose.xlu0.b32.end [16/16] %v2735, 128
  %v2752 = vpop.trf.xlu0
  %v2753 = vpop.trf.xlu0
  %v2754 = vpop.trf.xlu0
  %v2755 = vpop.trf.xlu0
  %v2756 = vpop.trf.xlu0
  %v2757 = vpop.trf.xlu0
  %v2758 = vpop.trf.xlu0
  %v2759 = vpop.trf.xlu0
  %v2760 = vpop.trf.xlu0
  %v2761 = vpop.trf.xlu0
  %v2762 = vpop.trf.xlu0
  %v2763 = vpop.trf.xlu0
  %v2764 = vpop.trf.xlu0
  %v2765 = vpop.trf.xlu0
  %v2766 = vpop.trf.xlu0
  %v2767 = vpop.trf.xlu0
  %2768 = vst [vmem:[#allocation7 + $0x30] sm:$0xff] %v2752
  %v2769 = vld [vmem:[%s2719 + $0x1] sm:$0xff]
  %v2770 = vld [vmem:[%s2719 + $0x11] sm:$0xff]
  %v2771 = vld [vmem:[%s2719 + $0x21] sm:$0xff]
  %v2772 = vld [vmem:[%s2719 + $0x31] sm:$0xff]
  %v2773 = vld [vmem:[%s2719 + $0x41] sm:$0xff]
  %v2774 = vld [vmem:[%s2719 + $0x51] sm:$0xff]
  %v2775 = vld [vmem:[%s2719 + $0x61] sm:$0xff]
  %v2776 = vld [vmem:[%s2719 + $0x71] sm:$0xff]
  %v2777 = vld [vmem:[%s2719 + $0xa1] sm:$0xff]
  %v2778 = vld [vmem:[%s2719 + $0xb1] sm:$0xff]
  %v2779 = vld [vmem:[%s2719 + $0xc1] sm:$0xff]
  %v2780 = vld [vmem:[%s2719 + $0xd1] sm:$0xff]
  %v2781 = vld [vmem:[%s2719 + $0xe1] sm:$0xff]
  %v2782 = vld [vmem:[%s2719 + $0xf1] sm:$0xff]
  %v2783 = vld [vmem:[%s2719 + $0x101] sm:$0xff]
  %v2784 = vld [vmem:[%s2719 + $0x111] sm:$0xff]
  %2785 = vxpose.xlu0.b32.start [1/16] %v2769, 128
  %2786 = vxpose.xlu0.b32.cont [2/16] %v2770, 128
  %2787 = vxpose.xlu0.b32.cont [3/16] %v2771, 128
  %2788 = vxpose.xlu0.b32.cont [4/16] %v2772, 128
  %2789 = vxpose.xlu0.b32.cont [5/16] %v2773, 128
  %2790 = vxpose.xlu0.b32.cont [6/16] %v2774, 128
  %2791 = vxpose.xlu0.b32.cont [7/16] %v2775, 128
  %2792 = vxpose.xlu0.b32.cont [8/16] %v2776, 128
  %2793 = vxpose.xlu0.b32.cont [9/16] %v2777, 128
  %2794 = vxpose.xlu0.b32.cont [10/16] %v2778, 128
  %2795 = vxpose.xlu0.b32.cont [11/16] %v2779, 128
  %2796 = vxpose.xlu0.b32.cont [12/16] %v2780, 128
  %2797 = vxpose.xlu0.b32.cont [13/16] %v2781, 128
  %2798 = vxpose.xlu0.b32.cont [14/16] %v2782, 128
  %2799 = vxpose.xlu0.b32.cont [15/16] %v2783, 128
  %2800 = vxpose.xlu0.b32.end [16/16] %v2784, 128
  %v2801 = vpop.trf.xlu0
  %v2802 = vpop.trf.xlu0
  %v2803 = vpop.trf.xlu0
  %v2804 = vpop.trf.xlu0
  %v2805 = vpop.trf.xlu0
  %v2806 = vpop.trf.xlu0
  %v2807 = vpop.trf.xlu0
  %v2808 = vpop.trf.xlu0
  %v2809 = vpop.trf.xlu0
  %v2810 = vpop.trf.xlu0
  %v2811 = vpop.trf.xlu0
  %v2812 = vpop.trf.xlu0
  %v2813 = vpop.trf.xlu0
  %v2814 = vpop.trf.xlu0
  %v2815 = vpop.trf.xlu0
  %v2816 = vpop.trf.xlu0
  %2817 = vst [vmem:[#allocation7 + $0x38] sm:$0xff] %v2801
  %v2818 = vld [vmem:[%s2719 + $0x2] sm:$0xff]
  %v2819 = vld [vmem:[%s2719 + $0x12] sm:$0xff]
  %v2820 = vld [vmem:[%s2719 + $0x22] sm:$0xff]
  %v2821 = vld [vmem:[%s2719 + $0x32] sm:$0xff]
  %v2822 = vld [vmem:[%s2719 + $0x42] sm:$0xff]
  %v2823 = vld [vmem:[%s2719 + $0x52] sm:$0xff]
  %v2824 = vld [vmem:[%s2719 + $0x62] sm:$0xff]
  %v2825 = vld [vmem:[%s2719 + $0x72] sm:$0xff]
  %v2826 = vld [vmem:[%s2719 + $0xa2] sm:$0xff]
  %v2827 = vld [vmem:[%s2719 + $0xb2] sm:$0xff]
  %v2828 = vld [vmem:[%s2719 + $0xc2] sm:$0xff]
  %v2829 = vld [vmem:[%s2719 + $0xd2] sm:$0xff]
  %v2830 = vld [vmem:[%s2719 + $0xe2] sm:$0xff]
  %v2831 = vld [vmem:[%s2719 + $0xf2] sm:$0xff]
  %v2832 = vld [vmem:[%s2719 + $0x102] sm:$0xff]
  %v2833 = vld [vmem:[%s2719 + $0x112] sm:$0xff]
  %2834 = vxpose.xlu0.b32.start [1/16] %v2818, 128
  %2835 = vxpose.xlu0.b32.cont [2/16] %v2819, 128
  %2836 = vxpose.xlu0.b32.cont [3/16] %v2820, 128
  %2837 = vxpose.xlu0.b32.cont [4/16] %v2821, 128
  %2838 = vxpose.xlu0.b32.cont [5/16] %v2822, 128
  %2839 = vxpose.xlu0.b32.cont [6/16] %v2823, 128
  %2840 = vxpose.xlu0.b32.cont [7/16] %v2824, 128
  %2841 = vxpose.xlu0.b32.cont [8/16] %v2825, 128
  %2842 = vxpose.xlu0.b32.cont [9/16] %v2826, 128
  %2843 = vxpose.xlu0.b32.cont [10/16] %v2827, 128
  %2844 = vxpose.xlu0.b32.cont [11/16] %v2828, 128
  %2845 = vxpose.xlu0.b32.cont [12/16] %v2829, 128
  %2846 = vxpose.xlu0.b32.cont [13/16] %v2830, 128
  %2847 = vxpose.xlu0.b32.cont [14/16] %v2831, 128
  %2848 = vxpose.xlu0.b32.cont [15/16] %v2832, 128
  %2849 = vxpose.xlu0.b32.end [16/16] %v2833, 128
  %v2850 = vpop.trf.xlu0
  %v2851 = vpop.trf.xlu0
  %v2852 = vpop.trf.xlu0
  %v2853 = vpop.trf.xlu0
  %v2854 = vpop.trf.xlu0
  %v2855 = vpop.trf.xlu0
  %v2856 = vpop.trf.xlu0
  %v2857 = vpop.trf.xlu0
  %v2858 = vpop.trf.xlu0
  %v2859 = vpop.trf.xlu0
  %v2860 = vpop.trf.xlu0
  %v2861 = vpop.trf.xlu0
  %v2862 = vpop.trf.xlu0
  %v2863 = vpop.trf.xlu0
  %v2864 = vpop.trf.xlu0
  %v2865 = vpop.trf.xlu0
  %2866 = vst [vmem:[#allocation7 + $0x40] sm:$0xff] %v2850
  %v2867 = vld [vmem:[%s9] sm:$0xf]
  %v2868 = vld [vmem:[#allocation7] sm:$0xff]
  %v2869 = vld [vmem:[#allocation7 + $0x8] sm:$0xff]
  %v2870 = vld [vmem:[#allocation7 + $0x10] sm:$0xff]
  %v2871 = vld [vmem:[#allocation7 + $0x18] sm:$0xff]
  %v2872 = vld [vmem:[#allocation7 + $0x20] sm:$0xff]
  %v2873 = vld [vmem:[#allocation7 + $0x28] sm:$0xff]
  %v2874 = vld [vmem:[#allocation7 + $0x30] sm:$0xff]
  %v2875 = vld [vmem:[#allocation7 + $0x38] sm:$0xff]
  %v2876 = vld [vmem:[#allocation7 + $0x40] sm:$0xff]
  %v2877 = vpack.c.bf16 %v2869, %v2868
  %v2878 = vpack.c.bf16 %v2871, %v2870
  %v2879 = vpack.c.bf16 %v2873, %v2872
  %v2880 = vpack.c.bf16 %v2875, %v2874
  %v2881 = vpack.c.bf16 %v2876, %v2876
  %v2883 = vsel %vm2104, %v2867, 0
  %v2886 = vsel %vm2108, %v2881, 0
  %2888 = vmatprep.subr.bf16.mxu0 0
  %2889 = vmatpush1.bf16.msra.mxu0 %v2877
  %2890 = vmatprep.subr.bf16.mxu0 0
  %2891 = vmatpush1.bf16.msra.mxu0 %v2878
  %2892 = vmatprep.subr.bf16.mxu0 0
  %2893 = vmatpush1.bf16.msra.mxu0 %v2879
  %2894 = vmatprep.subr.bf16.mxu0 0
  %2895 = vmatpush1.bf16.msra.mxu0 %v2880
  %2896 = vmatprep.subr.bf16.mxu0 0
  %2897 = vmatpush1.bf16.msra.mxu0 %v2886
  %2898 = vmatprep.subr.bf16.mxu0 0
  %2899 = vmatpush1.bf16.msra.mxu0 0
  %2900 = vmatprep.subr.bf16.mxu0 0
  %2901 = vmatpush1.bf16.msra.mxu0 0
  %2902 = vmatprep.subr.bf16.mxu0 0
  %2903 = vmatpush1.bf16.msra.mxu0 0
  %2904 = vmatprep.subr.bf16.mxu0 0
  %2905 = vmatpush1.bf16.msra.mxu0 0
  %2906 = vmatprep.subr.bf16.mxu0 0
  %2907 = vmatpush1.bf16.msra.mxu0 0
  %2908 = vmatprep.subr.bf16.mxu0 0
  %2909 = vmatpush1.bf16.msra.mxu0 0
  %2910 = vmatprep.subr.bf16.mxu0 0
  %2911 = vmatpush1.bf16.msra.mxu0 0
  %2912 = vmatprep.subr.bf16.mxu0 0
  %2913 = vmatpush1.bf16.msra.mxu0 0
  %2914 = vmatprep.subr.bf16.mxu0 0
  %2915 = vmatpush1.bf16.msra.mxu0 0
  %2916 = vmatprep.subr.bf16.mxu0 0
  %2917 = vmatpush1.bf16.msra.mxu0 0
  %2918 = vmatprep.subr.bf16.mxu0 0
  %2919 = vmatpush1.bf16.msra.mxu0 0
  %2920 = vmatprep.mubr.bf16.mxu0 0
  %2921 = vmatmul.mubr.bf16.gmra.mrb[0].mxu0 %v2883
  %v2922 = vpop.f32.mrb[0].mxu0
  %v2923 = vadd.f32 0.0, %v2922
  %v2924 = vpop.f32.mrb[0].mxu0
  %v2925 = vpop.f32.mrb[0].mxu0
  %v2926 = vpop.f32.mrb[0].mxu0
  %2927 = vdwg.mxu0
  %2928 = vadd.xlane.f32.xlu0 %v2923
  %v2929 = vpop.xlane.xlu0 %2928
  %v2930 = vmul.f32 %v2929, %v1519
  %v2931 = vsub.f32 %v2923, %v2930
  %v2932 = vmul.f32 %v2931, %v2931
  %2933 = vadd.xlane.f32.xlu0 %v2932
  %v2934 = vpop.xlane.xlu0 %2933
  %v2935 = vmul.f32 %v2934, %v1519
  %v2936 = vld [vmem:[%s10] sm:$0xff]
  %v2937 = vadd.f32 %v2935, 1e-05
  %v2938 = vrsqrt.pop %v2937
  %v2939 = vmul.f32 %v2936, %v2938
  %v2940 = vld [vmem:[%s11] sm:$0xff]
  %v2941 = vmul.f32 %v2930, %v2939
  %v2942 = vsub.f32 %v2940, %v2941
  %2944 = vset.pattern.permute.xlu0 0
  %2945 = vperm.xlu0 %2944, %v2939
  %v2946 = vpop.permute.xlu0 %2945
  %v2948 = vmul.f32 %v2923, %v2946
  %2950 = vset.pattern.permute.xlu0 0
  %2951 = vperm.xlu0 %2950, %v2942
  %v2952 = vpop.permute.xlu0 %2951
  %v2954 = vadd.f32 %v2948, %v2952
  %v2955 = vmax.f32 %v2954, 0.0
  %2956 = vxpose.xlu0.b32.start [1/16] %v2955, 128
  %2957 = vxpose.xlu0.b32.cont [2/16] 0.0, 128
  %2958 = vxpose.xlu0.b32.cont [3/16] 0.0, 128
  %2959 = vxpose.xlu0.b32.cont [4/16] 0.0, 128
  %2960 = vxpose.xlu0.b32.cont [5/16] 0.0, 128
  %2961 = vxpose.xlu0.b32.cont [6/16] 0.0, 128
  %2962 = vxpose.xlu0.b32.cont [7/16] 0.0, 128
  %2963 = vxpose.xlu0.b32.cont [8/16] 0.0, 128
  %2964 = vxpose.xlu0.b32.cont [9/16] 0.0, 128
  %2965 = vxpose.xlu0.b32.cont [10/16] 0.0, 128
  %2966 = vxpose.xlu0.b32.cont [11/16] 0.0, 128
  %2967 = vxpose.xlu0.b32.cont [12/16] 0.0, 128
  %2968 = vxpose.xlu0.b32.cont [13/16] 0.0, 128
  %2969 = vxpose.xlu0.b32.cont [14/16] 0.0, 128
  %2970 = vxpose.xlu0.b32.cont [15/16] 0.0, 128
  %2971 = vxpose.xlu0.b32.end [16/16] 0.0, 128
  %v2972 = vpop.trf.xlu0
  %v2973 = vpop.trf.xlu0
  %v2974 = vpop.trf.xlu0
  %v2975 = vpop.trf.xlu0
  %v2976 = vpop.trf.xlu0
  %v2977 = vpop.trf.xlu0
  %v2978 = vpop.trf.xlu0
  %v2979 = vpop.trf.xlu0
  %v2980 = vpop.trf.xlu0
  %v2981 = vpop.trf.xlu0
  %v2982 = vpop.trf.xlu0
  %v2983 = vpop.trf.xlu0
  %v2984 = vpop.trf.xlu0
  %v2985 = vpop.trf.xlu0
  %v2986 = vpop.trf.xlu0
  %v2987 = vpop.trf.xlu0
  %2988 = vst.msk [vmem:[#allocation8] sm:$0xff] %vm1578, 0.0
  %2989 = vst.msk [vmem:[#allocation8 + $0x8] sm:$0x3] %vm1580, 0.0
  %2990 = vst.msk [vmem:[#allocation8 + $0xa0] sm:$0xff] %vm1578, 0.0
  %2991 = vst.msk [vmem:[#allocation8 + $0xa8] sm:$0x3] %vm1580, 0.0
  %s2992 = scalar_lea.vmem [#allocation8], 144
  %2993 = vst.msk [vmem:[%s2992] sm:$0xff] %vm1578, 0.0
  %2994 = vst.msk [vmem:[%s2992 + $0x8] sm:$0x3] %vm1580, 0.0
  %2995 = vst.msk [vmem:[%s2992 + $0xa0] sm:$0xff] %vm1578, 0.0
  %2996 = vst.msk [vmem:[%s2992 + $0xa8] sm:$0x3] %vm1580, 0.0
  %2997 = vst.msk [vmem:[#allocation8] sm:$0x1] %vm1589, 0.0
  %2998 = vst.msk [vmem:[#allocation8 + $0x10] sm:$0x1] %vm1589, 0.0
  %2999 = vst.msk [vmem:[#allocation8 + $0x20] sm:$0x1] %vm1589, 0.0
  %3000 = vst.msk [vmem:[#allocation8 + $0x30] sm:$0x1] %vm1589, 0.0
  %3001 = vst.msk [vmem:[#allocation8 + $0x40] sm:$0x1] %vm1589, 0.0
  %3002 = vst.msk [vmem:[#allocation8 + $0x50] sm:$0x1] %vm1589, 0.0
  %3003 = vst.msk [vmem:[#allocation8 + $0x60] sm:$0x1] %vm1589, 0.0
  %3004 = vst.msk [vmem:[#allocation8 + $0x70] sm:$0x1] %vm1589, 0.0
  %3005 = vst.msk [vmem:[#allocation8 + $0x80] sm:$0x1] %vm1589, 0.0
  %3006 = vst.msk [vmem:[#allocation8 + $0x90] sm:$0x1] %vm1589, 0.0
  %3007 = vst.msk [vmem:[#allocation8 + $0xa0] sm:$0x1] %vm1589, 0.0
  %3008 = vst.msk [vmem:[#allocation8 + $0xb0] sm:$0x1] %vm1589, 0.0
  %3009 = vst.msk [vmem:[#allocation8 + $0xc0] sm:$0x1] %vm1589, 0.0
  %3010 = vst.msk [vmem:[#allocation8 + $0xd0] sm:$0x1] %vm1589, 0.0
  %3011 = vst.msk [vmem:[#allocation8 + $0xe0] sm:$0x1] %vm1589, 0.0
  %3012 = vst.msk [vmem:[#allocation8 + $0xf0] sm:$0x1] %vm1589, 0.0
  %3013 = vst.msk [vmem:[#allocation8 + $0x100] sm:$0x1] %vm1589, 0.0
  %3014 = vst.msk [vmem:[#allocation8 + $0x110] sm:$0x1] %vm1589, 0.0
  %3015 = vst.msk [vmem:[#allocation8 + $0x120] sm:$0x1] %vm1589, 0.0
  %3016 = vst.msk [vmem:[#allocation8 + $0x130] sm:$0x1] %vm1589, 0.0
  %3017 = vst.msk [vmem:[#allocation8 + $0x9] sm:$0x1] %vm1589, 0.0
  %3018 = vst.msk [vmem:[#allocation8 + $0x19] sm:$0x1] %vm1589, 0.0
  %3019 = vst.msk [vmem:[#allocation8 + $0x29] sm:$0x1] %vm1589, 0.0
  %3020 = vst.msk [vmem:[#allocation8 + $0x39] sm:$0x1] %vm1589, 0.0
  %3021 = vst.msk [vmem:[#allocation8 + $0x49] sm:$0x1] %vm1589, 0.0
  %3022 = vst.msk [vmem:[#allocation8 + $0x59] sm:$0x1] %vm1589, 0.0
  %3023 = vst.msk [vmem:[#allocation8 + $0x69] sm:$0x1] %vm1589, 0.0
  %3024 = vst.msk [vmem:[#allocation8 + $0x79] sm:$0x1] %vm1589, 0.0
  %3025 = vst.msk [vmem:[#allocation8 + $0x89] sm:$0x1] %vm1589, 0.0
  %3026 = vst.msk [vmem:[#allocation8 + $0x99] sm:$0x1] %vm1589, 0.0
  %3027 = vst.msk [vmem:[#allocation8 + $0xa9] sm:$0x1] %vm1589, 0.0
  %3028 = vst.msk [vmem:[#allocation8 + $0xb9] sm:$0x1] %vm1589, 0.0
  %3029 = vst.msk [vmem:[#allocation8 + $0xc9] sm:$0x1] %vm1589, 0.0
  %3030 = vst.msk [vmem:[#allocation8 + $0xd9] sm:$0x1] %vm1589, 0.0
  %3031 = vst.msk [vmem:[#allocation8 + $0xe9] sm:$0x1] %vm1589, 0.0
  %3032 = vst.msk [vmem:[#allocation8 + $0xf9] sm:$0x1] %vm1589, 0.0
  %3033 = vst.msk [vmem:[#allocation8 + $0x109] sm:$0x1] %vm1589, 0.0
  %3034 = vst.msk [vmem:[#allocation8 + $0x119] sm:$0x1] %vm1589, 0.0
  %3035 = vst.msk [vmem:[#allocation8 + $0x129] sm:$0x1] %vm1589, 0.0
  %3036 = vst.msk [vmem:[#allocation8 + $0x139] sm:$0x1] %vm1589, 0.0
  %s3037 = scalar_lea.vmem [#allocation8], 16
  %3038 = vst.msk [vmem:[%s3037 + $0x1] sm:$0xff] %vm1578, %v2972
  %3039 = vst.msk [vmem:[%s3037 + $0x11] sm:$0xff] %vm1578, %v2973
  %3040 = vst.msk [vmem:[%s3037 + $0x21] sm:$0xff] %vm1578, %v2974
  %3041 = vst.msk [vmem:[%s3037 + $0x31] sm:$0xff] %vm1578, %v2975
  %3042 = vst.msk [vmem:[%s3037 + $0x41] sm:$0xff] %vm1578, %v2976
  %3043 = vst.msk [vmem:[%s3037 + $0x51] sm:$0xff] %vm1578, %v2977
  %3044 = vst.msk [vmem:[%s3037 + $0x61] sm:$0xff] %vm1578, %v2978
  %3045 = vst.msk [vmem:[%s3037 + $0x71] sm:$0xff] %vm1578, %v2979
  %3046 = vst.msk [vmem:[%s3037 + $0xa1] sm:$0xff] %vm1578, %v2980
  %3047 = vst.msk [vmem:[%s3037 + $0xb1] sm:$0xff] %vm1578, %v2981
  %3048 = vst.msk [vmem:[%s3037 + $0xc1] sm:$0xff] %vm1578, %v2982
  %3049 = vst.msk [vmem:[%s3037 + $0xd1] sm:$0xff] %vm1578, %v2983
  %3050 = vst.msk [vmem:[%s3037 + $0xe1] sm:$0xff] %vm1578, %v2984
  %3051 = vst.msk [vmem:[%s3037 + $0xf1] sm:$0xff] %vm1578, %v2985
  %3052 = vst.msk [vmem:[%s3037 + $0x101] sm:$0xff] %vm1578, %v2986
  %3053 = vst.msk [vmem:[%s3037 + $0x111] sm:$0xff] %vm1578, %v2987
  %v3054 = vld [vmem:[#allocation8] sm:$0xff]
  %v3055 = vld [vmem:[#allocation8 + $0x10] sm:$0xff]
  %v3056 = vld [vmem:[#allocation8 + $0x20] sm:$0xff]
  %v3057 = vld [vmem:[#allocation8 + $0x30] sm:$0xff]
  %v3058 = vld [vmem:[#allocation8 + $0x40] sm:$0xff]
  %v3059 = vld [vmem:[#allocation8 + $0x50] sm:$0xff]
  %v3060 = vld [vmem:[#allocation8 + $0x60] sm:$0xff]
  %v3061 = vld [vmem:[#allocation8 + $0x70] sm:$0xff]
  %v3062 = vld [vmem:[#allocation8 + $0xa0] sm:$0xff]
  %v3063 = vld [vmem:[#allocation8 + $0xb0] sm:$0xff]
  %v3064 = vld [vmem:[#allocation8 + $0xc0] sm:$0xff]
  %v3065 = vld [vmem:[#allocation8 + $0xd0] sm:$0xff]
  %v3066 = vld [vmem:[#allocation8 + $0xe0] sm:$0xff]
  %v3067 = vld [vmem:[#allocation8 + $0xf0] sm:$0xff]
  %v3068 = vld [vmem:[#allocation8 + $0x100] sm:$0xff]
  %v3069 = vld [vmem:[#allocation8 + $0x110] sm:$0xff]
  %3070 = vxpose.xlu0.b32.start [1/16] %v3054, 128
  %3071 = vxpose.xlu0.b32.cont [2/16] %v3055, 128
  %3072 = vxpose.xlu0.b32.cont [3/16] %v3056, 128
  %3073 = vxpose.xlu0.b32.cont [4/16] %v3057, 128
  %3074 = vxpose.xlu0.b32.cont [5/16] %v3058, 128
  %3075 = vxpose.xlu0.b32.cont [6/16] %v3059, 128
  %3076 = vxpose.xlu0.b32.cont [7/16] %v3060, 128
  %3077 = vxpose.xlu0.b32.cont [8/16] %v3061, 128
  %3078 = vxpose.xlu0.b32.cont [9/16] %v3062, 128
  %3079 = vxpose.xlu0.b32.cont [10/16] %v3063, 128
  %3080 = vxpose.xlu0.b32.cont [11/16] %v3064, 128
  %3081 = vxpose.xlu0.b32.cont [12/16] %v3065, 128
  %3082 = vxpose.xlu0.b32.cont [13/16] %v3066, 128
  %3083 = vxpose.xlu0.b32.cont [14/16] %v3067, 128
  %3084 = vxpose.xlu0.b32.cont [15/16] %v3068, 128
  %3085 = vxpose.xlu0.b32.end [16/16] %v3069, 128
  %v3086 = vpop.trf.xlu0
  %v3087 = vpop.trf.xlu0
  %v3088 = vpop.trf.xlu0
  %v3089 = vpop.trf.xlu0
  %v3090 = vpop.trf.xlu0
  %v3091 = vpop.trf.xlu0
  %v3092 = vpop.trf.xlu0
  %v3093 = vpop.trf.xlu0
  %v3094 = vpop.trf.xlu0
  %v3095 = vpop.trf.xlu0
  %v3096 = vpop.trf.xlu0
  %v3097 = vpop.trf.xlu0
  %v3098 = vpop.trf.xlu0
  %v3099 = vpop.trf.xlu0
  %v3100 = vpop.trf.xlu0
  %v3101 = vpop.trf.xlu0
  %3102 = vst [vmem:[#allocation9] sm:$0xff] %v3086
  %v3103 = vld [vmem:[#allocation8 + $0x1] sm:$0xff]
  %v3104 = vld [vmem:[#allocation8 + $0x11] sm:$0xff]
  %v3105 = vld [vmem:[#allocation8 + $0x21] sm:$0xff]
  %v3106 = vld [vmem:[#allocation8 + $0x31] sm:$0xff]
  %v3107 = vld [vmem:[#allocation8 + $0x41] sm:$0xff]
  %v3108 = vld [vmem:[#allocation8 + $0x51] sm:$0xff]
  %v3109 = vld [vmem:[#allocation8 + $0x61] sm:$0xff]
  %v3110 = vld [vmem:[#allocation8 + $0x71] sm:$0xff]
  %v3111 = vld [vmem:[#allocation8 + $0xa1] sm:$0xff]
  %v3112 = vld [vmem:[#allocation8 + $0xb1] sm:$0xff]
  %v3113 = vld [vmem:[#allocation8 + $0xc1] sm:$0xff]
  %v3114 = vld [vmem:[#allocation8 + $0xd1] sm:$0xff]
  %v3115 = vld [vmem:[#allocation8 + $0xe1] sm:$0xff]
  %v3116 = vld [vmem:[#allocation8 + $0xf1] sm:$0xff]
  %v3117 = vld [vmem:[#allocation8 + $0x101] sm:$0xff]
  %v3118 = vld [vmem:[#allocation8 + $0x111] sm:$0xff]
  %3119 = vxpose.xlu0.b32.start [1/16] %v3103, 128
  %3120 = vxpose.xlu0.b32.cont [2/16] %v3104, 128
  %3121 = vxpose.xlu0.b32.cont [3/16] %v3105, 128
  %3122 = vxpose.xlu0.b32.cont [4/16] %v3106, 128
  %3123 = vxpose.xlu0.b32.cont [5/16] %v3107, 128
  %3124 = vxpose.xlu0.b32.cont [6/16] %v3108, 128
  %3125 = vxpose.xlu0.b32.cont [7/16] %v3109, 128
  %3126 = vxpose.xlu0.b32.cont [8/16] %v3110, 128
  %3127 = vxpose.xlu0.b32.cont [9/16] %v3111, 128
  %3128 = vxpose.xlu0.b32.cont [10/16] %v3112, 128
  %3129 = vxpose.xlu0.b32.cont [11/16] %v3113, 128
  %3130 = vxpose.xlu0.b32.cont [12/16] %v3114, 128
  %3131 = vxpose.xlu0.b32.cont [13/16] %v3115, 128
  %3132 = vxpose.xlu0.b32.cont [14/16] %v3116, 128
  %3133 = vxpose.xlu0.b32.cont [15/16] %v3117, 128
  %3134 = vxpose.xlu0.b32.end [16/16] %v3118, 128
  %v3135 = vpop.trf.xlu0
  %v3136 = vpop.trf.xlu0
  %v3137 = vpop.trf.xlu0
  %v3138 = vpop.trf.xlu0
  %v3139 = vpop.trf.xlu0
  %v3140 = vpop.trf.xlu0
  %v3141 = vpop.trf.xlu0
  %v3142 = vpop.trf.xlu0
  %v3143 = vpop.trf.xlu0
  %v3144 = vpop.trf.xlu0
  %v3145 = vpop.trf.xlu0
  %v3146 = vpop.trf.xlu0
  %v3147 = vpop.trf.xlu0
  %v3148 = vpop.trf.xlu0
  %v3149 = vpop.trf.xlu0
  %v3150 = vpop.trf.xlu0
  %3151 = vst [vmem:[#allocation9 + $0x8] sm:$0xff] %v3135
  %v3152 = vld [vmem:[#allocation8 + $0x2] sm:$0xff]
  %v3153 = vld [vmem:[#allocation8 + $0x12] sm:$0xff]
  %v3154 = vld [vmem:[#allocation8 + $0x22] sm:$0xff]
  %v3155 = vld [vmem:[#allocation8 + $0x32] sm:$0xff]
  %v3156 = vld [vmem:[#allocation8 + $0x42] sm:$0xff]
  %v3157 = vld [vmem:[#allocation8 + $0x52] sm:$0xff]
  %v3158 = vld [vmem:[#allocation8 + $0x62] sm:$0xff]
  %v3159 = vld [vmem:[#allocation8 + $0x72] sm:$0xff]
  %v3160 = vld [vmem:[#allocation8 + $0xa2] sm:$0xff]
  %v3161 = vld [vmem:[#allocation8 + $0xb2] sm:$0xff]
  %v3162 = vld [vmem:[#allocation8 + $0xc2] sm:$0xff]
  %v3163 = vld [vmem:[#allocation8 + $0xd2] sm:$0xff]
  %v3164 = vld [vmem:[#allocation8 + $0xe2] sm:$0xff]
  %v3165 = vld [vmem:[#allocation8 + $0xf2] sm:$0xff]
  %v3166 = vld [vmem:[#allocation8 + $0x102] sm:$0xff]
  %v3167 = vld [vmem:[#allocation8 + $0x112] sm:$0xff]
  %3168 = vxpose.xlu0.b32.start [1/16] %v3152, 128
  %3169 = vxpose.xlu0.b32.cont [2/16] %v3153, 128
  %3170 = vxpose.xlu0.b32.cont [3/16] %v3154, 128
  %3171 = vxpose.xlu0.b32.cont [4/16] %v3155, 128
  %3172 = vxpose.xlu0.b32.cont [5/16] %v3156, 128
  %3173 = vxpose.xlu0.b32.cont [6/16] %v3157, 128
  %3174 = vxpose.xlu0.b32.cont [7/16] %v3158, 128
  %3175 = vxpose.xlu0.b32.cont [8/16] %v3159, 128
  %3176 = vxpose.xlu0.b32.cont [9/16] %v3160, 128
  %3177 = vxpose.xlu0.b32.cont [10/16] %v3161, 128
  %3178 = vxpose.xlu0.b32.cont [11/16] %v3162, 128
  %3179 = vxpose.xlu0.b32.cont [12/16] %v3163, 128
  %3180 = vxpose.xlu0.b32.cont [13/16] %v3164, 128
  %3181 = vxpose.xlu0.b32.cont [14/16] %v3165, 128
  %3182 = vxpose.xlu0.b32.cont [15/16] %v3166, 128
  %3183 = vxpose.xlu0.b32.end [16/16] %v3167, 128
  %v3184 = vpop.trf.xlu0
  %v3185 = vpop.trf.xlu0
  %v3186 = vpop.trf.xlu0
  %v3187 = vpop.trf.xlu0
  %v3188 = vpop.trf.xlu0
  %v3189 = vpop.trf.xlu0
  %v3190 = vpop.trf.xlu0
  %v3191 = vpop.trf.xlu0
  %v3192 = vpop.trf.xlu0
  %v3193 = vpop.trf.xlu0
  %v3194 = vpop.trf.xlu0
  %v3195 = vpop.trf.xlu0
  %v3196 = vpop.trf.xlu0
  %v3197 = vpop.trf.xlu0
  %v3198 = vpop.trf.xlu0
  %v3199 = vpop.trf.xlu0
  %3200 = vst [vmem:[#allocation9 + $0x10] sm:$0xff] %v3184
  %v3201 = vld [vmem:[%s3037] sm:$0xff]
  %v3202 = vld [vmem:[%s3037 + $0x10] sm:$0xff]
  %v3203 = vld [vmem:[%s3037 + $0x20] sm:$0xff]
  %v3204 = vld [vmem:[%s3037 + $0x30] sm:$0xff]
  %v3205 = vld [vmem:[%s3037 + $0x40] sm:$0xff]
  %v3206 = vld [vmem:[%s3037 + $0x50] sm:$0xff]
  %v3207 = vld [vmem:[%s3037 + $0x60] sm:$0xff]
  %v3208 = vld [vmem:[%s3037 + $0x70] sm:$0xff]
  %v3209 = vld [vmem:[%s3037 + $0xa0] sm:$0xff]
  %v3210 = vld [vmem:[%s3037 + $0xb0] sm:$0xff]
  %v3211 = vld [vmem:[%s3037 + $0xc0] sm:$0xff]
  %v3212 = vld [vmem:[%s3037 + $0xd0] sm:$0xff]
  %v3213 = vld [vmem:[%s3037 + $0xe0] sm:$0xff]
  %v3214 = vld [vmem:[%s3037 + $0xf0] sm:$0xff]
  %v3215 = vld [vmem:[%s3037 + $0x100] sm:$0xff]
  %v3216 = vld [vmem:[%s3037 + $0x110] sm:$0xff]
  %3217 = vxpose.xlu0.b32.start [1/16] %v3201, 128
  %3218 = vxpose.xlu0.b32.cont [2/16] %v3202, 128
  %3219 = vxpose.xlu0.b32.cont [3/16] %v3203, 128
  %3220 = vxpose.xlu0.b32.cont [4/16] %v3204, 128
  %3221 = vxpose.xlu0.b32.cont [5/16] %v3205, 128
  %3222 = vxpose.xlu0.b32.cont [6/16] %v3206, 128
  %3223 = vxpose.xlu0.b32.cont [7/16] %v3207, 128
  %3224 = vxpose.xlu0.b32.cont [8/16] %v3208, 128
  %3225 = vxpose.xlu0.b32.cont [9/16] %v3209, 128
  %3226 = vxpose.xlu0.b32.cont [10/16] %v3210, 128
  %3227 = vxpose.xlu0.b32.cont [11/16] %v3211, 128
  %3228 = vxpose.xlu0.b32.cont [12/16] %v3212, 128
  %3229 = vxpose.xlu0.b32.cont [13/16] %v3213, 128
  %3230 = vxpose.xlu0.b32.cont [14/16] %v3214, 128
  %3231 = vxpose.xlu0.b32.cont [15/16] %v3215, 128
  %3232 = vxpose.xlu0.b32.end [16/16] %v3216, 128
  %v3233 = vpop.trf.xlu0
  %v3234 = vpop.trf.xlu0
  %v3235 = vpop.trf.xlu0
  %v3236 = vpop.trf.xlu0
  %v3237 = vpop.trf.xlu0
  %v3238 = vpop.trf.xlu0
  %v3239 = vpop.trf.xlu0
  %v3240 = vpop.trf.xlu0
  %v3241 = vpop.trf.xlu0
  %v3242 = vpop.trf.xlu0
  %v3243 = vpop.trf.xlu0
  %v3244 = vpop.trf.xlu0
  %v3245 = vpop.trf.xlu0
  %v3246 = vpop.trf.xlu0
  %v3247 = vpop.trf.xlu0
  %v3248 = vpop.trf.xlu0
  %3249 = vst [vmem:[#allocation9 + $0x18] sm:$0xff] %v3233
  %v3250 = vld [vmem:[%s3037 + $0x1] sm:$0xff]
  %v3251 = vld [vmem:[%s3037 + $0x11] sm:$0xff]
  %v3252 = vld [vmem:[%s3037 + $0x21] sm:$0xff]
  %v3253 = vld [vmem:[%s3037 + $0x31] sm:$0xff]
  %v3254 = vld [vmem:[%s3037 + $0x41] sm:$0xff]
  %v3255 = vld [vmem:[%s3037 + $0x51] sm:$0xff]
  %v3256 = vld [vmem:[%s3037 + $0x61] sm:$0xff]
  %v3257 = vld [vmem:[%s3037 + $0x71] sm:$0xff]
  %v3258 = vld [vmem:[%s3037 + $0xa1] sm:$0xff]
  %v3259 = vld [vmem:[%s3037 + $0xb1] sm:$0xff]
  %v3260 = vld [vmem:[%s3037 + $0xc1] sm:$0xff]
  %v3261 = vld [vmem:[%s3037 + $0xd1] sm:$0xff]
  %v3262 = vld [vmem:[%s3037 + $0xe1] sm:$0xff]
  %v3263 = vld [vmem:[%s3037 + $0xf1] sm:$0xff]
  %v3264 = vld [vmem:[%s3037 + $0x101] sm:$0xff]
  %v3265 = vld [vmem:[%s3037 + $0x111] sm:$0xff]
  %3266 = vxpose.xlu0.b32.start [1/16] %v3250, 128
  %3267 = vxpose.xlu0.b32.cont [2/16] %v3251, 128
  %3268 = vxpose.xlu0.b32.cont [3/16] %v3252, 128
  %3269 = vxpose.xlu0.b32.cont [4/16] %v3253, 128
  %3270 = vxpose.xlu0.b32.cont [5/16] %v3254, 128
  %3271 = vxpose.xlu0.b32.cont [6/16] %v3255, 128
  %3272 = vxpose.xlu0.b32.cont [7/16] %v3256, 128
  %3273 = vxpose.xlu0.b32.cont [8/16] %v3257, 128
  %3274 = vxpose.xlu0.b32.cont [9/16] %v3258, 128
  %3275 = vxpose.xlu0.b32.cont [10/16] %v3259, 128
  %3276 = vxpose.xlu0.b32.cont [11/16] %v3260, 128
  %3277 = vxpose.xlu0.b32.cont [12/16] %v3261, 128
  %3278 = vxpose.xlu0.b32.cont [13/16] %v3262, 128
  %3279 = vxpose.xlu0.b32.cont [14/16] %v3263, 128
  %3280 = vxpose.xlu0.b32.cont [15/16] %v3264, 128
  %3281 = vxpose.xlu0.b32.end [16/16] %v3265, 128
  %v3282 = vpop.trf.xlu0
  %v3283 = vpop.trf.xlu0
  %v3284 = vpop.trf.xlu0
  %v3285 = vpop.trf.xlu0
  %v3286 = vpop.trf.xlu0
  %v3287 = vpop.trf.xlu0
  %v3288 = vpop.trf.xlu0
  %v3289 = vpop.trf.xlu0
  %v3290 = vpop.trf.xlu0
  %v3291 = vpop.trf.xlu0
  %v3292 = vpop.trf.xlu0
  %v3293 = vpop.trf.xlu0
  %v3294 = vpop.trf.xlu0
  %v3295 = vpop.trf.xlu0
  %v3296 = vpop.trf.xlu0
  %v3297 = vpop.trf.xlu0
  %3298 = vst [vmem:[#allocation9 + $0x20] sm:$0xff] %v3282
  %v3299 = vld [vmem:[%s3037 + $0x2] sm:$0xff]
  %v3300 = vld [vmem:[%s3037 + $0x12] sm:$0xff]
  %v3301 = vld [vmem:[%s3037 + $0x22] sm:$0xff]
  %v3302 = vld [vmem:[%s3037 + $0x32] sm:$0xff]
  %v3303 = vld [vmem:[%s3037 + $0x42] sm:$0xff]
  %v3304 = vld [vmem:[%s3037 + $0x52] sm:$0xff]
  %v3305 = vld [vmem:[%s3037 + $0x62] sm:$0xff]
  %v3306 = vld [vmem:[%s3037 + $0x72] sm:$0xff]
  %v3307 = vld [vmem:[%s3037 + $0xa2] sm:$0xff]
  %v3308 = vld [vmem:[%s3037 + $0xb2] sm:$0xff]
  %v3309 = vld [vmem:[%s3037 + $0xc2] sm:$0xff]
  %v3310 = vld [vmem:[%s3037 + $0xd2] sm:$0xff]
  %v3311 = vld [vmem:[%s3037 + $0xe2] sm:$0xff]
  %v3312 = vld [vmem:[%s3037 + $0xf2] sm:$0xff]
  %v3313 = vld [vmem:[%s3037 + $0x102] sm:$0xff]
  %v3314 = vld [vmem:[%s3037 + $0x112] sm:$0xff]
  %3315 = vxpose.xlu0.b32.start [1/16] %v3299, 128
  %3316 = vxpose.xlu0.b32.cont [2/16] %v3300, 128
  %3317 = vxpose.xlu0.b32.cont [3/16] %v3301, 128
  %3318 = vxpose.xlu0.b32.cont [4/16] %v3302, 128
  %3319 = vxpose.xlu0.b32.cont [5/16] %v3303, 128
  %3320 = vxpose.xlu0.b32.cont [6/16] %v3304, 128
  %3321 = vxpose.xlu0.b32.cont [7/16] %v3305, 128
  %3322 = vxpose.xlu0.b32.cont [8/16] %v3306, 128
  %3323 = vxpose.xlu0.b32.cont [9/16] %v3307, 128
  %3324 = vxpose.xlu0.b32.cont [10/16] %v3308, 128
  %3325 = vxpose.xlu0.b32.cont [11/16] %v3309, 128
  %3326 = vxpose.xlu0.b32.cont [12/16] %v3310, 128
  %3327 = vxpose.xlu0.b32.cont [13/16] %v3311, 128
  %3328 = vxpose.xlu0.b32.cont [14/16] %v3312, 128
  %3329 = vxpose.xlu0.b32.cont [15/16] %v3313, 128
  %3330 = vxpose.xlu0.b32.end [16/16] %v3314, 128
  %v3331 = vpop.trf.xlu0
  %v3332 = vpop.trf.xlu0
  %v3333 = vpop.trf.xlu0
  %v3334 = vpop.trf.xlu0
  %v3335 = vpop.trf.xlu0
  %v3336 = vpop.trf.xlu0
  %v3337 = vpop.trf.xlu0
  %v3338 = vpop.trf.xlu0
  %v3339 = vpop.trf.xlu0
  %v3340 = vpop.trf.xlu0
  %v3341 = vpop.trf.xlu0
  %v3342 = vpop.trf.xlu0
  %v3343 = vpop.trf.xlu0
  %v3344 = vpop.trf.xlu0
  %v3345 = vpop.trf.xlu0
  %v3346 = vpop.trf.xlu0
  %3347 = vst [vmem:[#allocation9 + $0x28] sm:$0xff] %v3331
  %s3348 = scalar_lea.vmem [#allocation8], 32
  %v3349 = vld [vmem:[%s3348] sm:$0xff]
  %v3350 = vld [vmem:[%s3348 + $0x10] sm:$0xff]
  %v3351 = vld [vmem:[%s3348 + $0x20] sm:$0xff]
  %v3352 = vld [vmem:[%s3348 + $0x30] sm:$0xff]
  %v3353 = vld [vmem:[%s3348 + $0x40] sm:$0xff]
  %v3354 = vld [vmem:[%s3348 + $0x50] sm:$0xff]
  %v3355 = vld [vmem:[%s3348 + $0x60] sm:$0xff]
  %v3356 = vld [vmem:[%s3348 + $0x70] sm:$0xff]
  %v3357 = vld [vmem:[%s3348 + $0xa0] sm:$0xff]
  %v3358 = vld [vmem:[%s3348 + $0xb0] sm:$0xff]
  %v3359 = vld [vmem:[%s3348 + $0xc0] sm:$0xff]
  %v3360 = vld [vmem:[%s3348 + $0xd0] sm:$0xff]
  %v3361 = vld [vmem:[%s3348 + $0xe0] sm:$0xff]
  %v3362 = vld [vmem:[%s3348 + $0xf0] sm:$0xff]
  %v3363 = vld [vmem:[%s3348 + $0x100] sm:$0xff]
  %v3364 = vld [vmem:[%s3348 + $0x110] sm:$0xff]
  %3365 = vxpose.xlu0.b32.start [1/16] %v3349, 128
  %3366 = vxpose.xlu0.b32.cont [2/16] %v3350, 128
  %3367 = vxpose.xlu0.b32.cont [3/16] %v3351, 128
  %3368 = vxpose.xlu0.b32.cont [4/16] %v3352, 128
  %3369 = vxpose.xlu0.b32.cont [5/16] %v3353, 128
  %3370 = vxpose.xlu0.b32.cont [6/16] %v3354, 128
  %3371 = vxpose.xlu0.b32.cont [7/16] %v3355, 128
  %3372 = vxpose.xlu0.b32.cont [8/16] %v3356, 128
  %3373 = vxpose.xlu0.b32.cont [9/16] %v3357, 128
  %3374 = vxpose.xlu0.b32.cont [10/16] %v3358, 128
  %3375 = vxpose.xlu0.b32.cont [11/16] %v3359, 128
  %3376 = vxpose.xlu0.b32.cont [12/16] %v3360, 128
  %3377 = vxpose.xlu0.b32.cont [13/16] %v3361, 128
  %3378 = vxpose.xlu0.b32.cont [14/16] %v3362, 128
  %3379 = vxpose.xlu0.b32.cont [15/16] %v3363, 128
  %3380 = vxpose.xlu0.b32.end [16/16] %v3364, 128
  %v3381 = vpop.trf.xlu0
  %v3382 = vpop.trf.xlu0
  %v3383 = vpop.trf.xlu0
  %v3384 = vpop.trf.xlu0
  %v3385 = vpop.trf.xlu0
  %v3386 = vpop.trf.xlu0
  %v3387 = vpop.trf.xlu0
  %v3388 = vpop.trf.xlu0
  %v3389 = vpop.trf.xlu0
  %v3390 = vpop.trf.xlu0
  %v3391 = vpop.trf.xlu0
  %v3392 = vpop.trf.xlu0
  %v3393 = vpop.trf.xlu0
  %v3394 = vpop.trf.xlu0
  %v3395 = vpop.trf.xlu0
  %v3396 = vpop.trf.xlu0
  %3397 = vst [vmem:[#allocation9 + $0x30] sm:$0xff] %v3381
  %v3398 = vld [vmem:[%s3348 + $0x1] sm:$0xff]
  %v3399 = vld [vmem:[%s3348 + $0x11] sm:$0xff]
  %v3400 = vld [vmem:[%s3348 + $0x21] sm:$0xff]
  %v3401 = vld [vmem:[%s3348 + $0x31] sm:$0xff]
  %v3402 = vld [vmem:[%s3348 + $0x41] sm:$0xff]
  %v3403 = vld [vmem:[%s3348 + $0x51] sm:$0xff]
  %v3404 = vld [vmem:[%s3348 + $0x61] sm:$0xff]
  %v3405 = vld [vmem:[%s3348 + $0x71] sm:$0xff]
  %v3406 = vld [vmem:[%s3348 + $0xa1] sm:$0xff]
  %v3407 = vld [vmem:[%s3348 + $0xb1] sm:$0xff]
  %v3408 = vld [vmem:[%s3348 + $0xc1] sm:$0xff]
  %v3409 = vld [vmem:[%s3348 + $0xd1] sm:$0xff]
  %v3410 = vld [vmem:[%s3348 + $0xe1] sm:$0xff]
  %v3411 = vld [vmem:[%s3348 + $0xf1] sm:$0xff]
  %v3412 = vld [vmem:[%s3348 + $0x101] sm:$0xff]
  %v3413 = vld [vmem:[%s3348 + $0x111] sm:$0xff]
  %3414 = vxpose.xlu0.b32.start [1/16] %v3398, 128
  %3415 = vxpose.xlu0.b32.cont [2/16] %v3399, 128
  %3416 = vxpose.xlu0.b32.cont [3/16] %v3400, 128
  %3417 = vxpose.xlu0.b32.cont [4/16] %v3401, 128
  %3418 = vxpose.xlu0.b32.cont [5/16] %v3402, 128
  %3419 = vxpose.xlu0.b32.cont [6/16] %v3403, 128
  %3420 = vxpose.xlu0.b32.cont [7/16] %v3404, 128
  %3421 = vxpose.xlu0.b32.cont [8/16] %v3405, 128
  %3422 = vxpose.xlu0.b32.cont [9/16] %v3406, 128
  %3423 = vxpose.xlu0.b32.cont [10/16] %v3407, 128
  %3424 = vxpose.xlu0.b32.cont [11/16] %v3408, 128
  %3425 = vxpose.xlu0.b32.cont [12/16] %v3409, 128
  %3426 = vxpose.xlu0.b32.cont [13/16] %v3410, 128
  %3427 = vxpose.xlu0.b32.cont [14/16] %v3411, 128
  %3428 = vxpose.xlu0.b32.cont [15/16] %v3412, 128
  %3429 = vxpose.xlu0.b32.end [16/16] %v3413, 128
  %v3430 = vpop.trf.xlu0
  %v3431 = vpop.trf.xlu0
  %v3432 = vpop.trf.xlu0
  %v3433 = vpop.trf.xlu0
  %v3434 = vpop.trf.xlu0
  %v3435 = vpop.trf.xlu0
  %v3436 = vpop.trf.xlu0
  %v3437 = vpop.trf.xlu0
  %v3438 = vpop.trf.xlu0
  %v3439 = vpop.trf.xlu0
  %v3440 = vpop.trf.xlu0
  %v3441 = vpop.trf.xlu0
  %v3442 = vpop.trf.xlu0
  %v3443 = vpop.trf.xlu0
  %v3444 = vpop.trf.xlu0
  %v3445 = vpop.trf.xlu0
  %3446 = vst [vmem:[#allocation9 + $0x38] sm:$0xff] %v3430
  %v3447 = vld [vmem:[%s3348 + $0x2] sm:$0xff]
  %v3448 = vld [vmem:[%s3348 + $0x12] sm:$0xff]
  %v3449 = vld [vmem:[%s3348 + $0x22] sm:$0xff]
  %v3450 = vld [vmem:[%s3348 + $0x32] sm:$0xff]
  %v3451 = vld [vmem:[%s3348 + $0x42] sm:$0xff]
  %v3452 = vld [vmem:[%s3348 + $0x52] sm:$0xff]
  %v3453 = vld [vmem:[%s3348 + $0x62] sm:$0xff]
  %v3454 = vld [vmem:[%s3348 + $0x72] sm:$0xff]
  %v3455 = vld [vmem:[%s3348 + $0xa2] sm:$0xff]
  %v3456 = vld [vmem:[%s3348 + $0xb2] sm:$0xff]
  %v3457 = vld [vmem:[%s3348 + $0xc2] sm:$0xff]
  %v3458 = vld [vmem:[%s3348 + $0xd2] sm:$0xff]
  %v3459 = vld [vmem:[%s3348 + $0xe2] sm:$0xff]
  %v3460 = vld [vmem:[%s3348 + $0xf2] sm:$0xff]
  %v3461 = vld [vmem:[%s3348 + $0x102] sm:$0xff]
  %v3462 = vld [vmem:[%s3348 + $0x112] sm:$0xff]
  %3463 = vxpose.xlu0.b32.start [1/16] %v3447, 128
  %3464 = vxpose.xlu0.b32.cont [2/16] %v3448, 128
  %3465 = vxpose.xlu0.b32.cont [3/16] %v3449, 128
  %3466 = vxpose.xlu0.b32.cont [4/16] %v3450, 128
  %3467 = vxpose.xlu0.b32.cont [5/16] %v3451, 128
  %3468 = vxpose.xlu0.b32.cont [6/16] %v3452, 128
  %3469 = vxpose.xlu0.b32.cont [7/16] %v3453, 128
  %3470 = vxpose.xlu0.b32.cont [8/16] %v3454, 128
  %3471 = vxpose.xlu0.b32.cont [9/16] %v3455, 128
  %3472 = vxpose.xlu0.b32.cont [10/16] %v3456, 128
  %3473 = vxpose.xlu0.b32.cont [11/16] %v3457, 128
  %3474 = vxpose.xlu0.b32.cont [12/16] %v3458, 128
  %3475 = vxpose.xlu0.b32.cont [13/16] %v3459, 128
  %3476 = vxpose.xlu0.b32.cont [14/16] %v3460, 128
  %3477 = vxpose.xlu0.b32.cont [15/16] %v3461, 128
  %3478 = vxpose.xlu0.b32.end [16/16] %v3462, 128
  %v3479 = vpop.trf.xlu0
  %v3480 = vpop.trf.xlu0
  %v3481 = vpop.trf.xlu0
  %v3482 = vpop.trf.xlu0
  %v3483 = vpop.trf.xlu0
  %v3484 = vpop.trf.xlu0
  %v3485 = vpop.trf.xlu0
  %v3486 = vpop.trf.xlu0
  %v3487 = vpop.trf.xlu0
  %v3488 = vpop.trf.xlu0
  %v3489 = vpop.trf.xlu0
  %v3490 = vpop.trf.xlu0
  %v3491 = vpop.trf.xlu0
  %v3492 = vpop.trf.xlu0
  %v3493 = vpop.trf.xlu0
  %v3494 = vpop.trf.xlu0
  %3495 = vst [vmem:[#allocation9 + $0x40] sm:$0xff] %v3479
  %v3496 = vld [vmem:[%s12] sm:$0xf]
  %v3497 = vld [vmem:[#allocation9] sm:$0xff]
  %v3498 = vld [vmem:[#allocation9 + $0x8] sm:$0xff]
  %v3499 = vld [vmem:[#allocation9 + $0x10] sm:$0xff]
  %v3500 = vld [vmem:[#allocation9 + $0x18] sm:$0xff]
  %v3501 = vld [vmem:[#allocation9 + $0x20] sm:$0xff]
  %v3502 = vld [vmem:[#allocation9 + $0x28] sm:$0xff]
  %v3503 = vld [vmem:[#allocation9 + $0x30] sm:$0xff]
  %v3504 = vld [vmem:[#allocation9 + $0x38] sm:$0xff]
  %v3505 = vld [vmem:[#allocation9 + $0x40] sm:$0xff]
  %v3506 = vpack.c.bf16 %v3498, %v3497
  %v3507 = vpack.c.bf16 %v3500, %v3499
  %v3508 = vpack.c.bf16 %v3502, %v3501
  %v3509 = vpack.c.bf16 %v3504, %v3503
  %v3510 = vpack.c.bf16 %v3505, %v3505
  %v3512 = vsel %vm2104, %v3496, 0
  %v3515 = vsel %vm2108, %v3510, 0
  %3517 = vmatprep.subr.bf16.mxu0 0
  %3518 = vmatpush1.bf16.msra.mxu0 %v3506
  %3519 = vmatprep.subr.bf16.mxu0 0
  %3520 = vmatpush1.bf16.msra.mxu0 %v3507
  %3521 = vmatprep.subr.bf16.mxu0 0
  %3522 = vmatpush1.bf16.msra.mxu0 %v3508
  %3523 = vmatprep.subr.bf16.mxu0 0
  %3524 = vmatpush1.bf16.msra.mxu0 %v3509
  %3525 = vmatprep.subr.bf16.mxu0 0
  %3526 = vmatpush1.bf16.msra.mxu0 %v3515
  %3527 = vmatprep.subr.bf16.mxu0 0
  %3528 = vmatpush1.bf16.msra.mxu0 0
  %3529 = vmatprep.subr.bf16.mxu0 0
  %3530 = vmatpush1.bf16.msra.mxu0 0
  %3531 = vmatprep.subr.bf16.mxu0 0
  %3532 = vmatpush1.bf16.msra.mxu0 0
  %3533 = vmatprep.subr.bf16.mxu0 0
  %3534 = vmatpush1.bf16.msra.mxu0 0
  %3535 = vmatprep.subr.bf16.mxu0 0
  %3536 = vmatpush1.bf16.msra.mxu0 0
  %3537 = vmatprep.subr.bf16.mxu0 0
  %3538 = vmatpush1.bf16.msra.mxu0 0
  %3539 = vmatprep.subr.bf16.mxu0 0
  %3540 = vmatpush1.bf16.msra.mxu0 0
  %3541 = vmatprep.subr.bf16.mxu0 0
  %3542 = vmatpush1.bf16.msra.mxu0 0
  %3543 = vmatprep.subr.bf16.mxu0 0
  %3544 = vmatpush1.bf16.msra.mxu0 0
  %3545 = vmatprep.subr.bf16.mxu0 0
  %3546 = vmatpush1.bf16.msra.mxu0 0
  %3547 = vmatprep.subr.bf16.mxu0 0
  %3548 = vmatpush1.bf16.msra.mxu0 0
  %3549 = vmatprep.mubr.bf16.mxu0 0
  %3550 = vmatmul.mubr.bf16.gmra.mrb[0].mxu0 %v3512
  %v3551 = vpop.f32.mrb[0].mxu0
  %v3552 = vadd.f32 %v2147, %v3551
  %v3553 = vpop.f32.mrb[0].mxu0
  %v3554 = vpop.f32.mrb[0].mxu0
  %v3555 = vpop.f32.mrb[0].mxu0
  %3556 = vdwg.mxu0
  %3557 = vst [vmem:[%s13] sm:$0xff] %v3552
  // Predicated region
  $region54: #{network_block_forward.1} parent=0 // pred_check
    _
  $region55: #{network_block_forward.1} parent=0 // pred_check_branch
    %3559 = sbr.rel (0) target = $region57
  $region56: #{network_block_forward.1} parent=0 // pred_region
    _
  $region57: #{network_block_forward.1} parent=0 // pred_fallthru
    _
  // Predicated region
  $region58: #{network_block_forward.1} parent=0 // pred_check
    _
  $region59: #{network_block_forward.1} parent=0 // pred_check_branch
    %3561 = sbr.rel (0) target = $region61
  $region60: #{network_block_forward.1} parent=0 // pred_region
    _
  $region61: #{network_block_forward.1} parent=0 // pred_fallthru
    _

</llo_original>
